<compile_context>
chip_gen: v7x
topology: tpu7x:2x2x1
jax: 0.10.0
libtpu: 0.0.40
codegen_flags: <defaults>
</compile_context>

<pallas_src>
import functools

import jax
import jax.numpy as jnp
import numpy as np
from jax.experimental import pallas as pl
from jax.experimental.pallas import tpu as pltpu


# --------------------- host-side selection-matrix builders ---------------------

def _conv3x3_selection_stacked(n, h, w, stride):
    """Stacked 0/1 matrix T with T[t*m_out + m, r] = 1 iff tap t of output site m
    of a 3x3 conv (padding 1, given stride) reads input row r of an
    [n, h, w, C]-flattened activation."""
    ho = (h + 2 - 3) // stride + 1
    wo = (w + 2 - 3) // stride + 1
    m_out = n * ho * wo
    t = np.zeros((9 * m_out, n * h * w), dtype=np.float32)
    for di in range(3):
        for dj in range(3):
            tap = di * 3 + dj
            for b in range(n):
                for y in range(ho):
                    for x in range(wo):
                        hi = stride * y + di - 1
                        wi = stride * x + dj - 1
                        if 0 <= hi < h and 0 <= wi < w:
                            m = b * ho * wo + y * wo + x
                            t[tap * m_out + m, b * h * w + hi * w + wi] = 1.0
    return t, ho, wo, m_out


def _subsample_selection(n, h, w, stride):
    """0/1 matrix R such that R @ x_flat == x[:, ::stride, ::stride, :] flattened."""
    ho = (h - 1) // stride + 1
    wo = (w - 1) // stride + 1
    r = np.zeros((n * ho * wo, n * h * w), dtype=np.float32)
    for b in range(n):
        for y in range(ho):
            for x in range(wo):
                r[b * ho * wo + y * wo + x,
                  b * h * w + y * stride * w + x * stride] = 1.0
    return r


# ------------------------------ one-time prep ---------------------------------
# NOTE: selection matrices are block-diagonal over the batch, so the prep bakes
# in (batch, input spatial size); a mismatched batch fails at trace time.

def prepare_encoder(params, strides, batch, in_hw):
    kh, kw = params["rescale"]
    depth = params["conv_initial"]["w"].shape[-1]
    h, w = in_hw[0] // kh, in_hw[1] // kw

    bf = jnp.bfloat16
    f32 = jnp.float32

    ops = {
        "w0": jnp.asarray(np.asarray(params["conv_initial"]["w"], np.float32)
                          .reshape(-1, depth), bf),
        "b0": jnp.asarray(params["conv_initial"]["b"], f32).reshape(1, -1),
        "blocks": [],
    }

    for blk, s in zip(params["resblocks"], strides):
        bd = blk["w2"].shape[-1]
        tsel, ho, wo, m_out = _conv3x3_selection_stacked(batch, h, w, s)

        # Per-tap 3x3 weights concatenated along columns: W2cat[c, t*bd + j].
        w2 = np.asarray(blk["w2"], np.float32).reshape(9, depth, bd)     # [t, c, j]
        w2cat = np.transpose(w2, (1, 0, 2)).reshape(depth, 9 * bd)

        # Block-diagonal tap mask + "pick diagonal block, sum over taps" matrices.
        mask_t = np.kron(np.eye(9, dtype=np.float32),
                         np.ones((m_out, bd), np.float32))               # [9*m_out, 9*bd]
        pg = np.tile(np.eye(m_out, dtype=np.float32), (1, 9))            # [m_out, 9*m_out]
        qs = np.tile(np.eye(bd, dtype=np.float32), (9, 1))               # [9*bd, bd]

        entry = {
            "w1": jnp.asarray(np.asarray(blk["w1"], np.float32).reshape(depth, depth), bf),
            "b1": jnp.asarray(blk["b1"], f32).reshape(1, -1),
            "tsel": jnp.asarray(tsel, bf),
            "w2cat": jnp.asarray(w2cat, bf),
            "maskT": jnp.asarray(mask_t, bf),
            "pg": jnp.asarray(pg, bf),
            "qs": jnp.asarray(qs, bf),
            "b2": jnp.asarray(blk["b2"], f32).reshape(1, -1),
            "w3": jnp.asarray(np.asarray(blk["w3"], np.float32).reshape(bd, depth), bf),
            "b3": jnp.asarray(blk["b3"], f32).reshape(1, -1),
        }
        if s > 1:
            entry["rsel"] = jnp.asarray(_subsample_selection(batch, h, w, s), bf)
            entry["wres"] = jnp.asarray(
                np.asarray(blk["wres"], np.float32).reshape(depth, depth), bf)
            entry["bres"] = jnp.asarray(blk["bres"], f32).reshape(1, -1)
        ops["blocks"].append(entry)
        h, w = ho, wo

    # Final flatten (torch NCHW order, rows c*S + s) + Linear, expressed as
    # three stacked matmuls + a mask so no in-kernel reshape is needed:
    #   U = v @ WLcat          with WLcat[c, s*out + o] = WL[c*S + s, o]
    #   out = GbT @ (U * MaskL) @ Qsum
    S = h * w
    out_dim = params["linear"]["w"].shape[-1]
    wl = np.asarray(params["linear"]["w"], np.float32)                   # [depth*S, out]
    ops["wlcat"] = jnp.asarray(wl.reshape(depth, S * out_dim), bf)
    ops["maskL"] = jnp.asarray(
        np.tile(np.kron(np.eye(S, dtype=np.float32),
                        np.ones((1, out_dim), np.float32)), (batch, 1)), bf)
    ops["gbT"] = jnp.asarray(
        np.kron(np.eye(batch, dtype=np.float32), np.ones((1, S), np.float32)), bf)
    ops["qsum"] = jnp.asarray(np.tile(np.eye(out_dim, dtype=np.float32), (S, 1)), bf)
    ops["bl"] = jnp.asarray(params["linear"]["b"], f32).reshape(1, -1)
    return ops


# --------------------------------- the kernel ----------------------------------

def _make_kernel(strides):
    """Fused ImageEncoder forward for a fixed resblock stride pattern."""

    def kernel(*refs):
        out_ref = refs[-1]
        it = iter(refs[:-1])

        def nxt():
            return next(it)[...]

        def mm(a, b):
            # bf16 MXU operands (selection/mask matrices are exact 0/1 in bf16),
            # f32 accumulation; all elementwise math stays f32 (v5e-friendly).
            return jnp.dot(a.astype(jnp.bfloat16), b.astype(jnp.bfloat16),
                           preferred_element_type=jnp.float32)

        def relu(z):
            return jnp.maximum(z, 0.0)

        # conv_initial (kernel == stride) over pre-patchified columns: one matmul.
        cols0, w0, b0 = nxt(), nxt(), nxt()
        v = relu(mm(cols0, w0) + b0)                        # [N*H0*W0, depth] f32

        for s in strides:
            w1, b1 = nxt(), nxt()
            tsel, w2cat, mskT, pg, qs, b2 = nxt(), nxt(), nxt(), nxt(), nxt(), nxt()
            w3, b3 = nxt(), nxt()
            if s > 1:
                rsel, wres, bres = nxt(), nxt(), nxt()

            x_in = v
            # conv1: 1x1 + relu
            v = relu(mm(v, w1) + b1)
            # conv2: 3x3, pad 1, stride s — 4 stacked matmuls + block-diag mask:
            #   G   = Tsel_all @ v            all 9 tap gathers        [9*m_out, depth]
            #   GW  = G @ W2cat               all 9 per-tap mixes      [9*m_out, 9*bd]
            #   acc = Pg @ (GW * Mask) @ Qs   keep tap-diag blocks, sum taps  [m_out, bd]
            gw = mm(mm(tsel, v), w2cat)
            acc = mm(mm(pg, gw * mskT), qs)
            v = relu(acc + b2)
            # conv3: 1x1 + relu
            v = relu(mm(v, w3) + b3)
            # residual: identity, or stride-s 1x1 conv == subsample + 1x1
            res = (mm(mm(rsel, x_in), wres) + bres) if s > 1 else x_in
            v = v + res

        # Flatten (torch NCHW order) + Linear + tanh, as 3 stacked matmuls + mask
        # (no in-kernel reshape / transpose / concatenate).
        wlcat, mskL, gbT, qsum, bl = nxt(), nxt(), nxt(), nxt(), nxt()
        u = mm(v, wlcat)                                    # [N*S, S*out]
        out = mm(mm(gbT, u * mskL), qsum) + bl              # [N, out]
        out_ref[...] = jnp.tanh(out)

    return kernel


# --------------------------------- forward -------------------------------------

def _patchify(x_nhwc, kh, kw):
    """Non-overlapping patch extraction for conv_initial (kernel == stride)."""
    N, H, W, C = x_nhwc.shape
    Ho, Wo = H // kh, W // kw
    p = x_nhwc.reshape(N, Ho, kh, Wo, kw, C).transpose(0, 1, 3, 2, 4, 5)
    return p.reshape(N * Ho * Wo, kh * kw * C)


@functools.partial(jax.jit, static_argnums=(2, 3))
def image_encoder_forward(x_nchw, ops, strides, rescale):
    x = jnp.transpose(x_nchw, (0, 2, 3, 1))                 # NCHW -> NHWC
    cols0 = _patchify(x, rescale[0], rescale[1])            # [N*H0*W0, kh*kw*Cin]

    args = [cols0, ops["w0"], ops["b0"]]
    for blk, s in zip(ops["blocks"], strides):
        args += [blk["w1"], blk["b1"], blk["tsel"], blk["w2cat"], blk["maskT"],
                 blk["pg"], blk["qs"], blk["b2"], blk["w3"], blk["b3"]]
        if s > 1:
            args += [blk["rsel"], blk["wres"], blk["bres"]]
    args += [ops["wlcat"], ops["maskL"], ops["gbT"], ops["qsum"], ops["bl"]]

    n_batch = x_nchw.shape[0]
    out_dim = ops["bl"].shape[1]

    # ---- advisory cost estimate + explicit VMEM sizing (static shapes only) ----
    def mmf(a_shape, b_shape):
        return 2 * a_shape[0] * a_shape[1] * b_shape[1]

    depth = ops["w0"].shape[1]
    flops = mmf(cols0.shape, ops["w0"].shape)
    for blk, s in zip(ops["blocks"], strides):
        m_in = blk["tsel"].shape[1]
        flops += mmf((m_in, depth), blk["w1"].shape)                    # conv1
        flops += mmf(blk["tsel"].shape, (m_in, depth))                  # tap gather
        flops += mmf((blk["tsel"].shape[0], depth), blk["w2cat"].shape)
        flops += mmf(blk["pg"].shape, blk["maskT"].shape)
        flops += mmf((blk["pg"].shape[0], blk["qs"].shape[0]), blk["qs"].shape)
        flops += mmf((blk["pg"].shape[0], blk["w3"].shape[0]), blk["w3"].shape)
        if s > 1:
            flops += mmf(blk["rsel"].shape, (m_in, depth))
            flops += mmf((blk["rsel"].shape[0], depth), blk["wres"].shape)
    flops += mmf((ops["gbT"].shape[1], depth), ops["wlcat"].shape)
    flops += mmf(ops["gbT"].shape, ops["maskL"].shape)
    flops += mmf((ops["gbT"].shape[0], ops["qsum"].shape[0]), ops["qsum"].shape)

    bytes_accessed = sum(int(np.prod(a.shape)) * a.dtype.itemsize for a in args)
    bytes_accessed += n_batch * out_dim * 4
    cost = pl.CostEstimate(flops=int(flops),
                           transcendentals=int(n_batch * out_dim),
                           bytes_accessed=int(bytes_accessed))
    vmem_limit = int(min(64 * 2**20, max(16 * 2**20, 8 * bytes_accessed)))

    vmem = pl.BlockSpec(memory_space=pltpu.MemorySpace.VMEM)
    return pl.pallas_call(
        _make_kernel(strides),
        out_shape=jax.ShapeDtypeStruct((n_batch, out_dim), jnp.float32),
        in_specs=[vmem] * len(args),
        out_specs=vmem,
        compiler_params=pltpu.CompilerParams(vmem_limit_bytes=vmem_limit),
        cost_estimate=cost,
    )(*args)


# ----------------------- pure-JAX reference (validation) -----------------------

def _conv_ref(x, w_hwio, b, stride, padding):
    y = jax.lax.conv_general_dilated(x, w_hwio, window_strides=stride,
                                     padding=padding,
                                     dimension_numbers=("NHWC", "HWIO", "NHWC"))
    return y + b.reshape(1, 1, 1, -1)


def image_encoder_ref(x_nchw, params, strides):
    x = jnp.transpose(x_nchw, (0, 2, 3, 1))
    kh, kw = params["rescale"]
    v = jax.nn.relu(_conv_ref(x, params["conv_initial"]["w"],
                              params["conv_initial"]["b"], (kh, kw), "VALID"))
    for blk, s in zip(params["resblocks"], strides):
        ins = v
        v = jax.nn.relu(_conv_ref(v, blk["w1"], blk["b1"], (1, 1), "VALID"))
        v = jax.nn.relu(_conv_ref(v, blk["w2"], blk["b2"], (s, s), ((1, 1), (1, 1))))
        v = jax.nn.relu(_conv_ref(v, blk["w3"], blk["b3"], (1, 1), "VALID"))
        res = ins if s <= 1 else _conv_ref(ins, blk["wres"], blk["bres"], (s, s), "VALID")
        v = v + res
    flat = jnp.transpose(v, (0, 3, 1, 2)).reshape(-1, params["linear"]["w"].shape[0])
    return jnp.tanh(flat @ params["linear"]["w"] + params["linear"]["b"])


# ------------------------------ parameter init ---------------------------------

def init_params(key, *, in_ch=3, res_depth=16, bottleneck_depth=8,
                rescale=(4, 4), num_resblocks=2, strides=(2, 1),
                linear_in=256, output_dim=32):
    # Weights stored HWIO (== torch [Cout,Cin,kh,kw].transpose(2,3,1,0)).
    # Resblock conv weights ~ N(0, 0.01) as in the torch module; others small
    # normals (synthetic deterministic init, not a checkpoint load).
    ks = iter(jax.random.split(key, 8 + 8 * num_resblocks))

    def nrm(shape, std=0.01):
        return (std * jax.random.normal(next(ks), shape)).astype(jnp.float32)

    params = {
        "rescale": rescale,
        "conv_initial": {"w": nrm((rescale[0], rescale[1], in_ch, res_depth), 0.05),
                         "b": nrm((res_depth,), 0.05)},
        "resblocks": [],
        "linear": {"w": nrm((linear_in, output_dim), 0.05),
                   "b": nrm((output_dim,), 0.05)},
    }
    for i in range(num_resblocks):
        blk = {
            "w1": nrm((1, 1, res_depth, res_depth)),
            "b1": nrm((res_depth,)),
            "w2": nrm((3, 3, res_depth, bottleneck_depth)),
            "b2": nrm((bottleneck_depth,)),
            "w3": nrm((1, 1, bottleneck_depth, res_depth)),
            "b3": nrm((res_depth,)),
        }
        if strides[i] > 1:
            blk["wres"] = nrm((1, 1, res_depth, res_depth))
            blk["bres"] = nrm((res_depth,))
        params["resblocks"].append(blk)
    return params


# ----------------------------------- main ---------------------------------------

if __name__ == "__main__":
    key = jax.random.PRNGKey(0)
    k_param, k_x = jax.random.split(key)

    # Small-shape instantiation of the module:
    #   input_shape=(32,32), res_input_shape=(8,8) -> rescale=(4,4)
    #   res_depth=16, bottleneck_depth=8, num_resblocks=2, strides=(2,1)
    #   final feature map 16 x 4 x 4 -> linear_in=256, output_dim=32
    strides = (2, 1)
    rescale = (4, 4)
    params = init_params(k_param, in_ch=3, res_depth=16, bottleneck_depth=8,
                         rescale=rescale, num_resblocks=2, strides=strides,
                         linear_in=16 * 4 * 4, output_dim=32)

    x = jax.random.normal(k_x, (2, 3, 32, 32), dtype=jnp.float32)   # NCHW input

    ops = prepare_encoder(params, strides, batch=2, in_hw=(32, 32))

    out = jax.block_until_ready(image_encoder_forward(x, ops, strides, rescale))
    assert out.shape == (2, 32), out.shape

    ref = jax.block_until_ready(image_encoder_ref(x, params, strides))
    # Tolerance relaxed vs the f32-only version: MXU operands (weights +
    # activations) are bf16 per the perf review; accumulation stays f32.
    np.testing.assert_allclose(np.asarray(out), np.asarray(ref), atol=1e-2, rtol=1e-2)

    print("KERNEL_OK")
</pallas_src>

<mosaic_0001>
module attributes {stable_mosaic.version = 11 : i64} {
  func.func @kernel(%arg0: memref<128x48xf32, #tpu.memory_space<vmem>>, %arg1: memref<48x16xbf16, #tpu.memory_space<vmem>>, %arg2: memref<1x16xf32, #tpu.memory_space<vmem>>, %arg3: memref<16x16xbf16, #tpu.memory_space<vmem>>, %arg4: memref<1x16xf32, #tpu.memory_space<vmem>>, %arg5: memref<288x128xbf16, #tpu.memory_space<vmem>>, %arg6: memref<16x72xbf16, #tpu.memory_space<vmem>>, %arg7: memref<288x72xbf16, #tpu.memory_space<vmem>>, %arg8: memref<32x288xbf16, #tpu.memory_space<vmem>>, %arg9: memref<72x8xbf16, #tpu.memory_space<vmem>>, %arg10: memref<1x8xf32, #tpu.memory_space<vmem>>, %arg11: memref<8x16xbf16, #tpu.memory_space<vmem>>, %arg12: memref<1x16xf32, #tpu.memory_space<vmem>>, %arg13: memref<32x128xbf16, #tpu.memory_space<vmem>>, %arg14: memref<16x16xbf16, #tpu.memory_space<vmem>>, %arg15: memref<1x16xf32, #tpu.memory_space<vmem>>, %arg16: memref<16x16xbf16, #tpu.memory_space<vmem>>, %arg17: memref<1x16xf32, #tpu.memory_space<vmem>>, %arg18: memref<288x32xbf16, #tpu.memory_space<vmem>>, %arg19: memref<16x72xbf16, #tpu.memory_space<vmem>>, %arg20: memref<288x72xbf16, #tpu.memory_space<vmem>>, %arg21: memref<32x288xbf16, #tpu.memory_space<vmem>>, %arg22: memref<72x8xbf16, #tpu.memory_space<vmem>>, %arg23: memref<1x8xf32, #tpu.memory_space<vmem>>, %arg24: memref<8x16xbf16, #tpu.memory_space<vmem>>, %arg25: memref<1x16xf32, #tpu.memory_space<vmem>>, %arg26: memref<16x512xbf16, #tpu.memory_space<vmem>>, %arg27: memref<32x512xbf16, #tpu.memory_space<vmem>>, %arg28: memref<2x32xbf16, #tpu.memory_space<vmem>>, %arg29: memref<512x32xbf16, #tpu.memory_space<vmem>>, %arg30: memref<1x32xf32, #tpu.memory_space<vmem>>, %arg31: memref<2x32xf32, #tpu.memory_space<vmem>>) attributes {dimension_semantics = [], scalar_prefetch = 0 : i64, scratch_operands = 0 : i64, tpu.core_type = #tpu.core_type<tc>} {
    %c0 = arith.constant 0 : index
    %c0_0 = arith.constant 0 : index
    %0 = vector.load %arg0[%c0, %c0_0] : memref<128x48xf32, #tpu.memory_space<vmem>>, vector<128x48xf32>
    %c0_1 = arith.constant 0 : index
    %c0_2 = arith.constant 0 : index
    %1 = vector.load %arg1[%c0_1, %c0_2] : memref<48x16xbf16, #tpu.memory_space<vmem>>, vector<48x16xbf16>
    %c0_3 = arith.constant 0 : index
    %c0_4 = arith.constant 0 : index
    %2 = vector.load %arg2[%c0_3, %c0_4] : memref<1x16xf32, #tpu.memory_space<vmem>>, vector<1x16xf32>
    %3 = arith.truncf %0 : vector<128x48xf32> to vector<128x48xbf16>
    %cst = arith.constant dense<0.000000e+00> : vector<128x16xf32>
    %4 = tpu.matmul %3, %1, %cst {dimension_numbers = #tpu.dot_dimension_numbers<[1], [0], [0], [1], [0, 0, 1, 1], [], []>} : vector<128x48xbf16>, vector<48x16xbf16>, vector<128x16xf32> -> vector<128x16xf32>
    %5 = vector.broadcast %2 : vector<1x16xf32> to vector<128x16xf32>
    %6 = arith.addf %4, %5 : vector<128x16xf32>
    %cst_5 = arith.constant 0.000000e+00 : f32
    %7 = vector.broadcast %cst_5 : f32 to vector<128x16xf32>
    %8 = arith.maximumf %6, %7 : vector<128x16xf32>
    %c0_6 = arith.constant 0 : index
    %c0_7 = arith.constant 0 : index
    %9 = vector.load %arg3[%c0_6, %c0_7] : memref<16x16xbf16, #tpu.memory_space<vmem>>, vector<16x16xbf16>
    %c0_8 = arith.constant 0 : index
    %c0_9 = arith.constant 0 : index
    %10 = vector.load %arg4[%c0_8, %c0_9] : memref<1x16xf32, #tpu.memory_space<vmem>>, vector<1x16xf32>
    %c0_10 = arith.constant 0 : index
    %c0_11 = arith.constant 0 : index
    %11 = vector.load %arg5[%c0_10, %c0_11] : memref<288x128xbf16, #tpu.memory_space<vmem>>, vector<288x128xbf16>
    %c0_12 = arith.constant 0 : index
    %c0_13 = arith.constant 0 : index
    %12 = vector.load %arg6[%c0_12, %c0_13] : memref<16x72xbf16, #tpu.memory_space<vmem>>, vector<16x72xbf16>
    %c0_14 = arith.constant 0 : index
    %c0_15 = arith.constant 0 : index
    %13 = vector.load %arg7[%c0_14, %c0_15] : memref<288x72xbf16, #tpu.memory_space<vmem>>, vector<288x72xbf16>
    %c0_16 = arith.constant 0 : index
    %c0_17 = arith.constant 0 : index
    %14 = vector.load %arg8[%c0_16, %c0_17] : memref<32x288xbf16, #tpu.memory_space<vmem>>, vector<32x288xbf16>
    %c0_18 = arith.constant 0 : index
    %c0_19 = arith.constant 0 : index
    %15 = vector.load %arg9[%c0_18, %c0_19] : memref<72x8xbf16, #tpu.memory_space<vmem>>, vector<72x8xbf16>
    %c0_20 = arith.constant 0 : index
    %c0_21 = arith.constant 0 : index
    %16 = vector.load %arg10[%c0_20, %c0_21] : memref<1x8xf32, #tpu.memory_space<vmem>>, vector<1x8xf32>
    %c0_22 = arith.constant 0 : index
    %c0_23 = arith.constant 0 : index
    %17 = vector.load %arg11[%c0_22, %c0_23] : memref<8x16xbf16, #tpu.memory_space<vmem>>, vector<8x16xbf16>
    %c0_24 = arith.constant 0 : index
    %c0_25 = arith.constant 0 : index
    %18 = vector.load %arg12[%c0_24, %c0_25] : memref<1x16xf32, #tpu.memory_space<vmem>>, vector<1x16xf32>
    %c0_26 = arith.constant 0 : index
    %c0_27 = arith.constant 0 : index
    %19 = vector.load %arg13[%c0_26, %c0_27] : memref<32x128xbf16, #tpu.memory_space<vmem>>, vector<32x128xbf16>
    %c0_28 = arith.constant 0 : index
    %c0_29 = arith.constant 0 : index
    %20 = vector.load %arg14[%c0_28, %c0_29] : memref<16x16xbf16, #tpu.memory_space<vmem>>, vector<16x16xbf16>
    %c0_30 = arith.constant 0 : index
    %c0_31 = arith.constant 0 : index
    %21 = vector.load %arg15[%c0_30, %c0_31] : memref<1x16xf32, #tpu.memory_space<vmem>>, vector<1x16xf32>
    %22 = arith.truncf %8 : vector<128x16xf32> to vector<128x16xbf16>
    %cst_32 = arith.constant dense<0.000000e+00> : vector<128x16xf32>
    %23 = tpu.matmul %22, %9, %cst_32 {dimension_numbers = #tpu.dot_dimension_numbers<[1], [0], [0], [1], [0, 0, 1, 1], [], []>} : vector<128x16xbf16>, vector<16x16xbf16>, vector<128x16xf32> -> vector<128x16xf32>
    %24 = vector.broadcast %10 : vector<1x16xf32> to vector<128x16xf32>
    %25 = arith.addf %23, %24 : vector<128x16xf32>
    %cst_33 = arith.constant 0.000000e+00 : f32
    %26 = vector.broadcast %cst_33 : f32 to vector<128x16xf32>
    %27 = arith.maximumf %25, %26 : vector<128x16xf32>
    %28 = arith.truncf %27 : vector<128x16xf32> to vector<128x16xbf16>
    %cst_34 = arith.constant dense<0.000000e+00> : vector<288x16xf32>
    %29 = tpu.matmul %11, %28, %cst_34 {dimension_numbers = #tpu.dot_dimension_numbers<[1], [0], [0], [1], [0, 0, 1, 1], [], []>} : vector<288x128xbf16>, vector<128x16xbf16>, vector<288x16xf32> -> vector<288x16xf32>
    %30 = arith.truncf %29 : vector<288x16xf32> to vector<288x16xbf16>
    %cst_35 = arith.constant dense<0.000000e+00> : vector<288x72xf32>
    %31 = tpu.matmul %30, %12, %cst_35 {dimension_numbers = #tpu.dot_dimension_numbers<[1], [0], [0], [1], [0, 0, 1, 1], [], []>} : vector<288x16xbf16>, vector<16x72xbf16>, vector<288x72xf32> -> vector<288x72xf32>
    %32 = arith.extf %13 : vector<288x72xbf16> to vector<288x72xf32>
    %33 = arith.mulf %31, %32 : vector<288x72xf32>
    %34 = arith.truncf %33 : vector<288x72xf32> to vector<288x72xbf16>
    %cst_36 = arith.constant dense<0.000000e+00> : vector<32x72xf32>
    %35 = tpu.matmul %14, %34, %cst_36 {dimension_numbers = #tpu.dot_dimension_numbers<[1], [0], [0], [1], [0, 0, 1, 1], [], []>} : vector<32x288xbf16>, vector<288x72xbf16>, vector<32x72xf32> -> vector<32x72xf32>
    %36 = arith.truncf %35 : vector<32x72xf32> to vector<32x72xbf16>
    %cst_37 = arith.constant dense<0.000000e+00> : vector<32x8xf32>
    %37 = tpu.matmul %36, %15, %cst_37 {dimension_numbers = #tpu.dot_dimension_numbers<[1], [0], [0], [1], [0, 0, 1, 1], [], []>} : vector<32x72xbf16>, vector<72x8xbf16>, vector<32x8xf32> -> vector<32x8xf32>
    %38 = vector.broadcast %16 : vector<1x8xf32> to vector<32x8xf32>
    %39 = arith.addf %37, %38 : vector<32x8xf32>
    %cst_38 = arith.constant 0.000000e+00 : f32
    %40 = vector.broadcast %cst_38 : f32 to vector<32x8xf32>
    %41 = arith.maximumf %39, %40 : vector<32x8xf32>
    %42 = arith.truncf %41 : vector<32x8xf32> to vector<32x8xbf16>
    %cst_39 = arith.constant dense<0.000000e+00> : vector<32x16xf32>
    %43 = tpu.matmul %42, %17, %cst_39 {dimension_numbers = #tpu.dot_dimension_numbers<[1], [0], [0], [1], [0, 0, 1, 1], [], []>} : vector<32x8xbf16>, vector<8x16xbf16>, vector<32x16xf32> -> vector<32x16xf32>
    %44 = vector.broadcast %18 : vector<1x16xf32> to vector<32x16xf32>
    %45 = arith.addf %43, %44 : vector<32x16xf32>
    %cst_40 = arith.constant 0.000000e+00 : f32
    %46 = vector.broadcast %cst_40 : f32 to vector<32x16xf32>
    %47 = arith.maximumf %45, %46 : vector<32x16xf32>
    %48 = arith.truncf %8 : vector<128x16xf32> to vector<128x16xbf16>
    %cst_41 = arith.constant dense<0.000000e+00> : vector<32x16xf32>
    %49 = tpu.matmul %19, %48, %cst_41 {dimension_numbers = #tpu.dot_dimension_numbers<[1], [0], [0], [1], [0, 0, 1, 1], [], []>} : vector<32x128xbf16>, vector<128x16xbf16>, vector<32x16xf32> -> vector<32x16xf32>
    %50 = arith.truncf %49 : vector<32x16xf32> to vector<32x16xbf16>
    %cst_42 = arith.constant dense<0.000000e+00> : vector<32x16xf32>
    %51 = tpu.matmul %50, %20, %cst_42 {dimension_numbers = #tpu.dot_dimension_numbers<[1], [0], [0], [1], [0, 0, 1, 1], [], []>} : vector<32x16xbf16>, vector<16x16xbf16>, vector<32x16xf32> -> vector<32x16xf32>
    %52 = vector.broadcast %21 : vector<1x16xf32> to vector<32x16xf32>
    %53 = arith.addf %51, %52 : vector<32x16xf32>
    %54 = arith.addf %47, %53 : vector<32x16xf32>
    %c0_43 = arith.constant 0 : index
    %c0_44 = arith.constant 0 : index
    %55 = vector.load %arg16[%c0_43, %c0_44] : memref<16x16xbf16, #tpu.memory_space<vmem>>, vector<16x16xbf16>
    %c0_45 = arith.constant 0 : index
    %c0_46 = arith.constant 0 : index
    %56 = vector.load %arg17[%c0_45, %c0_46] : memref<1x16xf32, #tpu.memory_space<vmem>>, vector<1x16xf32>
    %c0_47 = arith.constant 0 : index
    %c0_48 = arith.constant 0 : index
    %57 = vector.load %arg18[%c0_47, %c0_48] : memref<288x32xbf16, #tpu.memory_space<vmem>>, vector<288x32xbf16>
    %c0_49 = arith.constant 0 : index
    %c0_50 = arith.constant 0 : index
    %58 = vector.load %arg19[%c0_49, %c0_50] : memref<16x72xbf16, #tpu.memory_space<vmem>>, vector<16x72xbf16>
    %c0_51 = arith.constant 0 : index
    %c0_52 = arith.constant 0 : index
    %59 = vector.load %arg20[%c0_51, %c0_52] : memref<288x72xbf16, #tpu.memory_space<vmem>>, vector<288x72xbf16>
    %c0_53 = arith.constant 0 : index
    %c0_54 = arith.constant 0 : index
    %60 = vector.load %arg21[%c0_53, %c0_54] : memref<32x288xbf16, #tpu.memory_space<vmem>>, vector<32x288xbf16>
    %c0_55 = arith.constant 0 : index
    %c0_56 = arith.constant 0 : index
    %61 = vector.load %arg22[%c0_55, %c0_56] : memref<72x8xbf16, #tpu.memory_space<vmem>>, vector<72x8xbf16>
    %c0_57 = arith.constant 0 : index
    %c0_58 = arith.constant 0 : index
    %62 = vector.load %arg23[%c0_57, %c0_58] : memref<1x8xf32, #tpu.memory_space<vmem>>, vector<1x8xf32>
    %c0_59 = arith.constant 0 : index
    %c0_60 = arith.constant 0 : index
    %63 = vector.load %arg24[%c0_59, %c0_60] : memref<8x16xbf16, #tpu.memory_space<vmem>>, vector<8x16xbf16>
    %c0_61 = arith.constant 0 : index
    %c0_62 = arith.constant 0 : index
    %64 = vector.load %arg25[%c0_61, %c0_62] : memref<1x16xf32, #tpu.memory_space<vmem>>, vector<1x16xf32>
    %65 = arith.truncf %54 : vector<32x16xf32> to vector<32x16xbf16>
    %cst_63 = arith.constant dense<0.000000e+00> : vector<32x16xf32>
    %66 = tpu.matmul %65, %55, %cst_63 {dimension_numbers = #tpu.dot_dimension_numbers<[1], [0], [0], [1], [0, 0, 1, 1], [], []>} : vector<32x16xbf16>, vector<16x16xbf16>, vector<32x16xf32> -> vector<32x16xf32>
    %67 = vector.broadcast %56 : vector<1x16xf32> to vector<32x16xf32>
    %68 = arith.addf %66, %67 : vector<32x16xf32>
    %cst_64 = arith.constant 0.000000e+00 : f32
    %69 = vector.broadcast %cst_64 : f32 to vector<32x16xf32>
    %70 = arith.maximumf %68, %69 : vector<32x16xf32>
    %71 = arith.truncf %70 : vector<32x16xf32> to vector<32x16xbf16>
    %cst_65 = arith.constant dense<0.000000e+00> : vector<288x16xf32>
    %72 = tpu.matmul %57, %71, %cst_65 {dimension_numbers = #tpu.dot_dimension_numbers<[1], [0], [0], [1], [0, 0, 1, 1], [], []>} : vector<288x32xbf16>, vector<32x16xbf16>, vector<288x16xf32> -> vector<288x16xf32>
    %73 = arith.truncf %72 : vector<288x16xf32> to vector<288x16xbf16>
    %cst_66 = arith.constant dense<0.000000e+00> : vector<288x72xf32>
    %74 = tpu.matmul %73, %58, %cst_66 {dimension_numbers = #tpu.dot_dimension_numbers<[1], [0], [0], [1], [0, 0, 1, 1], [], []>} : vector<288x16xbf16>, vector<16x72xbf16>, vector<288x72xf32> -> vector<288x72xf32>
    %75 = arith.extf %59 : vector<288x72xbf16> to vector<288x72xf32>
    %76 = arith.mulf %74, %75 : vector<288x72xf32>
    %77 = arith.truncf %76 : vector<288x72xf32> to vector<288x72xbf16>
    %cst_67 = arith.constant dense<0.000000e+00> : vector<32x72xf32>
    %78 = tpu.matmul %60, %77, %cst_67 {dimension_numbers = #tpu.dot_dimension_numbers<[1], [0], [0], [1], [0, 0, 1, 1], [], []>} : vector<32x288xbf16>, vector<288x72xbf16>, vector<32x72xf32> -> vector<32x72xf32>
    %79 = arith.truncf %78 : vector<32x72xf32> to vector<32x72xbf16>
    %cst_68 = arith.constant dense<0.000000e+00> : vector<32x8xf32>
    %80 = tpu.matmul %79, %61, %cst_68 {dimension_numbers = #tpu.dot_dimension_numbers<[1], [0], [0], [1], [0, 0, 1, 1], [], []>} : vector<32x72xbf16>, vector<72x8xbf16>, vector<32x8xf32> -> vector<32x8xf32>
    %81 = vector.broadcast %62 : vector<1x8xf32> to vector<32x8xf32>
    %82 = arith.addf %80, %81 : vector<32x8xf32>
    %cst_69 = arith.constant 0.000000e+00 : f32
    %83 = vector.broadcast %cst_69 : f32 to vector<32x8xf32>
    %84 = arith.maximumf %82, %83 : vector<32x8xf32>
    %85 = arith.truncf %84 : vector<32x8xf32> to vector<32x8xbf16>
    %cst_70 = arith.constant dense<0.000000e+00> : vector<32x16xf32>
    %86 = tpu.matmul %85, %63, %cst_70 {dimension_numbers = #tpu.dot_dimension_numbers<[1], [0], [0], [1], [0, 0, 1, 1], [], []>} : vector<32x8xbf16>, vector<8x16xbf16>, vector<32x16xf32> -> vector<32x16xf32>
    %87 = vector.broadcast %64 : vector<1x16xf32> to vector<32x16xf32>
    %88 = arith.addf %86, %87 : vector<32x16xf32>
    %cst_71 = arith.constant 0.000000e+00 : f32
    %89 = vector.broadcast %cst_71 : f32 to vector<32x16xf32>
    %90 = arith.maximumf %88, %89 : vector<32x16xf32>
    %91 = arith.addf %90, %54 : vector<32x16xf32>
    %c0_72 = arith.constant 0 : index
    %c0_73 = arith.constant 0 : index
    %92 = vector.load %arg26[%c0_72, %c0_73] : memref<16x512xbf16, #tpu.memory_space<vmem>>, vector<16x512xbf16>
    %c0_74 = arith.constant 0 : index
    %c0_75 = arith.constant 0 : index
    %93 = vector.load %arg27[%c0_74, %c0_75] : memref<32x512xbf16, #tpu.memory_space<vmem>>, vector<32x512xbf16>
    %c0_76 = arith.constant 0 : index
    %c0_77 = arith.constant 0 : index
    %94 = vector.load %arg28[%c0_76, %c0_77] : memref<2x32xbf16, #tpu.memory_space<vmem>>, vector<2x32xbf16>
    %c0_78 = arith.constant 0 : index
    %c0_79 = arith.constant 0 : index
    %95 = vector.load %arg29[%c0_78, %c0_79] : memref<512x32xbf16, #tpu.memory_space<vmem>>, vector<512x32xbf16>
    %c0_80 = arith.constant 0 : index
    %c0_81 = arith.constant 0 : index
    %96 = vector.load %arg30[%c0_80, %c0_81] : memref<1x32xf32, #tpu.memory_space<vmem>>, vector<1x32xf32>
    %97 = arith.truncf %91 : vector<32x16xf32> to vector<32x16xbf16>
    %cst_82 = arith.constant dense<0.000000e+00> : vector<32x512xf32>
    %98 = tpu.matmul %97, %92, %cst_82 {dimension_numbers = #tpu.dot_dimension_numbers<[1], [0], [0], [1], [0, 0, 1, 1], [], []>} : vector<32x16xbf16>, vector<16x512xbf16>, vector<32x512xf32> -> vector<32x512xf32>
    %99 = arith.extf %93 : vector<32x512xbf16> to vector<32x512xf32>
    %100 = arith.mulf %98, %99 : vector<32x512xf32>
    %101 = arith.truncf %100 : vector<32x512xf32> to vector<32x512xbf16>
    %cst_83 = arith.constant dense<0.000000e+00> : vector<2x512xf32>
    %102 = tpu.matmul %94, %101, %cst_83 {dimension_numbers = #tpu.dot_dimension_numbers<[1], [0], [0], [1], [0, 0, 1, 1], [], []>} : vector<2x32xbf16>, vector<32x512xbf16>, vector<2x512xf32> -> vector<2x512xf32>
    %103 = arith.truncf %102 : vector<2x512xf32> to vector<2x512xbf16>
    %cst_84 = arith.constant dense<0.000000e+00> : vector<2x32xf32>
    %104 = tpu.matmul %103, %95, %cst_84 {dimension_numbers = #tpu.dot_dimension_numbers<[1], [0], [0], [1], [0, 0, 1, 1], [], []>} : vector<2x512xbf16>, vector<512x32xbf16>, vector<2x32xf32> -> vector<2x32xf32>
    %105 = vector.broadcast %96 : vector<1x32xf32> to vector<2x32xf32>
    %106 = arith.addf %104, %105 : vector<2x32xf32>
    %107 = math.tanh %106 : vector<2x32xf32>
    %c0_85 = arith.constant 0 : index
    %c0_86 = arith.constant 0 : index
    %108 = vector.load %arg31[%c0_85, %c0_86] : memref<2x32xf32, #tpu.memory_space<vmem>>, vector<2x32xf32>
    tpu.vector_store %arg31[%c0_85, %c0_86], %107 {strides = array<i32>} : memref<2x32xf32, #tpu.memory_space<vmem>>, vector<2x32xf32>,
    return
  }
}

</mosaic_0001>

<llo_original>
// kernel: image_encoder_forward.1
$region0: #{image_encoder_forward.1}
  #allocation0 [shape = 'u32[]', space=smem, size = 0x4, offset = 0x4, fixed_abs, tag = 'smem constant byte address 0x4 - core index']
  #allocation1 [shape = 'u32[144,128]{1,0:T(1,128)}', space=vmem, size = 0x12000, scoped, tag = 'internal scratch']
  %s0 = inlined_call_operand.smem [shape: u32[32], index: -1, kind: input, shape index: {}]
  %s1 = sld [smem:[%s0]]
  %s2 = scalar_lea.smem %s0, 1
  %s3 = sld [smem:[%s2]]
  %s4 = scalar_lea.smem %s0, 2
  %s5 = sld [smem:[%s4]]
  %s6 = scalar_lea.smem %s0, 3
  %s7 = sld [smem:[%s6]]
  %s8 = scalar_lea.smem %s0, 4
  %s9 = sld [smem:[%s8]]
  %s10 = scalar_lea.smem %s0, 5
  %s11 = sld [smem:[%s10]]
  %s12 = scalar_lea.smem %s0, 6
  %s13 = sld [smem:[%s12]]
  %s14 = scalar_lea.smem %s0, 7
  %s15 = sld [smem:[%s14]]
  %s16 = scalar_lea.smem %s0, 8
  %s17 = sld [smem:[%s16]]
  %s18 = scalar_lea.smem %s0, 9
  %s19 = sld [smem:[%s18]]
  %s20 = scalar_lea.smem %s0, 10
  %s21 = sld [smem:[%s20]]
  %s22 = scalar_lea.smem %s0, 11
  %s23 = sld [smem:[%s22]]
  %s24 = scalar_lea.smem %s0, 12
  %s25 = sld [smem:[%s24]]
  %s26 = scalar_lea.smem %s0, 13
  %s27 = sld [smem:[%s26]]
  %s28 = scalar_lea.smem %s0, 14
  %s29 = sld [smem:[%s28]]
  %s30 = scalar_lea.smem %s0, 15
  %s31 = sld [smem:[%s30]]
  %s32 = scalar_lea.smem %s0, 16
  %s33 = sld [smem:[%s32]]
  %s34 = scalar_lea.smem %s0, 17
  %s35 = sld [smem:[%s34]]
  %s36 = scalar_lea.smem %s0, 18
  %s37 = sld [smem:[%s36]]
  %s38 = scalar_lea.smem %s0, 19
  %s39 = sld [smem:[%s38]]
  %s40 = scalar_lea.smem %s0, 20
  %s41 = sld [smem:[%s40]]
  %s42 = scalar_lea.smem %s0, 21
  %s43 = sld [smem:[%s42]]
  %s44 = scalar_lea.smem %s0, 22
  %s45 = sld [smem:[%s44]]
  %s46 = scalar_lea.smem %s0, 23
  %s47 = sld [smem:[%s46]]
  %s48 = scalar_lea.smem %s0, 24
  %s49 = sld [smem:[%s48]]
  %s50 = scalar_lea.smem %s0, 25
  %s51 = sld [smem:[%s50]]
  %s52 = scalar_lea.smem %s0, 26
  %s53 = sld [smem:[%s52]]
  %s54 = scalar_lea.smem %s0, 27
  %s55 = sld [smem:[%s54]]
  %s56 = scalar_lea.smem %s0, 28
  %s57 = sld [smem:[%s56]]
  %s58 = scalar_lea.smem %s0, 29
  %s59 = sld [smem:[%s58]]
  %s60 = scalar_lea.smem %s0, 30
  %s61 = sld [smem:[%s60]]
  %s62 = scalar_lea.smem %s0, 31
  %s63 = sld [smem:[%s62]]
  %s64 = sld [smem:[#allocation0]]
  $region134: #{image_encoder_forward.1} parent=0
    _
  %s66 = ssub.s32 1, %s64
  %s67 = scalar_select 0, %s66, %s64
  $region1: #{image_encoder_forward.1} parent=0
    #allocation2 [shape = 'u8[1024]{0}', space=vmem, size = 0x400, scoped, tag = 'output window, operand 0, single buffered']
    #allocation3 [shape = 's32[1]{0}', space=sflag, size = 0x4, scoped, tag = 'scoped memory for image_encoder_forward.1']
    %68 = vsyncpa [#allocation3], 0
    // Predicated region
    $region2: #{image_encoder_forward.1} parent=1 // pred_check
      _
    $region3: #{image_encoder_forward.1} parent=1 // pred_check_branch
      %70 = sbr.rel (0) target = $region5
    $region4: #{image_encoder_forward.1} parent=1 // pred_region
      _
    $region5: #{image_encoder_forward.1} parent=1 // pred_fallthru
      _
    // Predicated region
    $region6: #{image_encoder_forward.1} parent=1 // pred_check
      _
    $region7: #{image_encoder_forward.1} parent=1 // pred_check_branch
      %72 = sbr.rel (0) target = $region9
    $region8: #{image_encoder_forward.1} parent=1 // pred_region
      _
    $region9: #{image_encoder_forward.1} parent=1 // pred_fallthru
      _
    // Predicated region
    $region10: #{image_encoder_forward.1} parent=1 // pred_check
      _
    $region11: #{image_encoder_forward.1} parent=1 // pred_check_branch
      %74 = sbr.rel (0) target = $region13
    $region12: #{image_encoder_forward.1} parent=1 // pred_region
      _
    $region13: #{image_encoder_forward.1} parent=1 // pred_fallthru
      _
    // Predicated region
    $region14: #{image_encoder_forward.1} parent=1 // pred_check
      _
    $region15: #{image_encoder_forward.1} parent=1 // pred_check_branch
      %76 = sbr.rel (0) target = $region17
    $region16: #{image_encoder_forward.1} parent=1 // pred_region
      _
    $region17: #{image_encoder_forward.1} parent=1 // pred_fallthru
      _
    // Predicated region
    $region18: #{image_encoder_forward.1} parent=1 // pred_check
      _
    $region19: #{image_encoder_forward.1} parent=1 // pred_check_branch
      %78 = sbr.rel (0) target = $region21
    $region20: #{image_encoder_forward.1} parent=1 // pred_region
      _
    $region21: #{image_encoder_forward.1} parent=1 // pred_fallthru
      _
    // Predicated region
    $region22: #{image_encoder_forward.1} parent=1 // pred_check
      _
    $region23: #{image_encoder_forward.1} parent=1 // pred_check_branch
      %80 = sbr.rel (0) target = $region25
    $region24: #{image_encoder_forward.1} parent=1 // pred_region
      _
    $region25: #{image_encoder_forward.1} parent=1 // pred_fallthru
      _
    // Predicated region
    $region26: #{image_encoder_forward.1} parent=1 // pred_check
      _
    $region27: #{image_encoder_forward.1} parent=1 // pred_check_branch
      %82 = sbr.rel (0) target = $region29
    $region28: #{image_encoder_forward.1} parent=1 // pred_region
      _
    $region29: #{image_encoder_forward.1} parent=1 // pred_fallthru
      _
    // Predicated region
    $region30: #{image_encoder_forward.1} parent=1 // pred_check
      _
    $region31: #{image_encoder_forward.1} parent=1 // pred_check_branch
      %84 = sbr.rel (0) target = $region33
    $region32: #{image_encoder_forward.1} parent=1 // pred_region
      _
    $region33: #{image_encoder_forward.1} parent=1 // pred_fallthru
      _
    // Predicated region
    $region34: #{image_encoder_forward.1} parent=1 // pred_check
      _
    $region35: #{image_encoder_forward.1} parent=1 // pred_check_branch
      %86 = sbr.rel (0) target = $region37
    $region36: #{image_encoder_forward.1} parent=1 // pred_region
      _
    $region37: #{image_encoder_forward.1} parent=1 // pred_fallthru
      _
    // Predicated region
    $region38: #{image_encoder_forward.1} parent=1 // pred_check
      _
    $region39: #{image_encoder_forward.1} parent=1 // pred_check_branch
      %88 = sbr.rel (0) target = $region41
    $region40: #{image_encoder_forward.1} parent=1 // pred_region
      _
    $region41: #{image_encoder_forward.1} parent=1 // pred_fallthru
      _
    // Predicated region
    $region42: #{image_encoder_forward.1} parent=1 // pred_check
      _
    $region43: #{image_encoder_forward.1} parent=1 // pred_check_branch
      %90 = sbr.rel (0) target = $region45
    $region44: #{image_encoder_forward.1} parent=1 // pred_region
      _
    $region45: #{image_encoder_forward.1} parent=1 // pred_fallthru
      _
    // Predicated region
    $region46: #{image_encoder_forward.1} parent=1 // pred_check
      _
    $region47: #{image_encoder_forward.1} parent=1 // pred_check_branch
      %92 = sbr.rel (0) target = $region49
    $region48: #{image_encoder_forward.1} parent=1 // pred_region
      _
    $region49: #{image_encoder_forward.1} parent=1 // pred_fallthru
      _
    // Predicated region
    $region50: #{image_encoder_forward.1} parent=1 // pred_check
      _
    $region51: #{image_encoder_forward.1} parent=1 // pred_check_branch
      %94 = sbr.rel (0) target = $region53
    $region52: #{image_encoder_forward.1} parent=1 // pred_region
      _
    $region53: #{image_encoder_forward.1} parent=1 // pred_fallthru
      _
    // Predicated region
    $region54: #{image_encoder_forward.1} parent=1 // pred_check
      _
    $region55: #{image_encoder_forward.1} parent=1 // pred_check_branch
      %96 = sbr.rel (0) target = $region57
    $region56: #{image_encoder_forward.1} parent=1 // pred_region
      _
    $region57: #{image_encoder_forward.1} parent=1 // pred_fallthru
      _
    // Predicated region
    $region58: #{image_encoder_forward.1} parent=1 // pred_check
      _
    $region59: #{image_encoder_forward.1} parent=1 // pred_check_branch
      %98 = sbr.rel (0) target = $region61
    $region60: #{image_encoder_forward.1} parent=1 // pred_region
      _
    $region61: #{image_encoder_forward.1} parent=1 // pred_fallthru
      _
    // Predicated region
    $region62: #{image_encoder_forward.1} parent=1 // pred_check
      _
    $region63: #{image_encoder_forward.1} parent=1 // pred_check_branch
      %100 = sbr.rel (0) target = $region65
    $region64: #{image_encoder_forward.1} parent=1 // pred_region
      _
    $region65: #{image_encoder_forward.1} parent=1 // pred_fallthru
      _
    // Predicated region
    $region66: #{image_encoder_forward.1} parent=1 // pred_check
      _
    $region67: #{image_encoder_forward.1} parent=1 // pred_check_branch
      %102 = sbr.rel (0) target = $region69
    $region68: #{image_encoder_forward.1} parent=1 // pred_region
      _
    $region69: #{image_encoder_forward.1} parent=1 // pred_fallthru
      _
    // Predicated region
    $region70: #{image_encoder_forward.1} parent=1 // pred_check
      _
    $region71: #{image_encoder_forward.1} parent=1 // pred_check_branch
      %104 = sbr.rel (0) target = $region73
    $region72: #{image_encoder_forward.1} parent=1 // pred_region
      _
    $region73: #{image_encoder_forward.1} parent=1 // pred_fallthru
      _
    // Predicated region
    $region74: #{image_encoder_forward.1} parent=1 // pred_check
      _
    $region75: #{image_encoder_forward.1} parent=1 // pred_check_branch
      %106 = sbr.rel (0) target = $region77
    $region76: #{image_encoder_forward.1} parent=1 // pred_region
      _
    $region77: #{image_encoder_forward.1} parent=1 // pred_fallthru
      _
    // Predicated region
    $region78: #{image_encoder_forward.1} parent=1 // pred_check
      _
    $region79: #{image_encoder_forward.1} parent=1 // pred_check_branch
      %108 = sbr.rel (0) target = $region81
    $region80: #{image_encoder_forward.1} parent=1 // pred_region
      _
    $region81: #{image_encoder_forward.1} parent=1 // pred_fallthru
      _
    // Predicated region
    $region82: #{image_encoder_forward.1} parent=1 // pred_check
      _
    $region83: #{image_encoder_forward.1} parent=1 // pred_check_branch
      %110 = sbr.rel (0) target = $region85
    $region84: #{image_encoder_forward.1} parent=1 // pred_region
      _
    $region85: #{image_encoder_forward.1} parent=1 // pred_fallthru
      _
    // Predicated region
    $region86: #{image_encoder_forward.1} parent=1 // pred_check
      _
    $region87: #{image_encoder_forward.1} parent=1 // pred_check_branch
      %112 = sbr.rel (0) target = $region89
    $region88: #{image_encoder_forward.1} parent=1 // pred_region
      _
    $region89: #{image_encoder_forward.1} parent=1 // pred_fallthru
      _
    // Predicated region
    $region90: #{image_encoder_forward.1} parent=1 // pred_check
      _
    $region91: #{image_encoder_forward.1} parent=1 // pred_check_branch
      %114 = sbr.rel (0) target = $region93
    $region92: #{image_encoder_forward.1} parent=1 // pred_region
      _
    $region93: #{image_encoder_forward.1} parent=1 // pred_fallthru
      _
    // Predicated region
    $region94: #{image_encoder_forward.1} parent=1 // pred_check
      _
    $region95: #{image_encoder_forward.1} parent=1 // pred_check_branch
      %116 = sbr.rel (0) target = $region97
    $region96: #{image_encoder_forward.1} parent=1 // pred_region
      _
    $region97: #{image_encoder_forward.1} parent=1 // pred_fallthru
      _
    // Predicated region
    $region98: #{image_encoder_forward.1} parent=1 // pred_check
      _
    $region99: #{image_encoder_forward.1} parent=1 // pred_check_branch
      %118 = sbr.rel (0) target = $region101
    $region100: #{image_encoder_forward.1} parent=1 // pred_region
      _
    $region101: #{image_encoder_forward.1} parent=1 // pred_fallthru
      _
    // Predicated region
    $region102: #{image_encoder_forward.1} parent=1 // pred_check
      _
    $region103: #{image_encoder_forward.1} parent=1 // pred_check_branch
      %120 = sbr.rel (0) target = $region105
    $region104: #{image_encoder_forward.1} parent=1 // pred_region
      _
    $region105: #{image_encoder_forward.1} parent=1 // pred_fallthru
      _
    // Predicated region
    $region106: #{image_encoder_forward.1} parent=1 // pred_check
      _
    $region107: #{image_encoder_forward.1} parent=1 // pred_check_branch
      %122 = sbr.rel (0) target = $region109
    $region108: #{image_encoder_forward.1} parent=1 // pred_region
      _
    $region109: #{image_encoder_forward.1} parent=1 // pred_fallthru
      _
    // Predicated region
    $region110: #{image_encoder_forward.1} parent=1 // pred_check
      _
    $region111: #{image_encoder_forward.1} parent=1 // pred_check_branch
      %124 = sbr.rel (0) target = $region113
    $region112: #{image_encoder_forward.1} parent=1 // pred_region
      _
    $region113: #{image_encoder_forward.1} parent=1 // pred_fallthru
      _
    // Predicated region
    $region114: #{image_encoder_forward.1} parent=1 // pred_check
      _
    $region115: #{image_encoder_forward.1} parent=1 // pred_check_branch
      %126 = sbr.rel (0) target = $region117
    $region116: #{image_encoder_forward.1} parent=1 // pred_region
      _
    $region117: #{image_encoder_forward.1} parent=1 // pred_fallthru
      _
    // Predicated region
    $region118: #{image_encoder_forward.1} parent=1 // pred_check
      _
    $region119: #{image_encoder_forward.1} parent=1 // pred_check_branch
      %128 = sbr.rel (0) target = $region121
    $region120: #{image_encoder_forward.1} parent=1 // pred_region
      _
    $region121: #{image_encoder_forward.1} parent=1 // pred_fallthru
      _
    // Predicated region
    $region122: #{image_encoder_forward.1} parent=1 // pred_check
      _
    $region123: #{image_encoder_forward.1} parent=1 // pred_check_branch
      %130 = sbr.rel (0) target = $region125
    $region124: #{image_encoder_forward.1} parent=1 // pred_region
      _
    $region125: #{image_encoder_forward.1} parent=1 // pred_fallthru
      _
    %v132 = vld [vmem:[%s1] sm:$0xff]
    %v133 = vld [vmem:[%s1 + $0x8] sm:$0xff]
    %v134 = vld [vmem:[%s1 + $0x10] sm:$0xff]
    %v135 = vld [vmem:[%s1 + $0x18] sm:$0xff]
    %v136 = vld [vmem:[%s1 + $0x20] sm:$0xff]
    %v137 = vld [vmem:[%s1 + $0x28] sm:$0xff]
    %v138 = vld [vmem:[%s1 + $0x30] sm:$0xff]
    %v139 = vld [vmem:[%s1 + $0x38] sm:$0xff]
    %v140 = vld [vmem:[%s1 + $0x40] sm:$0xff]
    %v141 = vld [vmem:[%s1 + $0x48] sm:$0xff]
    %v142 = vld [vmem:[%s1 + $0x50] sm:$0xff]
    %v143 = vld [vmem:[%s1 + $0x58] sm:$0xff]
    %v144 = vld [vmem:[%s1 + $0x60] sm:$0xff]
    %v145 = vld [vmem:[%s1 + $0x68] sm:$0xff]
    %v146 = vld [vmem:[%s1 + $0x70] sm:$0xff]
    %v147 = vld [vmem:[%s1 + $0x78] sm:$0xff]
    %v148 = vld [vmem:[%s3] sm:$0xf]
    %v149 = vld [vmem:[%s3 + $0x4] sm:$0xf]
    %v150 = vld [vmem:[%s3 + $0x8] sm:$0xf]
    %v151 = vld [vmem:[%s3 + $0xc] sm:$0xf]
    %v152 = vld [vmem:[%s3 + $0x10] sm:$0xf]
    %v153 = vld [vmem:[%s3 + $0x14] sm:$0xf]
    %v154 = vld [vmem:[%s5] sm:$0x1]
    %v155 = vpack.c.bf16 %v133, %v132
    %v156 = vpack.c.bf16 %v135, %v134
    %v157 = vpack.c.bf16 %v137, %v136
    %v158 = vpack.c.bf16 %v139, %v138
    %v159 = vpack.c.bf16 %v141, %v140
    %v160 = vpack.c.bf16 %v143, %v142
    %v161 = vpack.c.bf16 %v145, %v144
    %v162 = vpack.c.bf16 %v147, %v146
    %v164 = vlaneseq
    %v165 = vshrl.u32 %v164, 7
    %v166 = vsub.s32 0, %v165
    %v167 = vrot.slane %v154, %v166
    %v175 = vunpack.c.l.b16 %v148
    %v176 = vunpack.c.l.b16 %v149
    %v177 = vunpack.c.l.b16 %v150
    %v178 = vunpack.c.l.b16 %v151
    %v179 = vunpack.c.l.b16 %v152
    %v180 = vunpack.c.l.b16 %v153
    %v181 = vpack.c.b16 %v176, %v175
    %v182 = vpack.c.b16 %v178, %v177
    %v183 = vpack.c.b16 %v180, %v179
    %vm187 = vcmask 392192
    %v189 = vsel %vm187, %v155, 0
    %v192 = vsel %vm187, %v156, 0
    %v195 = vsel %vm187, %v157, 0
    %v198 = vsel %vm187, %v158, 0
    %v201 = vsel %vm187, %v159, 0
    %v204 = vsel %vm187, %v160, 0
    %v207 = vsel %vm187, %v161, 0
    %v210 = vsel %vm187, %v162, 0
    %212 = vmatprep.subr.bf16.mxu0 0
    %213 = vmatpush1.bf16.msra.mxu0 %v181
    %214 = vmatprep.subr.bf16.mxu0 0
    %215 = vmatpush1.bf16.msra.mxu0 %v182
    %216 = vmatprep.subr.bf16.mxu0 0
    %217 = vmatpush1.bf16.msra.mxu0 %v183
    %218 = vmatprep.subr.bf16.mxu0 0
    %219 = vmatpush1.bf16.msra.mxu0 0
    %220 = vmatprep.subr.bf16.mxu0 0
    %221 = vmatpush1.bf16.msra.mxu0 0
    %222 = vmatprep.subr.bf16.mxu0 0
    %223 = vmatpush1.bf16.msra.mxu0 0
    %224 = vmatprep.subr.bf16.mxu0 0
    %225 = vmatpush1.bf16.msra.mxu0 0
    %226 = vmatprep.subr.bf16.mxu0 0
    %227 = vmatpush1.bf16.msra.mxu0 0
    %228 = vmatprep.subr.bf16.mxu0 0
    %229 = vmatpush1.bf16.msra.mxu0 0
    %230 = vmatprep.subr.bf16.mxu0 0
    %231 = vmatpush1.bf16.msra.mxu0 0
    %232 = vmatprep.subr.bf16.mxu0 0
    %233 = vmatpush1.bf16.msra.mxu0 0
    %234 = vmatprep.subr.bf16.mxu0 0
    %235 = vmatpush1.bf16.msra.mxu0 0
    %236 = vmatprep.subr.bf16.mxu0 0
    %237 = vmatpush1.bf16.msra.mxu0 0
    %238 = vmatprep.subr.bf16.mxu0 0
    %239 = vmatpush1.bf16.msra.mxu0 0
    %240 = vmatprep.subr.bf16.mxu0 0
    %241 = vmatpush1.bf16.msra.mxu0 0
    %242 = vmatprep.subr.bf16.mxu0 0
    %243 = vmatpush1.bf16.msra.mxu0 0
    %244 = vmatprep.mubr.bf16.mxu0 0
    %245 = vmatmul.mubr.bf16.gmra.mrb[0].mxu0 %v189
    %v246 = vpop.f32.mrb[0].mxu0
    %v247 = vadd.f32 %v167, %v246
    %v248 = vpop.f32.mrb[0].mxu0
    %v249 = vpop.f32.mrb[0].mxu0
    %v250 = vadd.f32 %v167, %v249
    %v251 = vpop.f32.mrb[0].mxu0
    %252 = vmatprep.mubr.bf16.mxu0 0
    %253 = vmatmul.mubr.bf16.gmra.mrb[0].mxu0 %v192
    %v254 = vpop.f32.mrb[0].mxu0
    %v255 = vadd.f32 %v167, %v254
    %v256 = vpop.f32.mrb[0].mxu0
    %v257 = vpop.f32.mrb[0].mxu0
    %v258 = vadd.f32 %v167, %v257
    %v259 = vpop.f32.mrb[0].mxu0
    %260 = vmatprep.mubr.bf16.mxu0 0
    %261 = vmatmul.mubr.bf16.gmra.mrb[0].mxu0 %v195
    %v262 = vpop.f32.mrb[0].mxu0
    %v263 = vadd.f32 %v167, %v262
    %v264 = vpop.f32.mrb[0].mxu0
    %v265 = vpop.f32.mrb[0].mxu0
    %v266 = vadd.f32 %v167, %v265
    %v267 = vpop.f32.mrb[0].mxu0
    %268 = vmatprep.mubr.bf16.mxu0 0
    %269 = vmatmul.mubr.bf16.gmra.mrb[0].mxu0 %v198
    %v270 = vpop.f32.mrb[0].mxu0
    %v271 = vadd.f32 %v167, %v270
    %v272 = vpop.f32.mrb[0].mxu0
    %v273 = vpop.f32.mrb[0].mxu0
    %v274 = vadd.f32 %v167, %v273
    %v275 = vpop.f32.mrb[0].mxu0
    %276 = vmatprep.mubr.bf16.mxu0 0
    %277 = vmatmul.mubr.bf16.gmra.mrb[0].mxu0 %v201
    %v278 = vpop.f32.mrb[0].mxu0
    %v279 = vadd.f32 %v167, %v278
    %v280 = vpop.f32.mrb[0].mxu0
    %v281 = vpop.f32.mrb[0].mxu0
    %v282 = vadd.f32 %v167, %v281
    %v283 = vpop.f32.mrb[0].mxu0
    %284 = vmatprep.mubr.bf16.mxu0 0
    %285 = vmatmul.mubr.bf16.gmra.mrb[0].mxu0 %v204
    %v286 = vpop.f32.mrb[0].mxu0
    %v287 = vadd.f32 %v167, %v286
    %v288 = vpop.f32.mrb[0].mxu0
    %v289 = vpop.f32.mrb[0].mxu0
    %v290 = vadd.f32 %v167, %v289
    %v291 = vpop.f32.mrb[0].mxu0
    %292 = vmatprep.mubr.bf16.mxu0 0
    %293 = vmatmul.mubr.bf16.gmra.mrb[0].mxu0 %v207
    %v294 = vpop.f32.mrb[0].mxu0
    %v295 = vadd.f32 %v167, %v294
    %v296 = vpop.f32.mrb[0].mxu0
    %v297 = vpop.f32.mrb[0].mxu0
    %v298 = vadd.f32 %v167, %v297
    %v299 = vpop.f32.mrb[0].mxu0
    %300 = vmatprep.mubr.bf16.mxu0 0
    %301 = vmatmul.mubr.bf16.gmra.mrb[0].mxu0 %v210
    %v302 = vpop.f32.mrb[0].mxu0
    %v303 = vadd.f32 %v167, %v302
    %v304 = vpop.f32.mrb[0].mxu0
    %v305 = vpop.f32.mrb[0].mxu0
    %v306 = vadd.f32 %v167, %v305
    %v307 = vpop.f32.mrb[0].mxu0
    %308 = vdwg.mxu0
    %v309 = vmax.f32 %v247, 0.0
    %v310 = vmax.f32 %v250, 0.0
    %v311 = vmax.f32 %v255, 0.0
    %v312 = vmax.f32 %v258, 0.0
    %v313 = vmax.f32 %v263, 0.0
    %v314 = vmax.f32 %v266, 0.0
    %v315 = vmax.f32 %v271, 0.0
    %v316 = vmax.f32 %v274, 0.0
    %v317 = vmax.f32 %v279, 0.0
    %v318 = vmax.f32 %v282, 0.0
    %v319 = vmax.f32 %v287, 0.0
    %v320 = vmax.f32 %v290, 0.0
    %v321 = vmax.f32 %v295, 0.0
    %v322 = vmax.f32 %v298, 0.0
    %v323 = vmax.f32 %v303, 0.0
    %v324 = vmax.f32 %v306, 0.0
    %v325 = vld [vmem:[%s7] sm:$0xf]
    %v326 = vld [vmem:[%s7 + $0x4] sm:$0xf]
    %v327 = vld [vmem:[%s9] sm:$0x1]
    %v328 = vld [vmem:[%s11] sm:$0xf]
    %v329 = vld [vmem:[%s11 + $0x4] sm:$0xf]
    %v330 = vld [vmem:[%s11 + $0x8] sm:$0xf]
    %v331 = vld [vmem:[%s11 + $0xc] sm:$0xf]
    %v332 = vld [vmem:[%s11 + $0x10] sm:$0xf]
    %v333 = vld [vmem:[%s11 + $0x14] sm:$0xf]
    %v334 = vld [vmem:[%s11 + $0x18] sm:$0xf]
    %v335 = vld [vmem:[%s11 + $0x1c] sm:$0xf]
    %v336 = vld [vmem:[%s11 + $0x20] sm:$0xf]
    %v337 = vld [vmem:[%s11 + $0x24] sm:$0xf]
    %v338 = vld [vmem:[%s11 + $0x28] sm:$0xf]
    %v339 = vld [vmem:[%s11 + $0x2c] sm:$0xf]
    %v340 = vld [vmem:[%s11 + $0x30] sm:$0xf]
    %v341 = vld [vmem:[%s11 + $0x34] sm:$0xf]
    %v342 = vld [vmem:[%s11 + $0x38] sm:$0xf]
    %v343 = vld [vmem:[%s11 + $0x3c] sm:$0xf]
    %v344 = vld [vmem:[%s11 + $0x40] sm:$0xf]
    %v345 = vld [vmem:[%s11 + $0x44] sm:$0xf]
    %v346 = vld [vmem:[%s11 + $0x48] sm:$0xf]
    %v347 = vld [vmem:[%s11 + $0x4c] sm:$0xf]
    %v348 = vld [vmem:[%s11 + $0x50] sm:$0xf]
    %v349 = vld [vmem:[%s11 + $0x54] sm:$0xf]
    %v350 = vld [vmem:[%s11 + $0x58] sm:$0xf]
    %v351 = vld [vmem:[%s11 + $0x5c] sm:$0xf]
    %v352 = vld [vmem:[%s11 + $0x60] sm:$0xf]
    %v353 = vld [vmem:[%s11 + $0x64] sm:$0xf]
    %v354 = vld [vmem:[%s11 + $0x68] sm:$0xf]
    %v355 = vld [vmem:[%s11 + $0x6c] sm:$0xf]
    %v356 = vld [vmem:[%s11 + $0x70] sm:$0xf]
    %v357 = vld [vmem:[%s11 + $0x74] sm:$0xf]
    %v358 = vld [vmem:[%s11 + $0x78] sm:$0xf]
    %v359 = vld [vmem:[%s11 + $0x7c] sm:$0xf]
    %v360 = vld [vmem:[%s11 + $0x80] sm:$0xf]
    %v361 = vld [vmem:[%s11 + $0x84] sm:$0xf]
    %v362 = vld [vmem:[%s11 + $0x88] sm:$0xf]
    %v363 = vld [vmem:[%s11 + $0x8c] sm:$0xf]
    %v364 = vld [vmem:[%s13] sm:$0xf]
    %v365 = vld [vmem:[%s13 + $0x4] sm:$0xf]
    %v366 = vld [vmem:[%s15] sm:$0xf]
    %v367 = vld [vmem:[%s15 + $0x4] sm:$0xf]
    %v368 = vld [vmem:[%s15 + $0x8] sm:$0xf]
    %v369 = vld [vmem:[%s15 + $0xc] sm:$0xf]
    %v370 = vld [vmem:[%s15 + $0x10] sm:$0xf]
    %v371 = vld [vmem:[%s15 + $0x14] sm:$0xf]
    %v372 = vld [vmem:[%s15 + $0x18] sm:$0xf]
    %v373 = vld [vmem:[%s15 + $0x1c] sm:$0xf]
    %v374 = vld [vmem:[%s15 + $0x20] sm:$0xf]
    %v375 = vld [vmem:[%s15 + $0x24] sm:$0xf]
    %v376 = vld [vmem:[%s15 + $0x28] sm:$0xf]
    %v377 = vld [vmem:[%s15 + $0x2c] sm:$0xf]
    %v378 = vld [vmem:[%s15 + $0x30] sm:$0xf]
    %v379 = vld [vmem:[%s15 + $0x34] sm:$0xf]
    %v380 = vld [vmem:[%s15 + $0x38] sm:$0xf]
    %v381 = vld [vmem:[%s15 + $0x3c] sm:$0xf]
    %v382 = vld [vmem:[%s15 + $0x40] sm:$0xf]
    %v383 = vld [vmem:[%s15 + $0x44] sm:$0xf]
    %v384 = vld [vmem:[%s15 + $0x48] sm:$0xf]
    %v385 = vld [vmem:[%s15 + $0x4c] sm:$0xf]
    %v386 = vld [vmem:[%s15 + $0x50] sm:$0xf]
    %v387 = vld [vmem:[%s15 + $0x54] sm:$0xf]
    %v388 = vld [vmem:[%s15 + $0x58] sm:$0xf]
    %v389 = vld [vmem:[%s15 + $0x5c] sm:$0xf]
    %v390 = vld [vmem:[%s15 + $0x60] sm:$0xf]
    %v391 = vld [vmem:[%s15 + $0x64] sm:$0xf]
    %v392 = vld [vmem:[%s15 + $0x68] sm:$0xf]
    %v393 = vld [vmem:[%s15 + $0x6c] sm:$0xf]
    %v394 = vld [vmem:[%s15 + $0x70] sm:$0xf]
    %v395 = vld [vmem:[%s15 + $0x74] sm:$0xf]
    %v396 = vld [vmem:[%s15 + $0x78] sm:$0xf]
    %v397 = vld [vmem:[%s15 + $0x7c] sm:$0xf]
    %v398 = vld [vmem:[%s15 + $0x80] sm:$0xf]
    %v399 = vld [vmem:[%s15 + $0x84] sm:$0xf]
    %v400 = vld [vmem:[%s15 + $0x88] sm:$0xf]
    %v401 = vld [vmem:[%s15 + $0x8c] sm:$0xf]
    %v402 = vld [vmem:[%s17] sm:$0xff]
    %v403 = vld [vmem:[%s17 + $0x8] sm:$0xf]
    %v404 = vld [vmem:[%s17 + $0xc] sm:$0xff]
    %v405 = vld [vmem:[%s17 + $0x14] sm:$0xf]
    %v406 = vld [vmem:[%s17 + $0x18] sm:$0xff]
    %v407 = vld [vmem:[%s17 + $0x20] sm:$0xf]
    %v408 = vld [vmem:[%s17 + $0x24] sm:$0xff]
    %v409 = vld [vmem:[%s17 + $0x2c] sm:$0xf]
    %v410 = vld [vmem:[%s19] sm:$0xf]
    %v411 = vld [vmem:[%s19 + $0x4] sm:$0xf]
    %v412 = vld [vmem:[%s19 + $0x8] sm:$0xf]
    %v413 = vld [vmem:[%s19 + $0xc] sm:$0xf]
    %v414 = vld [vmem:[%s19 + $0x10] sm:$0xf]
    %v415 = vld [vmem:[%s19 + $0x14] sm:$0xf]
    %v416 = vld [vmem:[%s19 + $0x18] sm:$0xf]
    %v417 = vld [vmem:[%s19 + $0x1c] sm:$0xf]
    %v418 = vld [vmem:[%s19 + $0x20] sm:$0xf]
    %v419 = vld [vmem:[%s21] sm:$0x1]
    %v420 = vld [vmem:[%s23] sm:$0xf]
    %v421 = vld [vmem:[%s25] sm:$0x1]
    %v422 = vld [vmem:[%s27] sm:$0xf]
    %v423 = vld [vmem:[%s27 + $0x4] sm:$0xf]
    %v424 = vld [vmem:[%s27 + $0x8] sm:$0xf]
    %v425 = vld [vmem:[%s27 + $0xc] sm:$0xf]
    %v426 = vld [vmem:[%s29] sm:$0xf]
    %v427 = vld [vmem:[%s29 + $0x4] sm:$0xf]
    %v428 = vld [vmem:[%s31] sm:$0x1]
    %v429 = vpack.c.bf16 %v310, %v309
    %v430 = vpack.c.bf16 %v312, %v311
    %v431 = vpack.c.bf16 %v314, %v313
    %v432 = vpack.c.bf16 %v316, %v315
    %v433 = vpack.c.bf16 %v318, %v317
    %v434 = vpack.c.bf16 %v320, %v319
    %v435 = vpack.c.bf16 %v322, %v321
    %v436 = vpack.c.bf16 %v324, %v323
    %v438 = vlaneseq
    %v439 = vshrl.u32 %v438, 7
    %v440 = vsub.s32 0, %v439
    %v441 = vrot.slane %v327, %v440
    %v445 = vunpack.c.l.b16 %v325
    %v446 = vunpack.c.l.b16 %v326
    %v447 = vpack.c.b16 %v446, %v445
    %vm449 = vcmask 130048
    %v451 = vsel %vm449, %v429, 0
    %v454 = vsel %vm449, %v430, 0
    %v457 = vsel %vm449, %v431, 0
    %v460 = vsel %vm449, %v432, 0
    %v463 = vsel %vm449, %v433, 0
    %v466 = vsel %vm449, %v434, 0
    %v469 = vsel %vm449, %v435, 0
    %v472 = vsel %vm449, %v436, 0
    %474 = vmatprep.subr.bf16.mxu0 0
    %475 = vmatpush1.bf16.msra.mxu0 %v447
    %476 = vmatprep.subr.bf16.mxu0 0
    %477 = vmatpush1.bf16.msra.mxu0 0
    %478 = vmatprep.subr.bf16.mxu0 0
    %479 = vmatpush1.bf16.msra.mxu0 0
    %480 = vmatprep.subr.bf16.mxu0 0
    %481 = vmatpush1.bf16.msra.mxu0 0
    %482 = vmatprep.subr.bf16.mxu0 0
    %483 = vmatpush1.bf16.msra.mxu0 0
    %484 = vmatprep.subr.bf16.mxu0 0
    %485 = vmatpush1.bf16.msra.mxu0 0
    %486 = vmatprep.subr.bf16.mxu0 0
    %487 = vmatpush1.bf16.msra.mxu0 0
    %488 = vmatprep.subr.bf16.mxu0 0
    %489 = vmatpush1.bf16.msra.mxu0 0
    %490 = vmatprep.subr.bf16.mxu0 0
    %491 = vmatpush1.bf16.msra.mxu0 0
    %492 = vmatprep.subr.bf16.mxu0 0
    %493 = vmatpush1.bf16.msra.mxu0 0
    %494 = vmatprep.subr.bf16.mxu0 0
    %495 = vmatpush1.bf16.msra.mxu0 0
    %496 = vmatprep.subr.bf16.mxu0 0
    %497 = vmatpush1.bf16.msra.mxu0 0
    %498 = vmatprep.subr.bf16.mxu0 0
    %499 = vmatpush1.bf16.msra.mxu0 0
    %500 = vmatprep.subr.bf16.mxu0 0
    %501 = vmatpush1.bf16.msra.mxu0 0
    %502 = vmatprep.subr.bf16.mxu0 0
    %503 = vmatpush1.bf16.msra.mxu0 0
    %504 = vmatprep.subr.bf16.mxu0 0
    %505 = vmatpush1.bf16.msra.mxu0 0
    %506 = vmatprep.mubr.bf16.mxu0 0
    %507 = vmatmul.mubr.bf16.gmra.mrb[0].mxu0 %v451
    %v508 = vpop.f32.mrb[0].mxu0
    %v509 = vadd.f32 %v441, %v508
    %v510 = vpop.f32.mrb[0].mxu0
    %v511 = vpop.f32.mrb[0].mxu0
    %v512 = vadd.f32 %v441, %v511
    %v513 = vpop.f32.mrb[0].mxu0
    %514 = vmatprep.mubr.bf16.mxu0 0
    %515 = vmatmul.mubr.bf16.gmra.mrb[0].mxu0 %v454
    %v516 = vpop.f32.mrb[0].mxu0
    %v517 = vadd.f32 %v441, %v516
    %v518 = vpop.f32.mrb[0].mxu0
    %v519 = vpop.f32.mrb[0].mxu0
    %v520 = vadd.f32 %v441, %v519
    %v521 = vpop.f32.mrb[0].mxu0
    %522 = vmatprep.mubr.bf16.mxu0 0
    %523 = vmatmul.mubr.bf16.gmra.mrb[0].mxu0 %v457
    %v524 = vpop.f32.mrb[0].mxu0
    %v525 = vadd.f32 %v441, %v524
    %v526 = vpop.f32.mrb[0].mxu0
    %v527 = vpop.f32.mrb[0].mxu0
    %v528 = vadd.f32 %v441, %v527
    %v529 = vpop.f32.mrb[0].mxu0
    %530 = vmatprep.mubr.bf16.mxu0 0
    %531 = vmatmul.mubr.bf16.gmra.mrb[0].mxu0 %v460
    %v532 = vpop.f32.mrb[0].mxu0
    %v533 = vadd.f32 %v441, %v532
    %v534 = vpop.f32.mrb[0].mxu0
    %v535 = vpop.f32.mrb[0].mxu0
    %v536 = vadd.f32 %v441, %v535
    %v537 = vpop.f32.mrb[0].mxu0
    %538 = vmatprep.mubr.bf16.mxu0 0
    %539 = vmatmul.mubr.bf16.gmra.mrb[0].mxu0 %v463
    %v540 = vpop.f32.mrb[0].mxu0
    %v541 = vadd.f32 %v441, %v540
    %v542 = vpop.f32.mrb[0].mxu0
    %v543 = vpop.f32.mrb[0].mxu0
    %v544 = vadd.f32 %v441, %v543
    %v545 = vpop.f32.mrb[0].mxu0
    %546 = vmatprep.mubr.bf16.mxu0 0
    %547 = vmatmul.mubr.bf16.gmra.mrb[0].mxu0 %v466
    %v548 = vpop.f32.mrb[0].mxu0
    %v549 = vadd.f32 %v441, %v548
    %v550 = vpop.f32.mrb[0].mxu0
    %v551 = vpop.f32.mrb[0].mxu0
    %v552 = vadd.f32 %v441, %v551
    %v553 = vpop.f32.mrb[0].mxu0
    %554 = vmatprep.mubr.bf16.mxu0 0
    %555 = vmatmul.mubr.bf16.gmra.mrb[0].mxu0 %v469
    %v556 = vpop.f32.mrb[0].mxu0
    %v557 = vadd.f32 %v441, %v556
    %v558 = vpop.f32.mrb[0].mxu0
    %v559 = vpop.f32.mrb[0].mxu0
    %v560 = vadd.f32 %v441, %v559
    %v561 = vpop.f32.mrb[0].mxu0
    %562 = vmatprep.mubr.bf16.mxu0 0
    %563 = vmatmul.mubr.bf16.gmra.mrb[0].mxu0 %v472
    %v564 = vpop.f32.mrb[0].mxu0
    %v565 = vadd.f32 %v441, %v564
    %v566 = vpop.f32.mrb[0].mxu0
    %v567 = vpop.f32.mrb[0].mxu0
    %v568 = vadd.f32 %v441, %v567
    %v569 = vpop.f32.mrb[0].mxu0
    %570 = vdwg.mxu0
    %v571 = vmax.f32 %v509, 0.0
    %v572 = vmax.f32 %v512, 0.0
    %v573 = vmax.f32 %v517, 0.0
    %v574 = vmax.f32 %v520, 0.0
    %v575 = vmax.f32 %v525, 0.0
    %v576 = vmax.f32 %v528, 0.0
    %v577 = vmax.f32 %v533, 0.0
    %v578 = vmax.f32 %v536, 0.0
    %v579 = vmax.f32 %v541, 0.0
    %v580 = vmax.f32 %v544, 0.0
    %v581 = vmax.f32 %v549, 0.0
    %v582 = vmax.f32 %v552, 0.0
    %v583 = vmax.f32 %v557, 0.0
    %v584 = vmax.f32 %v560, 0.0
    %v585 = vmax.f32 %v565, 0.0
    %v586 = vmax.f32 %v568, 0.0
    %v587 = vpack.c.bf16 %v572, %v571
    %v588 = vpack.c.bf16 %v574, %v573
    %v589 = vpack.c.bf16 %v576, %v575
    %v590 = vpack.c.bf16 %v578, %v577
    %v591 = vpack.c.bf16 %v580, %v579
    %v592 = vpack.c.bf16 %v582, %v581
    %v593 = vpack.c.bf16 %v584, %v583
    %v594 = vpack.c.bf16 %v586, %v585
    %v631 = vunpack.c.l.b16 %v328
    %v632 = vunpack.c.l.b16 %v329
    %v633 = vunpack.c.l.b16 %v330
    %v634 = vunpack.c.l.b16 %v331
    %v635 = vunpack.c.l.b16 %v332
    %v636 = vunpack.c.l.b16 %v333
    %v637 = vunpack.c.l.b16 %v334
    %v638 = vunpack.c.l.b16 %v335
    %v639 = vunpack.c.l.b16 %v336
    %v640 = vunpack.c.l.b16 %v337
    %v641 = vunpack.c.l.b16 %v338
    %v642 = vunpack.c.l.b16 %v339
    %v643 = vunpack.c.l.b16 %v340
    %v644 = vunpack.c.l.b16 %v341
    %v645 = vunpack.c.l.b16 %v342
    %v646 = vunpack.c.l.b16 %v343
    %v647 = vunpack.c.l.b16 %v344
    %v648 = vunpack.c.l.b16 %v345
    %v649 = vunpack.c.l.b16 %v346
    %v650 = vunpack.c.l.b16 %v347
    %v651 = vunpack.c.l.b16 %v348
    %v652 = vunpack.c.l.b16 %v349
    %v653 = vunpack.c.l.b16 %v350
    %v654 = vunpack.c.l.b16 %v351
    %v655 = vunpack.c.l.b16 %v352
    %v656 = vunpack.c.l.b16 %v353
    %v657 = vunpack.c.l.b16 %v354
    %v658 = vunpack.c.l.b16 %v355
    %v659 = vunpack.c.l.b16 %v356
    %v660 = vunpack.c.l.b16 %v357
    %v661 = vunpack.c.l.b16 %v358
    %v662 = vunpack.c.l.b16 %v359
    %v663 = vunpack.c.l.b16 %v360
    %v664 = vunpack.c.l.b16 %v361
    %v665 = vunpack.c.l.b16 %v362
    %v666 = vunpack.c.l.b16 %v363
    %v667 = vpack.c.b16 %v632, %v631
    %v668 = vpack.c.b16 %v634, %v633
    %v669 = vpack.c.b16 %v636, %v635
    %v670 = vpack.c.b16 %v638, %v637
    %v671 = vpack.c.b16 %v640, %v639
    %v672 = vpack.c.b16 %v642, %v641
    %v673 = vpack.c.b16 %v644, %v643
    %v674 = vpack.c.b16 %v646, %v645
    %v675 = vpack.c.b16 %v648, %v647
    %v676 = vpack.c.b16 %v650, %v649
    %v677 = vpack.c.b16 %v652, %v651
    %v678 = vpack.c.b16 %v654, %v653
    %v679 = vpack.c.b16 %v656, %v655
    %v680 = vpack.c.b16 %v658, %v657
    %v681 = vpack.c.b16 %v660, %v659
    %v682 = vpack.c.b16 %v662, %v661
    %v683 = vpack.c.b16 %v664, %v663
    %v684 = vpack.c.b16 %v666, %v665
    %703 = vmatprep.subr.bf16.mxu0 0
    %704 = vmatpush1.bf16.msra.mxu0 %v587
    %705 = vmatprep.subr.bf16.mxu0 0
    %706 = vmatpush1.bf16.msra.mxu0 %v588
    %707 = vmatprep.subr.bf16.mxu0 0
    %708 = vmatpush1.bf16.msra.mxu0 %v589
    %709 = vmatprep.subr.bf16.mxu0 0
    %710 = vmatpush1.bf16.msra.mxu0 %v590
    %711 = vmatprep.subr.bf16.mxu0 0
    %712 = vmatpush1.bf16.msra.mxu0 %v591
    %713 = vmatprep.subr.bf16.mxu0 0
    %714 = vmatpush1.bf16.msra.mxu0 %v592
    %715 = vmatprep.subr.bf16.mxu0 0
    %716 = vmatpush1.bf16.msra.mxu0 %v593
    %717 = vmatprep.subr.bf16.mxu0 0
    %718 = vmatpush1.bf16.msra.mxu0 %v594
    %719 = vmatprep.subr.bf16.mxu0 0
    %720 = vmatpush1.bf16.msra.mxu0 0
    %721 = vmatprep.subr.bf16.mxu0 0
    %722 = vmatpush1.bf16.msra.mxu0 0
    %723 = vmatprep.subr.bf16.mxu0 0
    %724 = vmatpush1.bf16.msra.mxu0 0
    %725 = vmatprep.subr.bf16.mxu0 0
    %726 = vmatpush1.bf16.msra.mxu0 0
    %727 = vmatprep.subr.bf16.mxu0 0
    %728 = vmatpush1.bf16.msra.mxu0 0
    %729 = vmatprep.subr.bf16.mxu0 0
    %730 = vmatpush1.bf16.msra.mxu0 0
    %731 = vmatprep.subr.bf16.mxu0 0
    %732 = vmatpush1.bf16.msra.mxu0 0
    %733 = vmatprep.subr.bf16.mxu0 0
    %734 = vmatpush1.bf16.msra.mxu0 0
    %735 = vmatprep.mubr.bf16.mxu0 0
    %736 = vmatmul.mubr.bf16.gmra.mrb[0].mxu0 %v667
    %v737 = vpop.f32.mrb[0].mxu0
    %v738 = vadd.f32 0.0, %v737
    %v739 = vpop.f32.mrb[0].mxu0
    %v740 = vpop.f32.mrb[0].mxu0
    %v741 = vadd.f32 0.0, %v740
    %v742 = vpop.f32.mrb[0].mxu0
    %743 = vmatprep.mubr.bf16.mxu0 0
    %744 = vmatmul.mubr.bf16.gmra.mrb[0].mxu0 %v668
    %v745 = vpop.f32.mrb[0].mxu0
    %v746 = vadd.f32 0.0, %v745
    %v747 = vpop.f32.mrb[0].mxu0
    %v748 = vpop.f32.mrb[0].mxu0
    %v749 = vadd.f32 0.0, %v748
    %v750 = vpop.f32.mrb[0].mxu0
    %751 = vmatprep.mubr.bf16.mxu0 0
    %752 = vmatmul.mubr.bf16.gmra.mrb[0].mxu0 %v669
    %v753 = vpop.f32.mrb[0].mxu0
    %v754 = vadd.f32 0.0, %v753
    %v755 = vpop.f32.mrb[0].mxu0
    %v756 = vpop.f32.mrb[0].mxu0
    %v757 = vadd.f32 0.0, %v756
    %v758 = vpop.f32.mrb[0].mxu0
    %759 = vmatprep.mubr.bf16.mxu0 0
    %760 = vmatmul.mubr.bf16.gmra.mrb[0].mxu0 %v670
    %v761 = vpop.f32.mrb[0].mxu0
    %v762 = vadd.f32 0.0, %v761
    %v763 = vpop.f32.mrb[0].mxu0
    %v764 = vpop.f32.mrb[0].mxu0
    %v765 = vadd.f32 0.0, %v764
    %v766 = vpop.f32.mrb[0].mxu0
    %767 = vmatprep.mubr.bf16.mxu0 0
    %768 = vmatmul.mubr.bf16.gmra.mrb[0].mxu0 %v671
    %v769 = vpop.f32.mrb[0].mxu0
    %v770 = vadd.f32 0.0, %v769
    %v771 = vpop.f32.mrb[0].mxu0
    %v772 = vpop.f32.mrb[0].mxu0
    %v773 = vadd.f32 0.0, %v772
    %v774 = vpop.f32.mrb[0].mxu0
    %775 = vmatprep.mubr.bf16.mxu0 0
    %776 = vmatmul.mubr.bf16.gmra.mrb[0].mxu0 %v672
    %v777 = vpop.f32.mrb[0].mxu0
    %v778 = vadd.f32 0.0, %v777
    %v779 = vpop.f32.mrb[0].mxu0
    %v780 = vpop.f32.mrb[0].mxu0
    %v781 = vadd.f32 0.0, %v780
    %v782 = vpop.f32.mrb[0].mxu0
    %783 = vmatprep.mubr.bf16.mxu0 0
    %784 = vmatmul.mubr.bf16.gmra.mrb[0].mxu0 %v673
    %v785 = vpop.f32.mrb[0].mxu0
    %v786 = vadd.f32 0.0, %v785
    %v787 = vpop.f32.mrb[0].mxu0
    %v788 = vpop.f32.mrb[0].mxu0
    %v789 = vadd.f32 0.0, %v788
    %v790 = vpop.f32.mrb[0].mxu0
    %791 = vmatprep.mubr.bf16.mxu0 0
    %792 = vmatmul.mubr.bf16.gmra.mrb[0].mxu0 %v674
    %v793 = vpop.f32.mrb[0].mxu0
    %v794 = vadd.f32 0.0, %v793
    %v795 = vpop.f32.mrb[0].mxu0
    %v796 = vpop.f32.mrb[0].mxu0
    %v797 = vadd.f32 0.0, %v796
    %v798 = vpop.f32.mrb[0].mxu0
    %799 = vmatprep.mubr.bf16.mxu0 0
    %800 = vmatmul.mubr.bf16.gmra.mrb[0].mxu0 %v675
    %v801 = vpop.f32.mrb[0].mxu0
    %v802 = vadd.f32 0.0, %v801
    %v803 = vpop.f32.mrb[0].mxu0
    %v804 = vpop.f32.mrb[0].mxu0
    %v805 = vadd.f32 0.0, %v804
    %v806 = vpop.f32.mrb[0].mxu0
    %807 = vmatprep.mubr.bf16.mxu0 0
    %808 = vmatmul.mubr.bf16.gmra.mrb[0].mxu0 %v676
    %v809 = vpop.f32.mrb[0].mxu0
    %v810 = vadd.f32 0.0, %v809
    %v811 = vpop.f32.mrb[0].mxu0
    %v812 = vpop.f32.mrb[0].mxu0
    %v813 = vadd.f32 0.0, %v812
    %v814 = vpop.f32.mrb[0].mxu0
    %815 = vmatprep.mubr.bf16.mxu0 0
    %816 = vmatmul.mubr.bf16.gmra.mrb[0].mxu0 %v677
    %v817 = vpop.f32.mrb[0].mxu0
    %v818 = vadd.f32 0.0, %v817
    %v819 = vpop.f32.mrb[0].mxu0
    %v820 = vpop.f32.mrb[0].mxu0
    %v821 = vadd.f32 0.0, %v820
    %v822 = vpop.f32.mrb[0].mxu0
    %823 = vmatprep.mubr.bf16.mxu0 0
    %824 = vmatmul.mubr.bf16.gmra.mrb[0].mxu0 %v678
    %v825 = vpop.f32.mrb[0].mxu0
    %v826 = vadd.f32 0.0, %v825
    %v827 = vpop.f32.mrb[0].mxu0
    %v828 = vpop.f32.mrb[0].mxu0
    %v829 = vadd.f32 0.0, %v828
    %v830 = vpop.f32.mrb[0].mxu0
    %831 = vmatprep.mubr.bf16.mxu0 0
    %832 = vmatmul.mubr.bf16.gmra.mrb[0].mxu0 %v679
    %v833 = vpop.f32.mrb[0].mxu0
    %v834 = vadd.f32 0.0, %v833
    %v835 = vpop.f32.mrb[0].mxu0
    %v836 = vpop.f32.mrb[0].mxu0
    %v837 = vadd.f32 0.0, %v836
    %v838 = vpop.f32.mrb[0].mxu0
    %839 = vmatprep.mubr.bf16.mxu0 0
    %840 = vmatmul.mubr.bf16.gmra.mrb[0].mxu0 %v680
    %v841 = vpop.f32.mrb[0].mxu0
    %v842 = vadd.f32 0.0, %v841
    %v843 = vpop.f32.mrb[0].mxu0
    %v844 = vpop.f32.mrb[0].mxu0
    %v845 = vadd.f32 0.0, %v844
    %v846 = vpop.f32.mrb[0].mxu0
    %847 = vmatprep.mubr.bf16.mxu0 0
    %848 = vmatmul.mubr.bf16.gmra.mrb[0].mxu0 %v681
    %v849 = vpop.f32.mrb[0].mxu0
    %v850 = vadd.f32 0.0, %v849
    %v851 = vpop.f32.mrb[0].mxu0
    %v852 = vpop.f32.mrb[0].mxu0
    %v853 = vadd.f32 0.0, %v852
    %v854 = vpop.f32.mrb[0].mxu0
    %855 = vmatprep.mubr.bf16.mxu0 0
    %856 = vmatmul.mubr.bf16.gmra.mrb[0].mxu0 %v682
    %v857 = vpop.f32.mrb[0].mxu0
    %v858 = vadd.f32 0.0, %v857
    %v859 = vpop.f32.mrb[0].mxu0
    %v860 = vpop.f32.mrb[0].mxu0
    %v861 = vadd.f32 0.0, %v860
    %v862 = vpop.f32.mrb[0].mxu0
    %863 = vmatprep.mubr.bf16.mxu0 0
    %864 = vmatmul.mubr.bf16.gmra.mrb[0].mxu0 %v683
    %v865 = vpop.f32.mrb[0].mxu0
    %v866 = vadd.f32 0.0, %v865
    %v867 = vpop.f32.mrb[0].mxu0
    %v868 = vpop.f32.mrb[0].mxu0
    %v869 = vadd.f32 0.0, %v868
    %v870 = vpop.f32.mrb[0].mxu0
    %871 = vmatprep.mubr.bf16.mxu0 0
    %872 = vmatmul.mubr.bf16.gmra.mrb[0].mxu0 %v684
    %v873 = vpop.f32.mrb[0].mxu0
    %v874 = vadd.f32 0.0, %v873
    %v875 = vpop.f32.mrb[0].mxu0
    %v876 = vpop.f32.mrb[0].mxu0
    %v877 = vadd.f32 0.0, %v876
    %v878 = vpop.f32.mrb[0].mxu0
    %879 = vdwg.mxu0
    %v880 = vpack.c.bf16 %v741, %v738
    %v881 = vpack.c.bf16 %v749, %v746
    %v882 = vpack.c.bf16 %v757, %v754
    %v883 = vpack.c.bf16 %v765, %v762
    %v884 = vpack.c.bf16 %v773, %v770
    %v885 = vpack.c.bf16 %v781, %v778
    %v886 = vpack.c.bf16 %v789, %v786
    %v887 = vpack.c.bf16 %v797, %v794
    %v888 = vpack.c.bf16 %v805, %v802
    %v889 = vpack.c.bf16 %v813, %v810
    %v890 = vpack.c.bf16 %v821, %v818
    %v891 = vpack.c.bf16 %v829, %v826
    %v892 = vpack.c.bf16 %v837, %v834
    %v893 = vpack.c.bf16 %v845, %v842
    %v894 = vpack.c.bf16 %v853, %v850
    %v895 = vpack.c.bf16 %v861, %v858
    %v896 = vpack.c.bf16 %v869, %v866
    %v897 = vpack.c.bf16 %v877, %v874
    %v900 = vunpack.c.l.b16 %v364
    %v901 = vunpack.c.l.b16 %v365
    %v902 = vpack.c.b16 %v901, %v900
    %v905 = vsel %vm449, %v880, 0
    %v908 = vsel %vm449, %v881, 0
    %v911 = vsel %vm449, %v882, 0
    %v914 = vsel %vm449, %v883, 0
    %v917 = vsel %vm449, %v884, 0
    %v920 = vsel %vm449, %v885, 0
    %v923 = vsel %vm449, %v886, 0
    %v926 = vsel %vm449, %v887, 0
    %v929 = vsel %vm449, %v888, 0
    %v932 = vsel %vm449, %v889, 0
    %v935 = vsel %vm449, %v890, 0
    %v938 = vsel %vm449, %v891, 0
    %v941 = vsel %vm449, %v892, 0
    %v944 = vsel %vm449, %v893, 0
    %v947 = vsel %vm449, %v894, 0
    %v950 = vsel %vm449, %v895, 0
    %v953 = vsel %vm449, %v896, 0
    %v956 = vsel %vm449, %v897, 0
    %958 = vmatprep.subr.bf16.mxu0 0
    %959 = vmatpush1.bf16.msra.mxu0 %v902
    %960 = vmatprep.subr.bf16.mxu0 0
    %961 = vmatpush1.bf16.msra.mxu0 0
    %962 = vmatprep.subr.bf16.mxu0 0
    %963 = vmatpush1.bf16.msra.mxu0 0
    %964 = vmatprep.subr.bf16.mxu0 0
    %965 = vmatpush1.bf16.msra.mxu0 0
    %966 = vmatprep.subr.bf16.mxu0 0
    %967 = vmatpush1.bf16.msra.mxu0 0
    %968 = vmatprep.subr.bf16.mxu0 0
    %969 = vmatpush1.bf16.msra.mxu0 0
    %970 = vmatprep.subr.bf16.mxu0 0
    %971 = vmatpush1.bf16.msra.mxu0 0
    %972 = vmatprep.subr.bf16.mxu0 0
    %973 = vmatpush1.bf16.msra.mxu0 0
    %974 = vmatprep.subr.bf16.mxu0 0
    %975 = vmatpush1.bf16.msra.mxu0 0
    %976 = vmatprep.subr.bf16.mxu0 0
    %977 = vmatpush1.bf16.msra.mxu0 0
    %978 = vmatprep.subr.bf16.mxu0 0
    %979 = vmatpush1.bf16.msra.mxu0 0
    %980 = vmatprep.subr.bf16.mxu0 0
    %981 = vmatpush1.bf16.msra.mxu0 0
    %982 = vmatprep.subr.bf16.mxu0 0
    %983 = vmatpush1.bf16.msra.mxu0 0
    %984 = vmatprep.subr.bf16.mxu0 0
    %985 = vmatpush1.bf16.msra.mxu0 0
    %986 = vmatprep.subr.bf16.mxu0 0
    %987 = vmatpush1.bf16.msra.mxu0 0
    %988 = vmatprep.subr.bf16.mxu0 0
    %989 = vmatpush1.bf16.msra.mxu0 0
    %990 = vmatprep.mubr.bf16.mxu0 0
    %991 = vmatmul.mubr.bf16.gmra.mrb[0].mxu0 %v905
    %v992 = vpop.f32.mrb[0].mxu0
    %v993 = vadd.f32 0.0, %v992
    %v994 = vpop.f32.mrb[0].mxu0
    %v995 = vpop.f32.mrb[0].mxu0
    %v996 = vadd.f32 0.0, %v995
    %v997 = vpop.f32.mrb[0].mxu0
    %998 = vmatprep.mubr.bf16.mxu0 0
    %999 = vmatmul.mubr.bf16.gmra.mrb[0].mxu0 %v908
    %v1000 = vpop.f32.mrb[0].mxu0
    %v1001 = vadd.f32 0.0, %v1000
    %v1002 = vpop.f32.mrb[0].mxu0
    %v1003 = vpop.f32.mrb[0].mxu0
    %v1004 = vadd.f32 0.0, %v1003
    %v1005 = vpop.f32.mrb[0].mxu0
    %1006 = vmatprep.mubr.bf16.mxu0 0
    %1007 = vmatmul.mubr.bf16.gmra.mrb[0].mxu0 %v911
    %v1008 = vpop.f32.mrb[0].mxu0
    %v1009 = vadd.f32 0.0, %v1008
    %v1010 = vpop.f32.mrb[0].mxu0
    %v1011 = vpop.f32.mrb[0].mxu0
    %v1012 = vadd.f32 0.0, %v1011
    %v1013 = vpop.f32.mrb[0].mxu0
    %1014 = vmatprep.mubr.bf16.mxu0 0
    %1015 = vmatmul.mubr.bf16.gmra.mrb[0].mxu0 %v914
    %v1016 = vpop.f32.mrb[0].mxu0
    %v1017 = vadd.f32 0.0, %v1016
    %v1018 = vpop.f32.mrb[0].mxu0
    %v1019 = vpop.f32.mrb[0].mxu0
    %v1020 = vadd.f32 0.0, %v1019
    %v1021 = vpop.f32.mrb[0].mxu0
    %1022 = vmatprep.mubr.bf16.mxu0 0
    %1023 = vmatmul.mubr.bf16.gmra.mrb[0].mxu0 %v917
    %v1024 = vpop.f32.mrb[0].mxu0
    %v1025 = vadd.f32 0.0, %v1024
    %v1026 = vpop.f32.mrb[0].mxu0
    %v1027 = vpop.f32.mrb[0].mxu0
    %v1028 = vadd.f32 0.0, %v1027
    %v1029 = vpop.f32.mrb[0].mxu0
    %1030 = vmatprep.mubr.bf16.mxu0 0
    %1031 = vmatmul.mubr.bf16.gmra.mrb[0].mxu0 %v920
    %v1032 = vpop.f32.mrb[0].mxu0
    %v1033 = vadd.f32 0.0, %v1032
    %v1034 = vpop.f32.mrb[0].mxu0
    %v1035 = vpop.f32.mrb[0].mxu0
    %v1036 = vadd.f32 0.0, %v1035
    %v1037 = vpop.f32.mrb[0].mxu0
    %1038 = vmatprep.mubr.bf16.mxu0 0
    %1039 = vmatmul.mubr.bf16.gmra.mrb[0].mxu0 %v923
    %v1040 = vpop.f32.mrb[0].mxu0
    %v1041 = vadd.f32 0.0, %v1040
    %v1042 = vpop.f32.mrb[0].mxu0
    %v1043 = vpop.f32.mrb[0].mxu0
    %v1044 = vadd.f32 0.0, %v1043
    %v1045 = vpop.f32.mrb[0].mxu0
    %1046 = vmatprep.mubr.bf16.mxu0 0
    %1047 = vmatmul.mubr.bf16.gmra.mrb[0].mxu0 %v926
    %v1048 = vpop.f32.mrb[0].mxu0
    %v1049 = vadd.f32 0.0, %v1048
    %v1050 = vpop.f32.mrb[0].mxu0
    %v1051 = vpop.f32.mrb[0].mxu0
    %v1052 = vadd.f32 0.0, %v1051
    %v1053 = vpop.f32.mrb[0].mxu0
    %1054 = vmatprep.mubr.bf16.mxu0 0
    %1055 = vmatmul.mubr.bf16.gmra.mrb[0].mxu0 %v929
    %v1056 = vpop.f32.mrb[0].mxu0
    %v1057 = vadd.f32 0.0, %v1056
    %v1058 = vpop.f32.mrb[0].mxu0
    %v1059 = vpop.f32.mrb[0].mxu0
    %v1060 = vadd.f32 0.0, %v1059
    %v1061 = vpop.f32.mrb[0].mxu0
    %1062 = vmatprep.mubr.bf16.mxu0 0
    %1063 = vmatmul.mubr.bf16.gmra.mrb[0].mxu0 %v932
    %v1064 = vpop.f32.mrb[0].mxu0
    %v1065 = vadd.f32 0.0, %v1064
    %v1066 = vpop.f32.mrb[0].mxu0
    %v1067 = vpop.f32.mrb[0].mxu0
    %v1068 = vadd.f32 0.0, %v1067
    %v1069 = vpop.f32.mrb[0].mxu0
    %1070 = vmatprep.mubr.bf16.mxu0 0
    %1071 = vmatmul.mubr.bf16.gmra.mrb[0].mxu0 %v935
    %v1072 = vpop.f32.mrb[0].mxu0
    %v1073 = vadd.f32 0.0, %v1072
    %v1074 = vpop.f32.mrb[0].mxu0
    %v1075 = vpop.f32.mrb[0].mxu0
    %v1076 = vadd.f32 0.0, %v1075
    %v1077 = vpop.f32.mrb[0].mxu0
    %1078 = vmatprep.mubr.bf16.mxu0 0
    %1079 = vmatmul.mubr.bf16.gmra.mrb[0].mxu0 %v938
    %v1080 = vpop.f32.mrb[0].mxu0
    %v1081 = vadd.f32 0.0, %v1080
    %v1082 = vpop.f32.mrb[0].mxu0
    %v1083 = vpop.f32.mrb[0].mxu0
    %v1084 = vadd.f32 0.0, %v1083
    %v1085 = vpop.f32.mrb[0].mxu0
    %1086 = vmatprep.mubr.bf16.mxu0 0
    %1087 = vmatmul.mubr.bf16.gmra.mrb[0].mxu0 %v941
    %v1088 = vpop.f32.mrb[0].mxu0
    %v1089 = vadd.f32 0.0, %v1088
    %v1090 = vpop.f32.mrb[0].mxu0
    %v1091 = vpop.f32.mrb[0].mxu0
    %v1092 = vadd.f32 0.0, %v1091
    %v1093 = vpop.f32.mrb[0].mxu0
    %1094 = vmatprep.mubr.bf16.mxu0 0
    %1095 = vmatmul.mubr.bf16.gmra.mrb[0].mxu0 %v944
    %v1096 = vpop.f32.mrb[0].mxu0
    %v1097 = vadd.f32 0.0, %v1096
    %v1098 = vpop.f32.mrb[0].mxu0
    %v1099 = vpop.f32.mrb[0].mxu0
    %v1100 = vadd.f32 0.0, %v1099
    %v1101 = vpop.f32.mrb[0].mxu0
    %1102 = vmatprep.mubr.bf16.mxu0 0
    %1103 = vmatmul.mubr.bf16.gmra.mrb[0].mxu0 %v947
    %v1104 = vpop.f32.mrb[0].mxu0
    %v1105 = vadd.f32 0.0, %v1104
    %v1106 = vpop.f32.mrb[0].mxu0
    %v1107 = vpop.f32.mrb[0].mxu0
    %v1108 = vadd.f32 0.0, %v1107
    %v1109 = vpop.f32.mrb[0].mxu0
    %1110 = vmatprep.mubr.bf16.mxu0 0
    %1111 = vmatmul.mubr.bf16.gmra.mrb[0].mxu0 %v950
    %v1112 = vpop.f32.mrb[0].mxu0
    %v1113 = vadd.f32 0.0, %v1112
    %v1114 = vpop.f32.mrb[0].mxu0
    %v1115 = vpop.f32.mrb[0].mxu0
    %v1116 = vadd.f32 0.0, %v1115
    %v1117 = vpop.f32.mrb[0].mxu0
    %1118 = vmatprep.mubr.bf16.mxu0 0
    %1119 = vmatmul.mubr.bf16.gmra.mrb[0].mxu0 %v953
    %v1120 = vpop.f32.mrb[0].mxu0
    %v1121 = vadd.f32 0.0, %v1120
    %v1122 = vpop.f32.mrb[0].mxu0
    %v1123 = vpop.f32.mrb[0].mxu0
    %v1124 = vadd.f32 0.0, %v1123
    %v1125 = vpop.f32.mrb[0].mxu0
    %1126 = vmatprep.mubr.bf16.mxu0 0
    %1127 = vmatmul.mubr.bf16.gmra.mrb[0].mxu0 %v956
    %v1128 = vpop.f32.mrb[0].mxu0
    %v1129 = vadd.f32 0.0, %v1128
    %v1130 = vpop.f32.mrb[0].mxu0
    %v1131 = vpop.f32.mrb[0].mxu0
    %v1132 = vadd.f32 0.0, %v1131
    %v1133 = vpop.f32.mrb[0].mxu0
    %1134 = vdwg.mxu0
    %v1135 = vunpack.c.l.bf16 %v366
    %v1136 = vunpack.c.l.bf16 %v367
    %v1137 = vunpack.c.l.bf16 %v368
    %v1138 = vunpack.c.l.bf16 %v369
    %v1139 = vunpack.c.l.bf16 %v370
    %v1140 = vunpack.c.l.bf16 %v371
    %v1141 = vunpack.c.l.bf16 %v372
    %v1142 = vunpack.c.l.bf16 %v373
    %v1143 = vunpack.c.l.bf16 %v374
    %v1144 = vunpack.c.l.bf16 %v375
    %v1145 = vunpack.c.l.bf16 %v376
    %v1146 = vunpack.c.l.bf16 %v377
    %v1147 = vunpack.c.l.bf16 %v378
    %v1148 = vunpack.c.l.bf16 %v379
    %v1149 = vunpack.c.l.bf16 %v380
    %v1150 = vunpack.c.l.bf16 %v381
    %v1151 = vunpack.c.l.bf16 %v382
    %v1152 = vunpack.c.l.bf16 %v383
    %v1153 = vunpack.c.l.bf16 %v384
    %v1154 = vunpack.c.l.bf16 %v385
    %v1155 = vunpack.c.l.bf16 %v386
    %v1156 = vunpack.c.l.bf16 %v387
    %v1157 = vunpack.c.l.bf16 %v388
    %v1158 = vunpack.c.l.bf16 %v389
    %v1159 = vunpack.c.l.bf16 %v390
    %v1160 = vunpack.c.l.bf16 %v391
    %v1161 = vunpack.c.l.bf16 %v392
    %v1162 = vunpack.c.l.bf16 %v393
    %v1163 = vunpack.c.l.bf16 %v394
    %v1164 = vunpack.c.l.bf16 %v395
    %v1165 = vunpack.c.l.bf16 %v396
    %v1166 = vunpack.c.l.bf16 %v397
    %v1167 = vunpack.c.l.bf16 %v398
    %v1168 = vunpack.c.l.bf16 %v399
    %v1169 = vunpack.c.l.bf16 %v400
    %v1170 = vunpack.c.l.bf16 %v401
    %v1171 = vmul.f32 %v993, %v1135
    %v1172 = vmul.f32 %v996, %v1136
    %v1173 = vmul.f32 %v1001, %v1137
    %v1174 = vmul.f32 %v1004, %v1138
    %v1175 = vmul.f32 %v1009, %v1139
    %v1176 = vmul.f32 %v1012, %v1140
    %v1177 = vmul.f32 %v1017, %v1141
    %v1178 = vmul.f32 %v1020, %v1142
    %v1179 = vmul.f32 %v1025, %v1143
    %v1180 = vmul.f32 %v1028, %v1144
    %v1181 = vmul.f32 %v1033, %v1145
    %v1182 = vmul.f32 %v1036, %v1146
    %v1183 = vmul.f32 %v1041, %v1147
    %v1184 = vmul.f32 %v1044, %v1148
    %v1185 = vmul.f32 %v1049, %v1149
    %v1186 = vmul.f32 %v1052, %v1150
    %v1187 = vmul.f32 %v1057, %v1151
    %v1188 = vmul.f32 %v1060, %v1152
    %v1189 = vmul.f32 %v1065, %v1153
    %v1190 = vmul.f32 %v1068, %v1154
    %v1191 = vmul.f32 %v1073, %v1155
    %v1192 = vmul.f32 %v1076, %v1156
    %v1193 = vmul.f32 %v1081, %v1157
    %v1194 = vmul.f32 %v1084, %v1158
    %v1195 = vmul.f32 %v1089, %v1159
    %v1196 = vmul.f32 %v1092, %v1160
    %v1197 = vmul.f32 %v1097, %v1161
    %v1198 = vmul.f32 %v1100, %v1162
    %v1199 = vmul.f32 %v1105, %v1163
    %v1200 = vmul.f32 %v1108, %v1164
    %v1201 = vmul.f32 %v1113, %v1165
    %v1202 = vmul.f32 %v1116, %v1166
    %v1203 = vmul.f32 %v1121, %v1167
    %v1204 = vmul.f32 %v1124, %v1168
    %v1205 = vmul.f32 %v1129, %v1169
    %v1206 = vmul.f32 %v1132, %v1170
    %v1207 = vpack.c.bf16 %v1172, %v1171
    %v1208 = vpack.c.bf16 %v1174, %v1173
    %v1209 = vpack.c.bf16 %v1176, %v1175
    %v1210 = vpack.c.bf16 %v1178, %v1177
    %v1211 = vpack.c.bf16 %v1180, %v1179
    %v1212 = vpack.c.bf16 %v1182, %v1181
    %v1213 = vpack.c.bf16 %v1184, %v1183
    %v1214 = vpack.c.bf16 %v1186, %v1185
    %v1215 = vpack.c.bf16 %v1188, %v1187
    %v1216 = vpack.c.bf16 %v1190, %v1189
    %v1217 = vpack.c.bf16 %v1192, %v1191
    %v1218 = vpack.c.bf16 %v1194, %v1193
    %v1219 = vpack.c.bf16 %v1196, %v1195
    %v1220 = vpack.c.bf16 %v1198, %v1197
    %v1221 = vpack.c.bf16 %v1200, %v1199
    %v1222 = vpack.c.bf16 %v1202, %v1201
    %v1223 = vpack.c.bf16 %v1204, %v1203
    %v1224 = vpack.c.bf16 %v1206, %v1205
    %v1233 = vunpack.c.l.b16 %v402
    %v1234 = vunpack.c.h.b16 %v402
    %v1235 = vunpack.c.l.b16 %v403
    %v1236 = vunpack.c.l.b16 %v404
    %v1237 = vunpack.c.h.b16 %v404
    %v1238 = vunpack.c.l.b16 %v405
    %v1239 = vunpack.c.l.b16 %v406
    %v1240 = vunpack.c.h.b16 %v406
    %v1241 = vunpack.c.l.b16 %v407
    %v1242 = vunpack.c.l.b16 %v408
    %v1243 = vunpack.c.h.b16 %v408
    %v1244 = vunpack.c.l.b16 %v409
    %v1245 = vpack.c.b16 %v1236, %v1233
    %v1246 = vpack.c.b16 %v1237, %v1234
    %v1247 = vpack.c.b16 %v1238, %v1235
    %v1248 = vpack.c.b16 %v1242, %v1239
    %v1249 = vpack.c.b16 %v1243, %v1240
    %v1250 = vpack.c.b16 %v1244, %v1241
    %vm1255 = vcmask 261120
    %v1257 = vsel %vm1255, %v1247, 0
    %v1260 = vsel %vm1255, %v1250, 0
    %1262 = vmatprep.subr.bf16.mxu0 0
    %1263 = vmatpush1.bf16.msra.mxu0 %v1207
    %1264 = vmatprep.subr.bf16.mxu0 0
    %1265 = vmatpush1.bf16.msra.mxu0 %v1208
    %1266 = vmatprep.subr.bf16.mxu0 0
    %1267 = vmatpush1.bf16.msra.mxu0 %v1209
    %1268 = vmatprep.subr.bf16.mxu0 0
    %1269 = vmatpush1.bf16.msra.mxu0 %v1210
    %1270 = vmatprep.subr.bf16.mxu0 0
    %1271 = vmatpush1.bf16.msra.mxu0 %v1211
    %1272 = vmatprep.subr.bf16.mxu0 0
    %1273 = vmatpush1.bf16.msra.mxu0 %v1212
    %1274 = vmatprep.subr.bf16.mxu0 0
    %1275 = vmatpush1.bf16.msra.mxu0 %v1213
    %1276 = vmatprep.subr.bf16.mxu0 0
    %1277 = vmatpush1.bf16.msra.mxu0 %v1214
    %1278 = vmatprep.subr.bf16.mxu0 0
    %1279 = vmatpush1.bf16.msra.mxu0 %v1215
    %1280 = vmatprep.subr.bf16.mxu0 0
    %1281 = vmatpush1.bf16.msra.mxu0 %v1216
    %1282 = vmatprep.subr.bf16.mxu0 0
    %1283 = vmatpush1.bf16.msra.mxu0 %v1217
    %1284 = vmatprep.subr.bf16.mxu0 0
    %1285 = vmatpush1.bf16.msra.mxu0 %v1218
    %1286 = vmatprep.subr.bf16.mxu0 0
    %1287 = vmatpush1.bf16.msra.mxu0 %v1219
    %1288 = vmatprep.subr.bf16.mxu0 0
    %1289 = vmatpush1.bf16.msra.mxu0 %v1220
    %1290 = vmatprep.subr.bf16.mxu0 0
    %1291 = vmatpush1.bf16.msra.mxu0 %v1221
    %1292 = vmatprep.subr.bf16.mxu0 0
    %1293 = vmatpush1.bf16.msra.mxu0 %v1222
    %1294 = vmatprep.mubr.bf16.mxu0 %v1246
    %1295 = vmatmul.mubr.bf16.gmra.mrb[0].mxu0 %v1245
    %v1296 = vpop.f32.mrb[0].mxu0
    %v1297 = vadd.f32 0.0, %v1296
    %v1298 = vpop.f32.mrb[0].mxu0
    %v1299 = vpop.f32.mrb[0].mxu0
    %v1300 = vadd.f32 0.0, %v1299
    %v1301 = vpop.f32.mrb[0].mxu0
    %1302 = vmatprep.mubr.bf16.mxu0 %v1249
    %1303 = vmatmul.mubr.bf16.gmra.mrb[0].mxu0 %v1248
    %v1304 = vpop.f32.mrb[0].mxu0
    %v1305 = vadd.f32 0.0, %v1304
    %v1306 = vpop.f32.mrb[0].mxu0
    %v1307 = vpop.f32.mrb[0].mxu0
    %v1308 = vadd.f32 0.0, %v1307
    %v1309 = vpop.f32.mrb[0].mxu0
    %1310 = vdwg.mxu0
    %1311 = vmatprep.subr.bf16.mxu0 0
    %1312 = vmatpush1.bf16.msra.mxu0 %v1223
    %1313 = vmatprep.subr.bf16.mxu0 0
    %1314 = vmatpush1.bf16.msra.mxu0 %v1224
    %1315 = vmatprep.subr.bf16.mxu0 0
    %1316 = vmatpush1.bf16.msra.mxu0 0
    %1317 = vmatprep.subr.bf16.mxu0 0
    %1318 = vmatpush1.bf16.msra.mxu0 0
    %1319 = vmatprep.subr.bf16.mxu0 0
    %1320 = vmatpush1.bf16.msra.mxu0 0
    %1321 = vmatprep.subr.bf16.mxu0 0
    %1322 = vmatpush1.bf16.msra.mxu0 0
    %1323 = vmatprep.subr.bf16.mxu0 0
    %1324 = vmatpush1.bf16.msra.mxu0 0
    %1325 = vmatprep.subr.bf16.mxu0 0
    %1326 = vmatpush1.bf16.msra.mxu0 0
    %1327 = vmatprep.subr.bf16.mxu0 0
    %1328 = vmatpush1.bf16.msra.mxu0 0
    %1329 = vmatprep.subr.bf16.mxu0 0
    %1330 = vmatpush1.bf16.msra.mxu0 0
    %1331 = vmatprep.subr.bf16.mxu0 0
    %1332 = vmatpush1.bf16.msra.mxu0 0
    %1333 = vmatprep.subr.bf16.mxu0 0
    %1334 = vmatpush1.bf16.msra.mxu0 0
    %1335 = vmatprep.subr.bf16.mxu0 0
    %1336 = vmatpush1.bf16.msra.mxu0 0
    %1337 = vmatprep.subr.bf16.mxu0 0
    %1338 = vmatpush1.bf16.msra.mxu0 0
    %1339 = vmatprep.subr.bf16.mxu0 0
    %1340 = vmatpush1.bf16.msra.mxu0 0
    %1341 = vmatprep.subr.bf16.mxu0 0
    %1342 = vmatpush1.bf16.msra.mxu0 0
    %1343 = vmatprep.mubr.bf16.mxu0 0
    %1344 = vmatmul.mubr.bf16.gmra.mrb[0].mxu0 %v1257
    %v1345 = vpop.f32.mrb[0].mxu0
    %v1346 = vadd.f32 %v1297, %v1345
    %v1347 = vpop.f32.mrb[0].mxu0
    %v1348 = vpop.f32.mrb[0].mxu0
    %v1349 = vadd.f32 %v1300, %v1348
    %v1350 = vpop.f32.mrb[0].mxu0
    %1351 = vmatprep.mubr.bf16.mxu0 0
    %1352 = vmatmul.mubr.bf16.gmra.mrb[0].mxu0 %v1260
    %v1353 = vpop.f32.mrb[0].mxu0
    %v1354 = vadd.f32 %v1305, %v1353
    %v1355 = vpop.f32.mrb[0].mxu0
    %v1356 = vpop.f32.mrb[0].mxu0
    %v1357 = vadd.f32 %v1308, %v1356
    %v1358 = vpop.f32.mrb[0].mxu0
    %1359 = vdwg.mxu0
    %v1360 = vpack.c.bf16 %v1349, %v1346
    %v1361 = vpack.c.bf16 %v1357, %v1354
    %v1363 = vlaneseq
    %v1364 = vshrl.u32 %v1363, 7
    %v1365 = vsub.s32 0, %v1364
    %v1366 = vrot.slane %v419, %v1365
    %v1377 = vunpack.c.l.b16 %v410
    %v1378 = vunpack.c.l.b16 %v411
    %v1379 = vunpack.c.l.b16 %v412
    %v1380 = vunpack.c.l.b16 %v413
    %v1381 = vunpack.c.l.b16 %v414
    %v1382 = vunpack.c.l.b16 %v415
    %v1383 = vunpack.c.l.b16 %v416
    %v1384 = vunpack.c.l.b16 %v417
    %v1385 = vunpack.c.l.b16 %v418
    %v1386 = vpack.c.b16 %v1378, %v1377
    %v1387 = vpack.c.b16 %v1380, %v1379
    %v1388 = vpack.c.b16 %v1382, %v1381
    %v1389 = vpack.c.b16 %v1384, %v1383
    %v1390 = vpack.c.b16 %v1385, %v1385
    %vm1395 = vcmask 588800
    %v1397 = vsel %vm1395, %v1360, 0
    %v1400 = vsel %vm1395, %v1361, 0
    %vm1402 = vcmask 1043456
    %v1404 = vsel %vm1402, %v1390, 0
    %1406 = vmatprep.subr.bf16.mxu0 0
    %1407 = vmatpush1.bf16.msra.mxu0 %v1386
    %1408 = vmatprep.subr.bf16.mxu0 0
    %1409 = vmatpush1.bf16.msra.mxu0 %v1387
    %1410 = vmatprep.subr.bf16.mxu0 0
    %1411 = vmatpush1.bf16.msra.mxu0 %v1388
    %1412 = vmatprep.subr.bf16.mxu0 0
    %1413 = vmatpush1.bf16.msra.mxu0 %v1389
    %1414 = vmatprep.subr.bf16.mxu0 0
    %1415 = vmatpush1.bf16.msra.mxu0 %v1404
    %1416 = vmatprep.subr.bf16.mxu0 0
    %1417 = vmatpush1.bf16.msra.mxu0 0
    %1418 = vmatprep.subr.bf16.mxu0 0
    %1419 = vmatpush1.bf16.msra.mxu0 0
    %1420 = vmatprep.subr.bf16.mxu0 0
    %1421 = vmatpush1.bf16.msra.mxu0 0
    %1422 = vmatprep.subr.bf16.mxu0 0
    %1423 = vmatpush1.bf16.msra.mxu0 0
    %1424 = vmatprep.subr.bf16.mxu0 0
    %1425 = vmatpush1.bf16.msra.mxu0 0
    %1426 = vmatprep.subr.bf16.mxu0 0
    %1427 = vmatpush1.bf16.msra.mxu0 0
    %1428 = vmatprep.subr.bf16.mxu0 0
    %1429 = vmatpush1.bf16.msra.mxu0 0
    %1430 = vmatprep.subr.bf16.mxu0 0
    %1431 = vmatpush1.bf16.msra.mxu0 0
    %1432 = vmatprep.subr.bf16.mxu0 0
    %1433 = vmatpush1.bf16.msra.mxu0 0
    %1434 = vmatprep.subr.bf16.mxu0 0
    %1435 = vmatpush1.bf16.msra.mxu0 0
    %1436 = vmatprep.subr.bf16.mxu0 0
    %1437 = vmatpush1.bf16.msra.mxu0 0
    %1438 = vmatprep.mubr.bf16.mxu0 0
    %1439 = vmatmul.mubr.bf16.gmra.mrb[0].mxu0 %v1397
    %v1440 = vpop.f32.mrb[0].mxu0
    %v1441 = vadd.f32 %v1366, %v1440
    %v1442 = vpop.f32.mrb[0].mxu0
    %v1443 = vpop.f32.mrb[0].mxu0
    %v1444 = vadd.f32 %v1366, %v1443
    %v1445 = vpop.f32.mrb[0].mxu0
    %1446 = vmatprep.mubr.bf16.mxu0 0
    %1447 = vmatmul.mubr.bf16.gmra.mrb[0].mxu0 %v1400
    %v1448 = vpop.f32.mrb[0].mxu0
    %v1449 = vadd.f32 %v1366, %v1448
    %v1450 = vpop.f32.mrb[0].mxu0
    %v1451 = vpop.f32.mrb[0].mxu0
    %v1452 = vadd.f32 %v1366, %v1451
    %v1453 = vpop.f32.mrb[0].mxu0
    %1454 = vdwg.mxu0
    %v1455 = vmax.f32 %v1441, 0.0
    %v1456 = vmax.f32 %v1444, 0.0
    %v1457 = vmax.f32 %v1449, 0.0
    %v1458 = vmax.f32 %v1452, 0.0
    %v1459 = vpack.c.bf16 %v1456, %v1455
    %v1460 = vpack.c.bf16 %v1458, %v1457
    %v1462 = vlaneseq
    %v1463 = vshrl.u32 %v1462, 7
    %v1464 = vsub.s32 0, %v1463
    %v1465 = vrot.slane %v421, %v1464
    %vm1467 = vcmask 64512
    %v1469 = vsel %vm1467, %v1459, 0
    %v1472 = vsel %vm1467, %v1460, 0
    %v1475 = vsel %vm1402, %v420, 0
    %1477 = vmatprep.subr.bf16.mxu0 0
    %1478 = vmatpush1.bf16.msra.mxu0 %v1475
    %1479 = vmatprep.subr.bf16.mxu0 0
    %1480 = vmatpush1.bf16.msra.mxu0 0
    %1481 = vmatprep.subr.bf16.mxu0 0
    %1482 = vmatpush1.bf16.msra.mxu0 0
    %1483 = vmatprep.subr.bf16.mxu0 0
    %1484 = vmatpush1.bf16.msra.mxu0 0
    %1485 = vmatprep.subr.bf16.mxu0 0
    %1486 = vmatpush1.bf16.msra.mxu0 0
    %1487 = vmatprep.subr.bf16.mxu0 0
    %1488 = vmatpush1.bf16.msra.mxu0 0
    %1489 = vmatprep.subr.bf16.mxu0 0
    %1490 = vmatpush1.bf16.msra.mxu0 0
    %1491 = vmatprep.subr.bf16.mxu0 0
    %1492 = vmatpush1.bf16.msra.mxu0 0
    %1493 = vmatprep.subr.bf16.mxu0 0
    %1494 = vmatpush1.bf16.msra.mxu0 0
    %1495 = vmatprep.subr.bf16.mxu0 0
    %1496 = vmatpush1.bf16.msra.mxu0 0
    %1497 = vmatprep.subr.bf16.mxu0 0
    %1498 = vmatpush1.bf16.msra.mxu0 0
    %1499 = vmatprep.subr.bf16.mxu0 0
    %1500 = vmatpush1.bf16.msra.mxu0 0
    %1501 = vmatprep.subr.bf16.mxu0 0
    %1502 = vmatpush1.bf16.msra.mxu0 0
    %1503 = vmatprep.subr.bf16.mxu0 0
    %1504 = vmatpush1.bf16.msra.mxu0 0
    %1505 = vmatprep.subr.bf16.mxu0 0
    %1506 = vmatpush1.bf16.msra.mxu0 0
    %1507 = vmatprep.subr.bf16.mxu0 0
    %1508 = vmatpush1.bf16.msra.mxu0 0
    %1509 = vmatprep.mubr.bf16.mxu0 0
    %1510 = vmatmul.mubr.bf16.gmra.mrb[0].mxu0 %v1469
    %v1511 = vpop.f32.mrb[0].mxu0
    %v1512 = vadd.f32 %v1465, %v1511
    %v1513 = vpop.f32.mrb[0].mxu0
    %v1514 = vpop.f32.mrb[0].mxu0
    %v1515 = vadd.f32 %v1465, %v1514
    %v1516 = vpop.f32.mrb[0].mxu0
    %1517 = vmatprep.mubr.bf16.mxu0 0
    %1518 = vmatmul.mubr.bf16.gmra.mrb[0].mxu0 %v1472
    %v1519 = vpop.f32.mrb[0].mxu0
    %v1520 = vadd.f32 %v1465, %v1519
    %v1521 = vpop.f32.mrb[0].mxu0
    %v1522 = vpop.f32.mrb[0].mxu0
    %v1523 = vadd.f32 %v1465, %v1522
    %v1524 = vpop.f32.mrb[0].mxu0
    %1525 = vdwg.mxu0
    %v1526 = vmax.f32 %v1512, 0.0
    %v1527 = vmax.f32 %v1515, 0.0
    %v1528 = vmax.f32 %v1520, 0.0
    %v1529 = vmax.f32 %v1523, 0.0
    %v1534 = vunpack.c.l.b16 %v422
    %v1535 = vunpack.c.l.b16 %v423
    %v1536 = vunpack.c.l.b16 %v424
    %v1537 = vunpack.c.l.b16 %v425
    %v1538 = vpack.c.b16 %v1535, %v1534
    %v1539 = vpack.c.b16 %v1537, %v1536
    %1542 = vmatprep.subr.bf16.mxu0 0
    %1543 = vmatpush1.bf16.msra.mxu0 %v429
    %1544 = vmatprep.subr.bf16.mxu0 0
    %1545 = vmatpush1.bf16.msra.mxu0 %v430
    %1546 = vmatprep.subr.bf16.mxu0 0
    %1547 = vmatpush1.bf16.msra.mxu0 %v431
    %1548 = vmatprep.subr.bf16.mxu0 0
    %1549 = vmatpush1.bf16.msra.mxu0 %v432
    %1550 = vmatprep.subr.bf16.mxu0 0
    %1551 = vmatpush1.bf16.msra.mxu0 %v433
    %1552 = vmatprep.subr.bf16.mxu0 0
    %1553 = vmatpush1.bf16.msra.mxu0 %v434
    %1554 = vmatprep.subr.bf16.mxu0 0
    %1555 = vmatpush1.bf16.msra.mxu0 %v435
    %1556 = vmatprep.subr.bf16.mxu0 0
    %1557 = vmatpush1.bf16.msra.mxu0 %v436
    %1558 = vmatprep.subr.bf16.mxu0 0
    %1559 = vmatpush1.bf16.msra.mxu0 0
    %1560 = vmatprep.subr.bf16.mxu0 0
    %1561 = vmatpush1.bf16.msra.mxu0 0
    %1562 = vmatprep.subr.bf16.mxu0 0
    %1563 = vmatpush1.bf16.msra.mxu0 0
    %1564 = vmatprep.subr.bf16.mxu0 0
    %1565 = vmatpush1.bf16.msra.mxu0 0
    %1566 = vmatprep.subr.bf16.mxu0 0
    %1567 = vmatpush1.bf16.msra.mxu0 0
    %1568 = vmatprep.subr.bf16.mxu0 0
    %1569 = vmatpush1.bf16.msra.mxu0 0
    %1570 = vmatprep.subr.bf16.mxu0 0
    %1571 = vmatpush1.bf16.msra.mxu0 0
    %1572 = vmatprep.subr.bf16.mxu0 0
    %1573 = vmatpush1.bf16.msra.mxu0 0
    %1574 = vmatprep.mubr.bf16.mxu0 0
    %1575 = vmatmul.mubr.bf16.gmra.mrb[0].mxu0 %v1538
    %v1576 = vpop.f32.mrb[0].mxu0
    %v1577 = vadd.f32 0.0, %v1576
    %v1578 = vpop.f32.mrb[0].mxu0
    %v1579 = vpop.f32.mrb[0].mxu0
    %v1580 = vadd.f32 0.0, %v1579
    %v1581 = vpop.f32.mrb[0].mxu0
    %1582 = vmatprep.mubr.bf16.mxu0 0
    %1583 = vmatmul.mubr.bf16.gmra.mrb[0].mxu0 %v1539
    %v1584 = vpop.f32.mrb[0].mxu0
    %v1585 = vadd.f32 0.0, %v1584
    %v1586 = vpop.f32.mrb[0].mxu0
    %v1587 = vpop.f32.mrb[0].mxu0
    %v1588 = vadd.f32 0.0, %v1587
    %v1589 = vpop.f32.mrb[0].mxu0
    %1590 = vdwg.mxu0
    %v1591 = vpack.c.bf16 %v1580, %v1577
    %v1592 = vpack.c.bf16 %v1588, %v1585
    %v1594 = vlaneseq
    %v1595 = vshrl.u32 %v1594, 7
    %v1596 = vsub.s32 0, %v1595
    %v1597 = vrot.slane %v428, %v1596
    %v1601 = vunpack.c.l.b16 %v426
    %v1602 = vunpack.c.l.b16 %v427
    %v1603 = vpack.c.b16 %v1602, %v1601
    %v1606 = vsel %vm449, %v1591, 0
    %v1609 = vsel %vm449, %v1592, 0
    %1611 = vmatprep.subr.bf16.mxu0 0
    %1612 = vmatpush1.bf16.msra.mxu0 %v1603
    %1613 = vmatprep.subr.bf16.mxu0 0
    %1614 = vmatpush1.bf16.msra.mxu0 0
    %1615 = vmatprep.subr.bf16.mxu0 0
    %1616 = vmatpush1.bf16.msra.mxu0 0
    %1617 = vmatprep.subr.bf16.mxu0 0
    %1618 = vmatpush1.bf16.msra.mxu0 0
    %1619 = vmatprep.subr.bf16.mxu0 0
    %1620 = vmatpush1.bf16.msra.mxu0 0
    %1621 = vmatprep.subr.bf16.mxu0 0
    %1622 = vmatpush1.bf16.msra.mxu0 0
    %1623 = vmatprep.subr.bf16.mxu0 0
    %1624 = vmatpush1.bf16.msra.mxu0 0
    %1625 = vmatprep.subr.bf16.mxu0 0
    %1626 = vmatpush1.bf16.msra.mxu0 0
    %1627 = vmatprep.subr.bf16.mxu0 0
    %1628 = vmatpush1.bf16.msra.mxu0 0
    %1629 = vmatprep.subr.bf16.mxu0 0
    %1630 = vmatpush1.bf16.msra.mxu0 0
    %1631 = vmatprep.subr.bf16.mxu0 0
    %1632 = vmatpush1.bf16.msra.mxu0 0
    %1633 = vmatprep.subr.bf16.mxu0 0
    %1634 = vmatpush1.bf16.msra.mxu0 0
    %1635 = vmatprep.subr.bf16.mxu0 0
    %1636 = vmatpush1.bf16.msra.mxu0 0
    %1637 = vmatprep.subr.bf16.mxu0 0
    %1638 = vmatpush1.bf16.msra.mxu0 0
    %1639 = vmatprep.subr.bf16.mxu0 0
    %1640 = vmatpush1.bf16.msra.mxu0 0
    %1641 = vmatprep.subr.bf16.mxu0 0
    %1642 = vmatpush1.bf16.msra.mxu0 0
    %1643 = vmatprep.mubr.bf16.mxu0 0
    %1644 = vmatmul.mubr.bf16.gmra.mrb[0].mxu0 %v1606
    %v1645 = vpop.f32.mrb[0].mxu0
    %v1646 = vadd.f32 %v1597, %v1645
    %v1647 = vpop.f32.mrb[0].mxu0
    %v1648 = vpop.f32.mrb[0].mxu0
    %v1649 = vadd.f32 %v1597, %v1648
    %v1650 = vpop.f32.mrb[0].mxu0
    %1651 = vmatprep.mubr.bf16.mxu0 0
    %1652 = vmatmul.mubr.bf16.gmra.mrb[0].mxu0 %v1609
    %v1653 = vpop.f32.mrb[0].mxu0
    %v1654 = vadd.f32 %v1597, %v1653
    %v1655 = vpop.f32.mrb[0].mxu0
    %v1656 = vpop.f32.mrb[0].mxu0
    %v1657 = vadd.f32 %v1597, %v1656
    %v1658 = vpop.f32.mrb[0].mxu0
    %1659 = vdwg.mxu0
    %v1660 = vadd.f32 %v1526, %v1646
    %v1661 = vadd.f32 %v1527, %v1649
    %v1662 = vadd.f32 %v1528, %v1654
    %v1663 = vadd.f32 %v1529, %v1657
    %v1664 = vld [vmem:[%s33] sm:$0xf]
    %v1665 = vld [vmem:[%s33 + $0x4] sm:$0xf]
    %v1666 = vld [vmem:[%s35] sm:$0x1]
    %v1667 = vld [vmem:[%s37] sm:$0xf]
    %v1668 = vld [vmem:[%s37 + $0x4] sm:$0xf]
    %v1669 = vld [vmem:[%s37 + $0x8] sm:$0xf]
    %v1670 = vld [vmem:[%s37 + $0xc] sm:$0xf]
    %v1671 = vld [vmem:[%s37 + $0x10] sm:$0xf]
    %v1672 = vld [vmem:[%s37 + $0x14] sm:$0xf]
    %v1673 = vld [vmem:[%s37 + $0x18] sm:$0xf]
    %v1674 = vld [vmem:[%s37 + $0x1c] sm:$0xf]
    %v1675 = vld [vmem:[%s37 + $0x20] sm:$0xf]
    %v1676 = vld [vmem:[%s37 + $0x24] sm:$0xf]
    %v1677 = vld [vmem:[%s37 + $0x28] sm:$0xf]
    %v1678 = vld [vmem:[%s37 + $0x2c] sm:$0xf]
    %v1679 = vld [vmem:[%s37 + $0x30] sm:$0xf]
    %v1680 = vld [vmem:[%s37 + $0x34] sm:$0xf]
    %v1681 = vld [vmem:[%s37 + $0x38] sm:$0xf]
    %v1682 = vld [vmem:[%s37 + $0x3c] sm:$0xf]
    %v1683 = vld [vmem:[%s37 + $0x40] sm:$0xf]
    %v1684 = vld [vmem:[%s37 + $0x44] sm:$0xf]
    %v1685 = vld [vmem:[%s37 + $0x48] sm:$0xf]
    %v1686 = vld [vmem:[%s37 + $0x4c] sm:$0xf]
    %v1687 = vld [vmem:[%s37 + $0x50] sm:$0xf]
    %v1688 = vld [vmem:[%s37 + $0x54] sm:$0xf]
    %v1689 = vld [vmem:[%s37 + $0x58] sm:$0xf]
    %v1690 = vld [vmem:[%s37 + $0x5c] sm:$0xf]
    %v1691 = vld [vmem:[%s37 + $0x60] sm:$0xf]
    %v1692 = vld [vmem:[%s37 + $0x64] sm:$0xf]
    %v1693 = vld [vmem:[%s37 + $0x68] sm:$0xf]
    %v1694 = vld [vmem:[%s37 + $0x6c] sm:$0xf]
    %v1695 = vld [vmem:[%s37 + $0x70] sm:$0xf]
    %v1696 = vld [vmem:[%s37 + $0x74] sm:$0xf]
    %v1697 = vld [vmem:[%s37 + $0x78] sm:$0xf]
    %v1698 = vld [vmem:[%s37 + $0x7c] sm:$0xf]
    %v1699 = vld [vmem:[%s37 + $0x80] sm:$0xf]
    %v1700 = vld [vmem:[%s37 + $0x84] sm:$0xf]
    %v1701 = vld [vmem:[%s37 + $0x88] sm:$0xf]
    %v1702 = vld [vmem:[%s37 + $0x8c] sm:$0xf]
    %v1703 = vld [vmem:[%s39] sm:$0xf]
    %v1704 = vld [vmem:[%s39 + $0x4] sm:$0xf]
    %v1705 = vld [vmem:[%s41] sm:$0xf]
    %v1706 = vld [vmem:[%s41 + $0x4] sm:$0xf]
    %v1707 = vld [vmem:[%s41 + $0x8] sm:$0xf]
    %v1708 = vld [vmem:[%s41 + $0xc] sm:$0xf]
    %v1709 = vld [vmem:[%s41 + $0x10] sm:$0xf]
    %v1710 = vld [vmem:[%s41 + $0x14] sm:$0xf]
    %v1711 = vld [vmem:[%s41 + $0x18] sm:$0xf]
    %v1712 = vld [vmem:[%s41 + $0x1c] sm:$0xf]
    %v1713 = vld [vmem:[%s41 + $0x20] sm:$0xf]
    %v1714 = vld [vmem:[%s41 + $0x24] sm:$0xf]
    %v1715 = vld [vmem:[%s41 + $0x28] sm:$0xf]
    %v1716 = vld [vmem:[%s41 + $0x2c] sm:$0xf]
    %v1717 = vld [vmem:[%s41 + $0x30] sm:$0xf]
    %v1718 = vld [vmem:[%s41 + $0x34] sm:$0xf]
    %v1719 = vld [vmem:[%s41 + $0x38] sm:$0xf]
    %v1720 = vld [vmem:[%s41 + $0x3c] sm:$0xf]
    %v1721 = vld [vmem:[%s41 + $0x40] sm:$0xf]
    %v1722 = vld [vmem:[%s41 + $0x44] sm:$0xf]
    %v1723 = vld [vmem:[%s41 + $0x48] sm:$0xf]
    %v1724 = vld [vmem:[%s41 + $0x4c] sm:$0xf]
    %v1725 = vld [vmem:[%s41 + $0x50] sm:$0xf]
    %v1726 = vld [vmem:[%s41 + $0x54] sm:$0xf]
    %v1727 = vld [vmem:[%s41 + $0x58] sm:$0xf]
    %v1728 = vld [vmem:[%s41 + $0x5c] sm:$0xf]
    %v1729 = vld [vmem:[%s41 + $0x60] sm:$0xf]
    %v1730 = vld [vmem:[%s41 + $0x64] sm:$0xf]
    %v1731 = vld [vmem:[%s41 + $0x68] sm:$0xf]
    %v1732 = vld [vmem:[%s41 + $0x6c] sm:$0xf]
    %v1733 = vld [vmem:[%s41 + $0x70] sm:$0xf]
    %v1734 = vld [vmem:[%s41 + $0x74] sm:$0xf]
    %v1735 = vld [vmem:[%s41 + $0x78] sm:$0xf]
    %v1736 = vld [vmem:[%s41 + $0x7c] sm:$0xf]
    %v1737 = vld [vmem:[%s41 + $0x80] sm:$0xf]
    %v1738 = vld [vmem:[%s41 + $0x84] sm:$0xf]
    %v1739 = vld [vmem:[%s41 + $0x88] sm:$0xf]
    %v1740 = vld [vmem:[%s41 + $0x8c] sm:$0xf]
    %v1741 = vld [vmem:[%s43] sm:$0xff]
    %v1742 = vld [vmem:[%s43 + $0x8] sm:$0xf]
    %v1743 = vld [vmem:[%s43 + $0xc] sm:$0xff]
    %v1744 = vld [vmem:[%s43 + $0x14] sm:$0xf]
    %v1745 = vld [vmem:[%s43 + $0x18] sm:$0xff]
    %v1746 = vld [vmem:[%s43 + $0x20] sm:$0xf]
    %v1747 = vld [vmem:[%s43 + $0x24] sm:$0xff]
    %v1748 = vld [vmem:[%s43 + $0x2c] sm:$0xf]
    %v1749 = vld [vmem:[%s45] sm:$0xf]
    %v1750 = vld [vmem:[%s45 + $0x4] sm:$0xf]
    %v1751 = vld [vmem:[%s45 + $0x8] sm:$0xf]
    %v1752 = vld [vmem:[%s45 + $0xc] sm:$0xf]
    %v1753 = vld [vmem:[%s45 + $0x10] sm:$0xf]
    %v1754 = vld [vmem:[%s45 + $0x14] sm:$0xf]
    %v1755 = vld [vmem:[%s45 + $0x18] sm:$0xf]
    %v1756 = vld [vmem:[%s45 + $0x1c] sm:$0xf]
    %v1757 = vld [vmem:[%s45 + $0x20] sm:$0xf]
    %v1758 = vld [vmem:[%s47] sm:$0x1]
    %v1759 = vld [vmem:[%s49] sm:$0xf]
    %v1760 = vld [vmem:[%s51] sm:$0x1]
    %v1761 = vpack.c.bf16 %v1661, %v1660
    %v1762 = vpack.c.bf16 %v1663, %v1662
    %v1764 = vlaneseq
    %v1765 = vshrl.u32 %v1764, 7
    %v1766 = vsub.s32 0, %v1765
    %v1767 = vrot.slane %v1666, %v1766
    %v1771 = vunpack.c.l.b16 %v1664
    %v1772 = vunpack.c.l.b16 %v1665
    %v1773 = vpack.c.b16 %v1772, %v1771
    %v1776 = vsel %vm449, %v1761, 0
    %v1779 = vsel %vm449, %v1762, 0
    %1781 = vmatprep.subr.bf16.mxu0 0
    %1782 = vmatpush1.bf16.msra.mxu0 %v1773
    %1783 = vmatprep.subr.bf16.mxu0 0
    %1784 = vmatpush1.bf16.msra.mxu0 0
    %1785 = vmatprep.subr.bf16.mxu0 0
    %1786 = vmatpush1.bf16.msra.mxu0 0
    %1787 = vmatprep.subr.bf16.mxu0 0
    %1788 = vmatpush1.bf16.msra.mxu0 0
    %1789 = vmatprep.subr.bf16.mxu0 0
    %1790 = vmatpush1.bf16.msra.mxu0 0
    %1791 = vmatprep.subr.bf16.mxu0 0
    %1792 = vmatpush1.bf16.msra.mxu0 0
    %1793 = vmatprep.subr.bf16.mxu0 0
    %1794 = vmatpush1.bf16.msra.mxu0 0
    %1795 = vmatprep.subr.bf16.mxu0 0
    %1796 = vmatpush1.bf16.msra.mxu0 0
    %1797 = vmatprep.subr.bf16.mxu0 0
    %1798 = vmatpush1.bf16.msra.mxu0 0
    %1799 = vmatprep.subr.bf16.mxu0 0
    %1800 = vmatpush1.bf16.msra.mxu0 0
    %1801 = vmatprep.subr.bf16.mxu0 0
    %1802 = vmatpush1.bf16.msra.mxu0 0
    %1803 = vmatprep.subr.bf16.mxu0 0
    %1804 = vmatpush1.bf16.msra.mxu0 0
    %1805 = vmatprep.subr.bf16.mxu0 0
    %1806 = vmatpush1.bf16.msra.mxu0 0
    %1807 = vmatprep.subr.bf16.mxu0 0
    %1808 = vmatpush1.bf16.msra.mxu0 0
    %1809 = vmatprep.subr.bf16.mxu0 0
    %1810 = vmatpush1.bf16.msra.mxu0 0
    %1811 = vmatprep.subr.bf16.mxu0 0
    %1812 = vmatpush1.bf16.msra.mxu0 0
    %1813 = vmatprep.mubr.bf16.mxu0 0
    %1814 = vmatmul.mubr.bf16.gmra.mrb[0].mxu0 %v1776
    %v1815 = vpop.f32.mrb[0].mxu0
    %v1816 = vadd.f32 %v1767, %v1815
    %v1817 = vpop.f32.mrb[0].mxu0
    %v1818 = vpop.f32.mrb[0].mxu0
    %v1819 = vadd.f32 %v1767, %v1818
    %v1820 = vpop.f32.mrb[0].mxu0
    %1821 = vmatprep.mubr.bf16.mxu0 0
    %1822 = vmatmul.mubr.bf16.gmra.mrb[0].mxu0 %v1779
    %v1823 = vpop.f32.mrb[0].mxu0
    %v1824 = vadd.f32 %v1767, %v1823
    %v1825 = vpop.f32.mrb[0].mxu0
    %v1826 = vpop.f32.mrb[0].mxu0
    %v1827 = vadd.f32 %v1767, %v1826
    %v1828 = vpop.f32.mrb[0].mxu0
    %1829 = vdwg.mxu0
    %v1830 = vmax.f32 %v1816, 0.0
    %v1831 = vmax.f32 %v1819, 0.0
    %v1832 = vmax.f32 %v1824, 0.0
    %v1833 = vmax.f32 %v1827, 0.0
    %v1834 = vpack.c.bf16 %v1831, %v1830
    %v1835 = vpack.c.bf16 %v1833, %v1832
    %v1872 = vunpack.c.l.b16 %v1667
    %v1873 = vunpack.c.l.b16 %v1668
    %v1874 = vunpack.c.l.b16 %v1669
    %v1875 = vunpack.c.l.b16 %v1670
    %v1876 = vunpack.c.l.b16 %v1671
    %v1877 = vunpack.c.l.b16 %v1672
    %v1878 = vunpack.c.l.b16 %v1673
    %v1879 = vunpack.c.l.b16 %v1674
    %v1880 = vunpack.c.l.b16 %v1675
    %v1881 = vunpack.c.l.b16 %v1676
    %v1882 = vunpack.c.l.b16 %v1677
    %v1883 = vunpack.c.l.b16 %v1678
    %v1884 = vunpack.c.l.b16 %v1679
    %v1885 = vunpack.c.l.b16 %v1680
    %v1886 = vunpack.c.l.b16 %v1681
    %v1887 = vunpack.c.l.b16 %v1682
    %v1888 = vunpack.c.l.b16 %v1683
    %v1889 = vunpack.c.l.b16 %v1684
    %v1890 = vunpack.c.l.b16 %v1685
    %v1891 = vunpack.c.l.b16 %v1686
    %v1892 = vunpack.c.l.b16 %v1687
    %v1893 = vunpack.c.l.b16 %v1688
    %v1894 = vunpack.c.l.b16 %v1689
    %v1895 = vunpack.c.l.b16 %v1690
    %v1896 = vunpack.c.l.b16 %v1691
    %v1897 = vunpack.c.l.b16 %v1692
    %v1898 = vunpack.c.l.b16 %v1693
    %v1899 = vunpack.c.l.b16 %v1694
    %v1900 = vunpack.c.l.b16 %v1695
    %v1901 = vunpack.c.l.b16 %v1696
    %v1902 = vunpack.c.l.b16 %v1697
    %v1903 = vunpack.c.l.b16 %v1698
    %v1904 = vunpack.c.l.b16 %v1699
    %v1905 = vunpack.c.l.b16 %v1700
    %v1906 = vunpack.c.l.b16 %v1701
    %v1907 = vunpack.c.l.b16 %v1702
    %v1908 = vpack.c.b16 %v1873, %v1872
    %v1909 = vpack.c.b16 %v1875, %v1874
    %v1910 = vpack.c.b16 %v1877, %v1876
    %v1911 = vpack.c.b16 %v1879, %v1878
    %v1912 = vpack.c.b16 %v1881, %v1880
    %v1913 = vpack.c.b16 %v1883, %v1882
    %v1914 = vpack.c.b16 %v1885, %v1884
    %v1915 = vpack.c.b16 %v1887, %v1886
    %v1916 = vpack.c.b16 %v1889, %v1888
    %v1917 = vpack.c.b16 %v1891, %v1890
    %v1918 = vpack.c.b16 %v1893, %v1892
    %v1919 = vpack.c.b16 %v1895, %v1894
    %v1920 = vpack.c.b16 %v1897, %v1896
    %v1921 = vpack.c.b16 %v1899, %v1898
    %v1922 = vpack.c.b16 %v1901, %v1900
    %v1923 = vpack.c.b16 %v1903, %v1902
    %v1924 = vpack.c.b16 %v1905, %v1904
    %v1925 = vpack.c.b16 %v1907, %v1906
    %v1927 = vsel %vm1255, %v1908, 0
    %v1930 = vsel %vm1255, %v1909, 0
    %v1933 = vsel %vm1255, %v1910, 0
    %v1936 = vsel %vm1255, %v1911, 0
    %v1939 = vsel %vm1255, %v1912, 0
    %v1942 = vsel %vm1255, %v1913, 0
    %v1945 = vsel %vm1255, %v1914, 0
    %v1948 = vsel %vm1255, %v1915, 0
    %v1951 = vsel %vm1255, %v1916, 0
    %v1954 = vsel %vm1255, %v1917, 0
    %v1957 = vsel %vm1255, %v1918, 0
    %v1960 = vsel %vm1255, %v1919, 0
    %v1963 = vsel %vm1255, %v1920, 0
    %v1966 = vsel %vm1255, %v1921, 0
    %v1969 = vsel %vm1255, %v1922, 0
    %v1972 = vsel %vm1255, %v1923, 0
    %v1975 = vsel %vm1255, %v1924, 0
    %v1978 = vsel %vm1255, %v1925, 0
    %1980 = vmatprep.subr.bf16.mxu0 0
    %1981 = vmatpush1.bf16.msra.mxu0 %v1834
    %1982 = vmatprep.subr.bf16.mxu0 0
    %1983 = vmatpush1.bf16.msra.mxu0 %v1835
    %1984 = vmatprep.subr.bf16.mxu0 0
    %1985 = vmatpush1.bf16.msra.mxu0 0
    %1986 = vmatprep.subr.bf16.mxu0 0
    %1987 = vmatpush1.bf16.msra.mxu0 0
    %1988 = vmatprep.subr.bf16.mxu0 0
    %1989 = vmatpush1.bf16.msra.mxu0 0
    %1990 = vmatprep.subr.bf16.mxu0 0
    %1991 = vmatpush1.bf16.msra.mxu0 0
    %1992 = vmatprep.subr.bf16.mxu0 0
    %1993 = vmatpush1.bf16.msra.mxu0 0
    %1994 = vmatprep.subr.bf16.mxu0 0
    %1995 = vmatpush1.bf16.msra.mxu0 0
    %1996 = vmatprep.subr.bf16.mxu0 0
    %1997 = vmatpush1.bf16.msra.mxu0 0
    %1998 = vmatprep.subr.bf16.mxu0 0
    %1999 = vmatpush1.bf16.msra.mxu0 0
    %2000 = vmatprep.subr.bf16.mxu0 0
    %2001 = vmatpush1.bf16.msra.mxu0 0
    %2002 = vmatprep.subr.bf16.mxu0 0
    %2003 = vmatpush1.bf16.msra.mxu0 0
    %2004 = vmatprep.subr.bf16.mxu0 0
    %2005 = vmatpush1.bf16.msra.mxu0 0
    %2006 = vmatprep.subr.bf16.mxu0 0
    %2007 = vmatpush1.bf16.msra.mxu0 0
    %2008 = vmatprep.subr.bf16.mxu0 0
    %2009 = vmatpush1.bf16.msra.mxu0 0
    %2010 = vmatprep.subr.bf16.mxu0 0
    %2011 = vmatpush1.bf16.msra.mxu0 0
    %2012 = vmatprep.mubr.bf16.mxu0 0
    %2013 = vmatmul.mubr.bf16.gmra.mrb[0].mxu0 %v1927
    %v2014 = vpop.f32.mrb[0].mxu0
    %v2015 = vadd.f32 0.0, %v2014
    %v2016 = vpop.f32.mrb[0].mxu0
    %v2017 = vpop.f32.mrb[0].mxu0
    %v2018 = vadd.f32 0.0, %v2017
    %v2019 = vpop.f32.mrb[0].mxu0
    %2020 = vmatprep.mubr.bf16.mxu0 0
    %2021 = vmatmul.mubr.bf16.gmra.mrb[0].mxu0 %v1930
    %v2022 = vpop.f32.mrb[0].mxu0
    %v2023 = vadd.f32 0.0, %v2022
    %v2024 = vpop.f32.mrb[0].mxu0
    %v2025 = vpop.f32.mrb[0].mxu0
    %v2026 = vadd.f32 0.0, %v2025
    %v2027 = vpop.f32.mrb[0].mxu0
    %2028 = vmatprep.mubr.bf16.mxu0 0
    %2029 = vmatmul.mubr.bf16.gmra.mrb[0].mxu0 %v1933
    %v2030 = vpop.f32.mrb[0].mxu0
    %v2031 = vadd.f32 0.0, %v2030
    %v2032 = vpop.f32.mrb[0].mxu0
    %v2033 = vpop.f32.mrb[0].mxu0
    %v2034 = vadd.f32 0.0, %v2033
    %v2035 = vpop.f32.mrb[0].mxu0
    %2036 = vmatprep.mubr.bf16.mxu0 0
    %2037 = vmatmul.mubr.bf16.gmra.mrb[0].mxu0 %v1936
    %v2038 = vpop.f32.mrb[0].mxu0
    %v2039 = vadd.f32 0.0, %v2038
    %v2040 = vpop.f32.mrb[0].mxu0
    %v2041 = vpop.f32.mrb[0].mxu0
    %v2042 = vadd.f32 0.0, %v2041
    %v2043 = vpop.f32.mrb[0].mxu0
    %2044 = vmatprep.mubr.bf16.mxu0 0
    %2045 = vmatmul.mubr.bf16.gmra.mrb[0].mxu0 %v1939
    %v2046 = vpop.f32.mrb[0].mxu0
    %v2047 = vadd.f32 0.0, %v2046
    %v2048 = vpop.f32.mrb[0].mxu0
    %v2049 = vpop.f32.mrb[0].mxu0
    %v2050 = vadd.f32 0.0, %v2049
    %v2051 = vpop.f32.mrb[0].mxu0
    %2052 = vmatprep.mubr.bf16.mxu0 0
    %2053 = vmatmul.mubr.bf16.gmra.mrb[0].mxu0 %v1942
    %v2054 = vpop.f32.mrb[0].mxu0
    %v2055 = vadd.f32 0.0, %v2054
    %v2056 = vpop.f32.mrb[0].mxu0
    %v2057 = vpop.f32.mrb[0].mxu0
    %v2058 = vadd.f32 0.0, %v2057
    %v2059 = vpop.f32.mrb[0].mxu0
    %2060 = vmatprep.mubr.bf16.mxu0 0
    %2061 = vmatmul.mubr.bf16.gmra.mrb[0].mxu0 %v1945
    %v2062 = vpop.f32.mrb[0].mxu0
    %v2063 = vadd.f32 0.0, %v2062
    %v2064 = vpop.f32.mrb[0].mxu0
    %v2065 = vpop.f32.mrb[0].mxu0
    %v2066 = vadd.f32 0.0, %v2065
    %v2067 = vpop.f32.mrb[0].mxu0
    %2068 = vmatprep.mubr.bf16.mxu0 0
    %2069 = vmatmul.mubr.bf16.gmra.mrb[0].mxu0 %v1948
    %v2070 = vpop.f32.mrb[0].mxu0
    %v2071 = vadd.f32 0.0, %v2070
    %v2072 = vpop.f32.mrb[0].mxu0
    %v2073 = vpop.f32.mrb[0].mxu0
    %v2074 = vadd.f32 0.0, %v2073
    %v2075 = vpop.f32.mrb[0].mxu0
    %2076 = vmatprep.mubr.bf16.mxu0 0
    %2077 = vmatmul.mubr.bf16.gmra.mrb[0].mxu0 %v1951
    %v2078 = vpop.f32.mrb[0].mxu0
    %v2079 = vadd.f32 0.0, %v2078
    %v2080 = vpop.f32.mrb[0].mxu0
    %v2081 = vpop.f32.mrb[0].mxu0
    %v2082 = vadd.f32 0.0, %v2081
    %v2083 = vpop.f32.mrb[0].mxu0
    %2084 = vmatprep.mubr.bf16.mxu0 0
    %2085 = vmatmul.mubr.bf16.gmra.mrb[0].mxu0 %v1954
    %v2086 = vpop.f32.mrb[0].mxu0
    %v2087 = vadd.f32 0.0, %v2086
    %v2088 = vpop.f32.mrb[0].mxu0
    %v2089 = vpop.f32.mrb[0].mxu0
    %v2090 = vadd.f32 0.0, %v2089
    %v2091 = vpop.f32.mrb[0].mxu0
    %2092 = vmatprep.mubr.bf16.mxu0 0
    %2093 = vmatmul.mubr.bf16.gmra.mrb[0].mxu0 %v1957
    %v2094 = vpop.f32.mrb[0].mxu0
    %v2095 = vadd.f32 0.0, %v2094
    %v2096 = vpop.f32.mrb[0].mxu0
    %v2097 = vpop.f32.mrb[0].mxu0
    %v2098 = vadd.f32 0.0, %v2097
    %v2099 = vpop.f32.mrb[0].mxu0
    %2100 = vmatprep.mubr.bf16.mxu0 0
    %2101 = vmatmul.mubr.bf16.gmra.mrb[0].mxu0 %v1960
    %v2102 = vpop.f32.mrb[0].mxu0
    %v2103 = vadd.f32 0.0, %v2102
    %v2104 = vpop.f32.mrb[0].mxu0
    %v2105 = vpop.f32.mrb[0].mxu0
    %v2106 = vadd.f32 0.0, %v2105
    %v2107 = vpop.f32.mrb[0].mxu0
    %2108 = vmatprep.mubr.bf16.mxu0 0
    %2109 = vmatmul.mubr.bf16.gmra.mrb[0].mxu0 %v1963
    %v2110 = vpop.f32.mrb[0].mxu0
    %v2111 = vadd.f32 0.0, %v2110
    %v2112 = vpop.f32.mrb[0].mxu0
    %v2113 = vpop.f32.mrb[0].mxu0
    %v2114 = vadd.f32 0.0, %v2113
    %v2115 = vpop.f32.mrb[0].mxu0
    %2116 = vmatprep.mubr.bf16.mxu0 0
    %2117 = vmatmul.mubr.bf16.gmra.mrb[0].mxu0 %v1966
    %v2118 = vpop.f32.mrb[0].mxu0
    %v2119 = vadd.f32 0.0, %v2118
    %v2120 = vpop.f32.mrb[0].mxu0
    %v2121 = vpop.f32.mrb[0].mxu0
    %v2122 = vadd.f32 0.0, %v2121
    %v2123 = vpop.f32.mrb[0].mxu0
    %2124 = vmatprep.mubr.bf16.mxu0 0
    %2125 = vmatmul.mubr.bf16.gmra.mrb[0].mxu0 %v1969
    %v2126 = vpop.f32.mrb[0].mxu0
    %v2127 = vadd.f32 0.0, %v2126
    %v2128 = vpop.f32.mrb[0].mxu0
    %v2129 = vpop.f32.mrb[0].mxu0
    %v2130 = vadd.f32 0.0, %v2129
    %v2131 = vpop.f32.mrb[0].mxu0
    %2132 = vmatprep.mubr.bf16.mxu0 0
    %2133 = vmatmul.mubr.bf16.gmra.mrb[0].mxu0 %v1972
    %v2134 = vpop.f32.mrb[0].mxu0
    %v2135 = vadd.f32 0.0, %v2134
    %v2136 = vpop.f32.mrb[0].mxu0
    %v2137 = vpop.f32.mrb[0].mxu0
    %v2138 = vadd.f32 0.0, %v2137
    %v2139 = vpop.f32.mrb[0].mxu0
    %2140 = vmatprep.mubr.bf16.mxu0 0
    %2141 = vmatmul.mubr.bf16.gmra.mrb[0].mxu0 %v1975
    %v2142 = vpop.f32.mrb[0].mxu0
    %v2143 = vadd.f32 0.0, %v2142
    %v2144 = vpop.f32.mrb[0].mxu0
    %v2145 = vpop.f32.mrb[0].mxu0
    %v2146 = vadd.f32 0.0, %v2145
    %v2147 = vpop.f32.mrb[0].mxu0
    %2148 = vmatprep.mubr.bf16.mxu0 0
    %2149 = vmatmul.mubr.bf16.gmra.mrb[0].mxu0 %v1978
    %v2150 = vpop.f32.mrb[0].mxu0
    %v2151 = vadd.f32 0.0, %v2150
    %v2152 = vpop.f32.mrb[0].mxu0
    %v2153 = vpop.f32.mrb[0].mxu0
    %v2154 = vadd.f32 0.0, %v2153
    %v2155 = vpop.f32.mrb[0].mxu0
    %2156 = vdwg.mxu0
    %v2157 = vpack.c.bf16 %v2018, %v2015
    %v2158 = vpack.c.bf16 %v2026, %v2023
    %v2159 = vpack.c.bf16 %v2034, %v2031
    %v2160 = vpack.c.bf16 %v2042, %v2039
    %v2161 = vpack.c.bf16 %v2050, %v2047
    %v2162 = vpack.c.bf16 %v2058, %v2055
    %v2163 = vpack.c.bf16 %v2066, %v2063
    %v2164 = vpack.c.bf16 %v2074, %v2071
    %v2165 = vpack.c.bf16 %v2082, %v2079
    %v2166 = vpack.c.bf16 %v2090, %v2087
    %v2167 = vpack.c.bf16 %v2098, %v2095
    %v2168 = vpack.c.bf16 %v2106, %v2103
    %v2169 = vpack.c.bf16 %v2114, %v2111
    %v2170 = vpack.c.bf16 %v2122, %v2119
    %v2171 = vpack.c.bf16 %v2130, %v2127
    %v2172 = vpack.c.bf16 %v2138, %v2135
    %v2173 = vpack.c.bf16 %v2146, %v2143
    %v2174 = vpack.c.bf16 %v2154, %v2151
    %v2177 = vunpack.c.l.b16 %v1703
    %v2178 = vunpack.c.l.b16 %v1704
    %v2179 = vpack.c.b16 %v2178, %v2177
    %v2182 = vsel %vm449, %v2157, 0
    %v2185 = vsel %vm449, %v2158, 0
    %v2188 = vsel %vm449, %v2159, 0
    %v2191 = vsel %vm449, %v2160, 0
    %v2194 = vsel %vm449, %v2161, 0
    %v2197 = vsel %vm449, %v2162, 0
    %v2200 = vsel %vm449, %v2163, 0
    %v2203 = vsel %vm449, %v2164, 0
    %v2206 = vsel %vm449, %v2165, 0
    %v2209 = vsel %vm449, %v2166, 0
    %v2212 = vsel %vm449, %v2167, 0
    %v2215 = vsel %vm449, %v2168, 0
    %v2218 = vsel %vm449, %v2169, 0
    %v2221 = vsel %vm449, %v2170, 0
    %v2224 = vsel %vm449, %v2171, 0
    %v2227 = vsel %vm449, %v2172, 0
    %v2230 = vsel %vm449, %v2173, 0
    %v2233 = vsel %vm449, %v2174, 0
    %2235 = vmatprep.subr.bf16.mxu0 0
    %2236 = vmatpush1.bf16.msra.mxu0 %v2179
    %2237 = vmatprep.subr.bf16.mxu0 0
    %2238 = vmatpush1.bf16.msra.mxu0 0
    %2239 = vmatprep.subr.bf16.mxu0 0
    %2240 = vmatpush1.bf16.msra.mxu0 0
    %2241 = vmatprep.subr.bf16.mxu0 0
    %2242 = vmatpush1.bf16.msra.mxu0 0
    %2243 = vmatprep.subr.bf16.mxu0 0
    %2244 = vmatpush1.bf16.msra.mxu0 0
    %2245 = vmatprep.subr.bf16.mxu0 0
    %2246 = vmatpush1.bf16.msra.mxu0 0
    %2247 = vmatprep.subr.bf16.mxu0 0
    %2248 = vmatpush1.bf16.msra.mxu0 0
    %2249 = vmatprep.subr.bf16.mxu0 0
    %2250 = vmatpush1.bf16.msra.mxu0 0
    %2251 = vmatprep.subr.bf16.mxu0 0
    %2252 = vmatpush1.bf16.msra.mxu0 0
    %2253 = vmatprep.subr.bf16.mxu0 0
    %2254 = vmatpush1.bf16.msra.mxu0 0
    %2255 = vmatprep.subr.bf16.mxu0 0
    %2256 = vmatpush1.bf16.msra.mxu0 0
    %2257 = vmatprep.subr.bf16.mxu0 0
    %2258 = vmatpush1.bf16.msra.mxu0 0
    %2259 = vmatprep.subr.bf16.mxu0 0
    %2260 = vmatpush1.bf16.msra.mxu0 0
    %2261 = vmatprep.subr.bf16.mxu0 0
    %2262 = vmatpush1.bf16.msra.mxu0 0
    %2263 = vmatprep.subr.bf16.mxu0 0
    %2264 = vmatpush1.bf16.msra.mxu0 0
    %2265 = vmatprep.subr.bf16.mxu0 0
    %2266 = vmatpush1.bf16.msra.mxu0 0
    %2267 = vmatprep.mubr.bf16.mxu0 0
    %2268 = vmatmul.mubr.bf16.gmra.mrb[0].mxu0 %v2182
    %v2269 = vpop.f32.mrb[0].mxu0
    %v2270 = vadd.f32 0.0, %v2269
    %v2271 = vpop.f32.mrb[0].mxu0
    %v2272 = vpop.f32.mrb[0].mxu0
    %v2273 = vadd.f32 0.0, %v2272
    %v2274 = vpop.f32.mrb[0].mxu0
    %2275 = vmatprep.mubr.bf16.mxu0 0
    %2276 = vmatmul.mubr.bf16.gmra.mrb[0].mxu0 %v2185
    %v2277 = vpop.f32.mrb[0].mxu0
    %v2278 = vadd.f32 0.0, %v2277
    %v2279 = vpop.f32.mrb[0].mxu0
    %v2280 = vpop.f32.mrb[0].mxu0
    %v2281 = vadd.f32 0.0, %v2280
    %v2282 = vpop.f32.mrb[0].mxu0
    %2283 = vmatprep.mubr.bf16.mxu0 0
    %2284 = vmatmul.mubr.bf16.gmra.mrb[0].mxu0 %v2188
    %v2285 = vpop.f32.mrb[0].mxu0
    %v2286 = vadd.f32 0.0, %v2285
    %v2287 = vpop.f32.mrb[0].mxu0
    %v2288 = vpop.f32.mrb[0].mxu0
    %v2289 = vadd.f32 0.0, %v2288
    %v2290 = vpop.f32.mrb[0].mxu0
    %2291 = vmatprep.mubr.bf16.mxu0 0
    %2292 = vmatmul.mubr.bf16.gmra.mrb[0].mxu0 %v2191
    %v2293 = vpop.f32.mrb[0].mxu0
    %v2294 = vadd.f32 0.0, %v2293
    %v2295 = vpop.f32.mrb[0].mxu0
    %v2296 = vpop.f32.mrb[0].mxu0
    %v2297 = vadd.f32 0.0, %v2296
    %v2298 = vpop.f32.mrb[0].mxu0
    %2299 = vmatprep.mubr.bf16.mxu0 0
    %2300 = vmatmul.mubr.bf16.gmra.mrb[0].mxu0 %v2194
    %v2301 = vpop.f32.mrb[0].mxu0
    %v2302 = vadd.f32 0.0, %v2301
    %v2303 = vpop.f32.mrb[0].mxu0
    %v2304 = vpop.f32.mrb[0].mxu0
    %v2305 = vadd.f32 0.0, %v2304
    %v2306 = vpop.f32.mrb[0].mxu0
    %2307 = vmatprep.mubr.bf16.mxu0 0
    %2308 = vmatmul.mubr.bf16.gmra.mrb[0].mxu0 %v2197
    %v2309 = vpop.f32.mrb[0].mxu0
    %v2310 = vadd.f32 0.0, %v2309
    %v2311 = vpop.f32.mrb[0].mxu0
    %v2312 = vpop.f32.mrb[0].mxu0
    %v2313 = vadd.f32 0.0, %v2312
    %v2314 = vpop.f32.mrb[0].mxu0
    %2315 = vmatprep.mubr.bf16.mxu0 0
    %2316 = vmatmul.mubr.bf16.gmra.mrb[0].mxu0 %v2200
    %v2317 = vpop.f32.mrb[0].mxu0
    %v2318 = vadd.f32 0.0, %v2317
    %v2319 = vpop.f32.mrb[0].mxu0
    %v2320 = vpop.f32.mrb[0].mxu0
    %v2321 = vadd.f32 0.0, %v2320
    %v2322 = vpop.f32.mrb[0].mxu0
    %2323 = vmatprep.mubr.bf16.mxu0 0
    %2324 = vmatmul.mubr.bf16.gmra.mrb[0].mxu0 %v2203
    %v2325 = vpop.f32.mrb[0].mxu0
    %v2326 = vadd.f32 0.0, %v2325
    %v2327 = vpop.f32.mrb[0].mxu0
    %v2328 = vpop.f32.mrb[0].mxu0
    %v2329 = vadd.f32 0.0, %v2328
    %v2330 = vpop.f32.mrb[0].mxu0
    %2331 = vmatprep.mubr.bf16.mxu0 0
    %2332 = vmatmul.mubr.bf16.gmra.mrb[0].mxu0 %v2206
    %v2333 = vpop.f32.mrb[0].mxu0
    %v2334 = vadd.f32 0.0, %v2333
    %v2335 = vpop.f32.mrb[0].mxu0
    %v2336 = vpop.f32.mrb[0].mxu0
    %v2337 = vadd.f32 0.0, %v2336
    %v2338 = vpop.f32.mrb[0].mxu0
    %2339 = vmatprep.mubr.bf16.mxu0 0
    %2340 = vmatmul.mubr.bf16.gmra.mrb[0].mxu0 %v2209
    %v2341 = vpop.f32.mrb[0].mxu0
    %v2342 = vadd.f32 0.0, %v2341
    %v2343 = vpop.f32.mrb[0].mxu0
    %v2344 = vpop.f32.mrb[0].mxu0
    %v2345 = vadd.f32 0.0, %v2344
    %v2346 = vpop.f32.mrb[0].mxu0
    %2347 = vmatprep.mubr.bf16.mxu0 0
    %2348 = vmatmul.mubr.bf16.gmra.mrb[0].mxu0 %v2212
    %v2349 = vpop.f32.mrb[0].mxu0
    %v2350 = vadd.f32 0.0, %v2349
    %v2351 = vpop.f32.mrb[0].mxu0
    %v2352 = vpop.f32.mrb[0].mxu0
    %v2353 = vadd.f32 0.0, %v2352
    %v2354 = vpop.f32.mrb[0].mxu0
    %2355 = vmatprep.mubr.bf16.mxu0 0
    %2356 = vmatmul.mubr.bf16.gmra.mrb[0].mxu0 %v2215
    %v2357 = vpop.f32.mrb[0].mxu0
    %v2358 = vadd.f32 0.0, %v2357
    %v2359 = vpop.f32.mrb[0].mxu0
    %v2360 = vpop.f32.mrb[0].mxu0
    %v2361 = vadd.f32 0.0, %v2360
    %v2362 = vpop.f32.mrb[0].mxu0
    %2363 = vmatprep.mubr.bf16.mxu0 0
    %2364 = vmatmul.mubr.bf16.gmra.mrb[0].mxu0 %v2218
    %v2365 = vpop.f32.mrb[0].mxu0
    %v2366 = vadd.f32 0.0, %v2365
    %v2367 = vpop.f32.mrb[0].mxu0
    %v2368 = vpop.f32.mrb[0].mxu0
    %v2369 = vadd.f32 0.0, %v2368
    %v2370 = vpop.f32.mrb[0].mxu0
    %2371 = vmatprep.mubr.bf16.mxu0 0
    %2372 = vmatmul.mubr.bf16.gmra.mrb[0].mxu0 %v2221
    %v2373 = vpop.f32.mrb[0].mxu0
    %v2374 = vadd.f32 0.0, %v2373
    %v2375 = vpop.f32.mrb[0].mxu0
    %v2376 = vpop.f32.mrb[0].mxu0
    %v2377 = vadd.f32 0.0, %v2376
    %v2378 = vpop.f32.mrb[0].mxu0
    %2379 = vmatprep.mubr.bf16.mxu0 0
    %2380 = vmatmul.mubr.bf16.gmra.mrb[0].mxu0 %v2224
    %v2381 = vpop.f32.mrb[0].mxu0
    %v2382 = vadd.f32 0.0, %v2381
    %v2383 = vpop.f32.mrb[0].mxu0
    %v2384 = vpop.f32.mrb[0].mxu0
    %v2385 = vadd.f32 0.0, %v2384
    %v2386 = vpop.f32.mrb[0].mxu0
    %2387 = vmatprep.mubr.bf16.mxu0 0
    %2388 = vmatmul.mubr.bf16.gmra.mrb[0].mxu0 %v2227
    %v2389 = vpop.f32.mrb[0].mxu0
    %v2390 = vadd.f32 0.0, %v2389
    %v2391 = vpop.f32.mrb[0].mxu0
    %v2392 = vpop.f32.mrb[0].mxu0
    %v2393 = vadd.f32 0.0, %v2392
    %v2394 = vpop.f32.mrb[0].mxu0
    %2395 = vmatprep.mubr.bf16.mxu0 0
    %2396 = vmatmul.mubr.bf16.gmra.mrb[0].mxu0 %v2230
    %v2397 = vpop.f32.mrb[0].mxu0
    %v2398 = vadd.f32 0.0, %v2397
    %v2399 = vpop.f32.mrb[0].mxu0
    %v2400 = vpop.f32.mrb[0].mxu0
    %v2401 = vadd.f32 0.0, %v2400
    %v2402 = vpop.f32.mrb[0].mxu0
    %2403 = vmatprep.mubr.bf16.mxu0 0
    %2404 = vmatmul.mubr.bf16.gmra.mrb[0].mxu0 %v2233
    %v2405 = vpop.f32.mrb[0].mxu0
    %v2406 = vadd.f32 0.0, %v2405
    %v2407 = vpop.f32.mrb[0].mxu0
    %v2408 = vpop.f32.mrb[0].mxu0
    %v2409 = vadd.f32 0.0, %v2408
    %v2410 = vpop.f32.mrb[0].mxu0
    %2411 = vdwg.mxu0
    %v2412 = vunpack.c.l.bf16 %v1705
    %v2413 = vunpack.c.l.bf16 %v1706
    %v2414 = vunpack.c.l.bf16 %v1707
    %v2415 = vunpack.c.l.bf16 %v1708
    %v2416 = vunpack.c.l.bf16 %v1709
    %v2417 = vunpack.c.l.bf16 %v1710
    %v2418 = vunpack.c.l.bf16 %v1711
    %v2419 = vunpack.c.l.bf16 %v1712
    %v2420 = vunpack.c.l.bf16 %v1713
    %v2421 = vunpack.c.l.bf16 %v1714
    %v2422 = vunpack.c.l.bf16 %v1715
    %v2423 = vunpack.c.l.bf16 %v1716
    %v2424 = vunpack.c.l.bf16 %v1717
    %v2425 = vunpack.c.l.bf16 %v1718
    %v2426 = vunpack.c.l.bf16 %v1719
    %v2427 = vunpack.c.l.bf16 %v1720
    %v2428 = vunpack.c.l.bf16 %v1721
    %v2429 = vunpack.c.l.bf16 %v1722
    %v2430 = vunpack.c.l.bf16 %v1723
    %v2431 = vunpack.c.l.bf16 %v1724
    %v2432 = vunpack.c.l.bf16 %v1725
    %v2433 = vunpack.c.l.bf16 %v1726
    %v2434 = vunpack.c.l.bf16 %v1727
    %v2435 = vunpack.c.l.bf16 %v1728
    %v2436 = vunpack.c.l.bf16 %v1729
    %v2437 = vunpack.c.l.bf16 %v1730
    %v2438 = vunpack.c.l.bf16 %v1731
    %v2439 = vunpack.c.l.bf16 %v1732
    %v2440 = vunpack.c.l.bf16 %v1733
    %v2441 = vunpack.c.l.bf16 %v1734
    %v2442 = vunpack.c.l.bf16 %v1735
    %v2443 = vunpack.c.l.bf16 %v1736
    %v2444 = vunpack.c.l.bf16 %v1737
    %v2445 = vunpack.c.l.bf16 %v1738
    %v2446 = vunpack.c.l.bf16 %v1739
    %v2447 = vunpack.c.l.bf16 %v1740
    %v2448 = vmul.f32 %v2270, %v2412
    %v2449 = vmul.f32 %v2273, %v2413
    %v2450 = vmul.f32 %v2278, %v2414
    %v2451 = vmul.f32 %v2281, %v2415
    %v2452 = vmul.f32 %v2286, %v2416
    %v2453 = vmul.f32 %v2289, %v2417
    %v2454 = vmul.f32 %v2294, %v2418
    %v2455 = vmul.f32 %v2297, %v2419
    %v2456 = vmul.f32 %v2302, %v2420
    %v2457 = vmul.f32 %v2305, %v2421
    %v2458 = vmul.f32 %v2310, %v2422
    %v2459 = vmul.f32 %v2313, %v2423
    %v2460 = vmul.f32 %v2318, %v2424
    %v2461 = vmul.f32 %v2321, %v2425
    %v2462 = vmul.f32 %v2326, %v2426
    %v2463 = vmul.f32 %v2329, %v2427
    %v2464 = vmul.f32 %v2334, %v2428
    %v2465 = vmul.f32 %v2337, %v2429
    %v2466 = vmul.f32 %v2342, %v2430
    %v2467 = vmul.f32 %v2345, %v2431
    %v2468 = vmul.f32 %v2350, %v2432
    %v2469 = vmul.f32 %v2353, %v2433
    %v2470 = vmul.f32 %v2358, %v2434
    %v2471 = vmul.f32 %v2361, %v2435
    %v2472 = vmul.f32 %v2366, %v2436
    %v2473 = vmul.f32 %v2369, %v2437
    %v2474 = vmul.f32 %v2374, %v2438
    %v2475 = vmul.f32 %v2377, %v2439
    %v2476 = vmul.f32 %v2382, %v2440
    %v2477 = vmul.f32 %v2385, %v2441
    %v2478 = vmul.f32 %v2390, %v2442
    %v2479 = vmul.f32 %v2393, %v2443
    %v2480 = vmul.f32 %v2398, %v2444
    %v2481 = vmul.f32 %v2401, %v2445
    %v2482 = vmul.f32 %v2406, %v2446
    %v2483 = vmul.f32 %v2409, %v2447
    %v2484 = vpack.c.bf16 %v2449, %v2448
    %v2485 = vpack.c.bf16 %v2451, %v2450
    %v2486 = vpack.c.bf16 %v2453, %v2452
    %v2487 = vpack.c.bf16 %v2455, %v2454
    %v2488 = vpack.c.bf16 %v2457, %v2456
    %v2489 = vpack.c.bf16 %v2459, %v2458
    %v2490 = vpack.c.bf16 %v2461, %v2460
    %v2491 = vpack.c.bf16 %v2463, %v2462
    %v2492 = vpack.c.bf16 %v2465, %v2464
    %v2493 = vpack.c.bf16 %v2467, %v2466
    %v2494 = vpack.c.bf16 %v2469, %v2468
    %v2495 = vpack.c.bf16 %v2471, %v2470
    %v2496 = vpack.c.bf16 %v2473, %v2472
    %v2497 = vpack.c.bf16 %v2475, %v2474
    %v2498 = vpack.c.bf16 %v2477, %v2476
    %v2499 = vpack.c.bf16 %v2479, %v2478
    %v2500 = vpack.c.bf16 %v2481, %v2480
    %v2501 = vpack.c.bf16 %v2483, %v2482
    %v2510 = vunpack.c.l.b16 %v1741
    %v2511 = vunpack.c.h.b16 %v1741
    %v2512 = vunpack.c.l.b16 %v1742
    %v2513 = vunpack.c.l.b16 %v1743
    %v2514 = vunpack.c.h.b16 %v1743
    %v2515 = vunpack.c.l.b16 %v1744
    %v2516 = vunpack.c.l.b16 %v1745
    %v2517 = vunpack.c.h.b16 %v1745
    %v2518 = vunpack.c.l.b16 %v1746
    %v2519 = vunpack.c.l.b16 %v1747
    %v2520 = vunpack.c.h.b16 %v1747
    %v2521 = vunpack.c.l.b16 %v1748
    %v2522 = vpack.c.b16 %v2513, %v2510
    %v2523 = vpack.c.b16 %v2514, %v2511
    %v2524 = vpack.c.b16 %v2515, %v2512
    %v2525 = vpack.c.b16 %v2519, %v2516
    %v2526 = vpack.c.b16 %v2520, %v2517
    %v2527 = vpack.c.b16 %v2521, %v2518
    %v2533 = vsel %vm1255, %v2524, 0
    %v2536 = vsel %vm1255, %v2527, 0
    %2538 = vmatprep.subr.bf16.mxu0 0
    %2539 = vmatpush1.bf16.msra.mxu0 %v2484
    %2540 = vmatprep.subr.bf16.mxu0 0
    %2541 = vmatpush1.bf16.msra.mxu0 %v2485
    %2542 = vmatprep.subr.bf16.mxu0 0
    %2543 = vmatpush1.bf16.msra.mxu0 %v2486
    %2544 = vmatprep.subr.bf16.mxu0 0
    %2545 = vmatpush1.bf16.msra.mxu0 %v2487
    %2546 = vmatprep.subr.bf16.mxu0 0
    %2547 = vmatpush1.bf16.msra.mxu0 %v2488
    %2548 = vmatprep.subr.bf16.mxu0 0
    %2549 = vmatpush1.bf16.msra.mxu0 %v2489
    %2550 = vmatprep.subr.bf16.mxu0 0
    %2551 = vmatpush1.bf16.msra.mxu0 %v2490
    %2552 = vmatprep.subr.bf16.mxu0 0
    %2553 = vmatpush1.bf16.msra.mxu0 %v2491
    %2554 = vmatprep.subr.bf16.mxu0 0
    %2555 = vmatpush1.bf16.msra.mxu0 %v2492
    %2556 = vmatprep.subr.bf16.mxu0 0
    %2557 = vmatpush1.bf16.msra.mxu0 %v2493
    %2558 = vmatprep.subr.bf16.mxu0 0
    %2559 = vmatpush1.bf16.msra.mxu0 %v2494
    %2560 = vmatprep.subr.bf16.mxu0 0
    %2561 = vmatpush1.bf16.msra.mxu0 %v2495
    %2562 = vmatprep.subr.bf16.mxu0 0
    %2563 = vmatpush1.bf16.msra.mxu0 %v2496
    %2564 = vmatprep.subr.bf16.mxu0 0
    %2565 = vmatpush1.bf16.msra.mxu0 %v2497
    %2566 = vmatprep.subr.bf16.mxu0 0
    %2567 = vmatpush1.bf16.msra.mxu0 %v2498
    %2568 = vmatprep.subr.bf16.mxu0 0
    %2569 = vmatpush1.bf16.msra.mxu0 %v2499
    %2570 = vmatprep.mubr.bf16.mxu0 %v2523
    %2571 = vmatmul.mubr.bf16.gmra.mrb[0].mxu0 %v2522
    %v2572 = vpop.f32.mrb[0].mxu0
    %v2573 = vadd.f32 0.0, %v2572
    %v2574 = vpop.f32.mrb[0].mxu0
    %v2575 = vpop.f32.mrb[0].mxu0
    %v2576 = vadd.f32 0.0, %v2575
    %v2577 = vpop.f32.mrb[0].mxu0
    %2578 = vmatprep.mubr.bf16.mxu0 %v2526
    %2579 = vmatmul.mubr.bf16.gmra.mrb[0].mxu0 %v2525
    %v2580 = vpop.f32.mrb[0].mxu0
    %v2581 = vadd.f32 0.0, %v2580
    %v2582 = vpop.f32.mrb[0].mxu0
    %v2583 = vpop.f32.mrb[0].mxu0
    %v2584 = vadd.f32 0.0, %v2583
    %v2585 = vpop.f32.mrb[0].mxu0
    %2586 = vdwg.mxu0
    %2587 = vmatprep.subr.bf16.mxu0 0
    %2588 = vmatpush1.bf16.msra.mxu0 %v2500
    %2589 = vmatprep.subr.bf16.mxu0 0
    %2590 = vmatpush1.bf16.msra.mxu0 %v2501
    %2591 = vmatprep.subr.bf16.mxu0 0
    %2592 = vmatpush1.bf16.msra.mxu0 0
    %2593 = vmatprep.subr.bf16.mxu0 0
    %2594 = vmatpush1.bf16.msra.mxu0 0
    %2595 = vmatprep.subr.bf16.mxu0 0
    %2596 = vmatpush1.bf16.msra.mxu0 0
    %2597 = vmatprep.subr.bf16.mxu0 0
    %2598 = vmatpush1.bf16.msra.mxu0 0
    %2599 = vmatprep.subr.bf16.mxu0 0
    %2600 = vmatpush1.bf16.msra.mxu0 0
    %2601 = vmatprep.subr.bf16.mxu0 0
    %2602 = vmatpush1.bf16.msra.mxu0 0
    %2603 = vmatprep.subr.bf16.mxu0 0
    %2604 = vmatpush1.bf16.msra.mxu0 0
    %2605 = vmatprep.subr.bf16.mxu0 0
    %2606 = vmatpush1.bf16.msra.mxu0 0
    %2607 = vmatprep.subr.bf16.mxu0 0
    %2608 = vmatpush1.bf16.msra.mxu0 0
    %2609 = vmatprep.subr.bf16.mxu0 0
    %2610 = vmatpush1.bf16.msra.mxu0 0
    %2611 = vmatprep.subr.bf16.mxu0 0
    %2612 = vmatpush1.bf16.msra.mxu0 0
    %2613 = vmatprep.subr.bf16.mxu0 0
    %2614 = vmatpush1.bf16.msra.mxu0 0
    %2615 = vmatprep.subr.bf16.mxu0 0
    %2616 = vmatpush1.bf16.msra.mxu0 0
    %2617 = vmatprep.subr.bf16.mxu0 0
    %2618 = vmatpush1.bf16.msra.mxu0 0
    %2619 = vmatprep.mubr.bf16.mxu0 0
    %2620 = vmatmul.mubr.bf16.gmra.mrb[0].mxu0 %v2533
    %v2621 = vpop.f32.mrb[0].mxu0
    %v2622 = vadd.f32 %v2573, %v2621
    %v2623 = vpop.f32.mrb[0].mxu0
    %v2624 = vpop.f32.mrb[0].mxu0
    %v2625 = vadd.f32 %v2576, %v2624
    %v2626 = vpop.f32.mrb[0].mxu0
    %2627 = vmatprep.mubr.bf16.mxu0 0
    %2628 = vmatmul.mubr.bf16.gmra.mrb[0].mxu0 %v2536
    %v2629 = vpop.f32.mrb[0].mxu0
    %v2630 = vadd.f32 %v2581, %v2629
    %v2631 = vpop.f32.mrb[0].mxu0
    %v2632 = vpop.f32.mrb[0].mxu0
    %v2633 = vadd.f32 %v2584, %v2632
    %v2634 = vpop.f32.mrb[0].mxu0
    %2635 = vdwg.mxu0
    %v2636 = vpack.c.bf16 %v2625, %v2622
    %v2637 = vpack.c.bf16 %v2633, %v2630
    %v2639 = vlaneseq
    %v2640 = vshrl.u32 %v2639, 7
    %v2641 = vsub.s32 0, %v2640
    %v2642 = vrot.slane %v1758, %v2641
    %v2653 = vunpack.c.l.b16 %v1749
    %v2654 = vunpack.c.l.b16 %v1750
    %v2655 = vunpack.c.l.b16 %v1751
    %v2656 = vunpack.c.l.b16 %v1752
    %v2657 = vunpack.c.l.b16 %v1753
    %v2658 = vunpack.c.l.b16 %v1754
    %v2659 = vunpack.c.l.b16 %v1755
    %v2660 = vunpack.c.l.b16 %v1756
    %v2661 = vunpack.c.l.b16 %v1757
    %v2662 = vpack.c.b16 %v2654, %v2653
    %v2663 = vpack.c.b16 %v2656, %v2655
    %v2664 = vpack.c.b16 %v2658, %v2657
    %v2665 = vpack.c.b16 %v2660, %v2659
    %v2666 = vpack.c.b16 %v2661, %v2661
    %v2672 = vsel %vm1395, %v2636, 0
    %v2675 = vsel %vm1395, %v2637, 0
    %v2678 = vsel %vm1402, %v2666, 0
    %2680 = vmatprep.subr.bf16.mxu0 0
    %2681 = vmatpush1.bf16.msra.mxu0 %v2662
    %2682 = vmatprep.subr.bf16.mxu0 0
    %2683 = vmatpush1.bf16.msra.mxu0 %v2663
    %2684 = vmatprep.subr.bf16.mxu0 0
    %2685 = vmatpush1.bf16.msra.mxu0 %v2664
    %2686 = vmatprep.subr.bf16.mxu0 0
    %2687 = vmatpush1.bf16.msra.mxu0 %v2665
    %2688 = vmatprep.subr.bf16.mxu0 0
    %2689 = vmatpush1.bf16.msra.mxu0 %v2678
    %2690 = vmatprep.subr.bf16.mxu0 0
    %2691 = vmatpush1.bf16.msra.mxu0 0
    %2692 = vmatprep.subr.bf16.mxu0 0
    %2693 = vmatpush1.bf16.msra.mxu0 0
    %2694 = vmatprep.subr.bf16.mxu0 0
    %2695 = vmatpush1.bf16.msra.mxu0 0
    %2696 = vmatprep.subr.bf16.mxu0 0
    %2697 = vmatpush1.bf16.msra.mxu0 0
    %2698 = vmatprep.subr.bf16.mxu0 0
    %2699 = vmatpush1.bf16.msra.mxu0 0
    %2700 = vmatprep.subr.bf16.mxu0 0
    %2701 = vmatpush1.bf16.msra.mxu0 0
    %2702 = vmatprep.subr.bf16.mxu0 0
    %2703 = vmatpush1.bf16.msra.mxu0 0
    %2704 = vmatprep.subr.bf16.mxu0 0
    %2705 = vmatpush1.bf16.msra.mxu0 0
    %2706 = vmatprep.subr.bf16.mxu0 0
    %2707 = vmatpush1.bf16.msra.mxu0 0
    %2708 = vmatprep.subr.bf16.mxu0 0
    %2709 = vmatpush1.bf16.msra.mxu0 0
    %2710 = vmatprep.subr.bf16.mxu0 0
    %2711 = vmatpush1.bf16.msra.mxu0 0
    %2712 = vmatprep.mubr.bf16.mxu0 0
    %2713 = vmatmul.mubr.bf16.gmra.mrb[0].mxu0 %v2672
    %v2714 = vpop.f32.mrb[0].mxu0
    %v2715 = vadd.f32 %v2642, %v2714
    %v2716 = vpop.f32.mrb[0].mxu0
    %v2717 = vpop.f32.mrb[0].mxu0
    %v2718 = vadd.f32 %v2642, %v2717
    %v2719 = vpop.f32.mrb[0].mxu0
    %2720 = vmatprep.mubr.bf16.mxu0 0
    %2721 = vmatmul.mubr.bf16.gmra.mrb[0].mxu0 %v2675
    %v2722 = vpop.f32.mrb[0].mxu0
    %v2723 = vadd.f32 %v2642, %v2722
    %v2724 = vpop.f32.mrb[0].mxu0
    %v2725 = vpop.f32.mrb[0].mxu0
    %v2726 = vadd.f32 %v2642, %v2725
    %v2727 = vpop.f32.mrb[0].mxu0
    %2728 = vdwg.mxu0
    %v2729 = vmax.f32 %v2715, 0.0
    %v2730 = vmax.f32 %v2718, 0.0
    %v2731 = vmax.f32 %v2723, 0.0
    %v2732 = vmax.f32 %v2726, 0.0
    %v2733 = vpack.c.bf16 %v2730, %v2729
    %v2734 = vpack.c.bf16 %v2732, %v2731
    %v2736 = vlaneseq
    %v2737 = vshrl.u32 %v2736, 7
    %v2738 = vsub.s32 0, %v2737
    %v2739 = vrot.slane %v1760, %v2738
    %v2742 = vsel %vm1467, %v2733, 0
    %v2745 = vsel %vm1467, %v2734, 0
    %v2748 = vsel %vm1402, %v1759, 0
    %2750 = vmatprep.subr.bf16.mxu0 0
    %2751 = vmatpush1.bf16.msra.mxu0 %v2748
    %2752 = vmatprep.subr.bf16.mxu0 0
    %2753 = vmatpush1.bf16.msra.mxu0 0
    %2754 = vmatprep.subr.bf16.mxu0 0
    %2755 = vmatpush1.bf16.msra.mxu0 0
    %2756 = vmatprep.subr.bf16.mxu0 0
    %2757 = vmatpush1.bf16.msra.mxu0 0
    %2758 = vmatprep.subr.bf16.mxu0 0
    %2759 = vmatpush1.bf16.msra.mxu0 0
    %2760 = vmatprep.subr.bf16.mxu0 0
    %2761 = vmatpush1.bf16.msra.mxu0 0
    %2762 = vmatprep.subr.bf16.mxu0 0
    %2763 = vmatpush1.bf16.msra.mxu0 0
    %2764 = vmatprep.subr.bf16.mxu0 0
    %2765 = vmatpush1.bf16.msra.mxu0 0
    %2766 = vmatprep.subr.bf16.mxu0 0
    %2767 = vmatpush1.bf16.msra.mxu0 0
    %2768 = vmatprep.subr.bf16.mxu0 0
    %2769 = vmatpush1.bf16.msra.mxu0 0
    %2770 = vmatprep.subr.bf16.mxu0 0
    %2771 = vmatpush1.bf16.msra.mxu0 0
    %2772 = vmatprep.subr.bf16.mxu0 0
    %2773 = vmatpush1.bf16.msra.mxu0 0
    %2774 = vmatprep.subr.bf16.mxu0 0
    %2775 = vmatpush1.bf16.msra.mxu0 0
    %2776 = vmatprep.subr.bf16.mxu0 0
    %2777 = vmatpush1.bf16.msra.mxu0 0
    %2778 = vmatprep.subr.bf16.mxu0 0
    %2779 = vmatpush1.bf16.msra.mxu0 0
    %2780 = vmatprep.subr.bf16.mxu0 0
    %2781 = vmatpush1.bf16.msra.mxu0 0
    %2782 = vmatprep.mubr.bf16.mxu0 0
    %2783 = vmatmul.mubr.bf16.gmra.mrb[0].mxu0 %v2742
    %v2784 = vpop.f32.mrb[0].mxu0
    %v2785 = vadd.f32 %v2739, %v2784
    %v2786 = vpop.f32.mrb[0].mxu0
    %v2787 = vpop.f32.mrb[0].mxu0
    %v2788 = vadd.f32 %v2739, %v2787
    %v2789 = vpop.f32.mrb[0].mxu0
    %2790 = vmatprep.mubr.bf16.mxu0 0
    %2791 = vmatmul.mubr.bf16.gmra.mrb[0].mxu0 %v2745
    %v2792 = vpop.f32.mrb[0].mxu0
    %v2793 = vadd.f32 %v2739, %v2792
    %v2794 = vpop.f32.mrb[0].mxu0
    %v2795 = vpop.f32.mrb[0].mxu0
    %v2796 = vadd.f32 %v2739, %v2795
    %v2797 = vpop.f32.mrb[0].mxu0
    %2798 = vdwg.mxu0
    %v2799 = vmax.f32 %v2785, 0.0
    %v2800 = vmax.f32 %v2788, 0.0
    %v2801 = vmax.f32 %v2793, 0.0
    %v2802 = vmax.f32 %v2796, 0.0
    %v2803 = vadd.f32 %v2799, %v1660
    %v2804 = vadd.f32 %v2800, %v1661
    %v2805 = vadd.f32 %v2801, %v1662
    %v2806 = vadd.f32 %v2802, %v1663
    %v2807 = vld [vmem:[%s53] sm:$0xff]
    %v2808 = vld [vmem:[%s53 + $0x8] sm:$0xff]
    %v2809 = vld [vmem:[%s53 + $0x10] sm:$0xff]
    %v2810 = vld [vmem:[%s53 + $0x18] sm:$0xff]
    %v2811 = vld [vmem:[%s55] sm:$0xff]
    %v2812 = vld [vmem:[%s55 + $0x8] sm:$0xff]
    %v2813 = vld [vmem:[%s55 + $0x10] sm:$0xff]
    %v2814 = vld [vmem:[%s55 + $0x18] sm:$0xff]
    %v2815 = vld [vmem:[%s55 + $0x20] sm:$0xff]
    %v2816 = vld [vmem:[%s55 + $0x28] sm:$0xff]
    %v2817 = vld [vmem:[%s55 + $0x30] sm:$0xff]
    %v2818 = vld [vmem:[%s55 + $0x38] sm:$0xff]
    %v2819 = vld [vmem:[%s57] sm:$0x1]
    %v2820 = vld [vmem:[%s59] sm:$0xf]
    %v2821 = vld [vmem:[%s59 + $0x4] sm:$0xf]
    %v2822 = vld [vmem:[%s59 + $0x8] sm:$0xf]
    %v2823 = vld [vmem:[%s59 + $0xc] sm:$0xf]
    %v2824 = vld [vmem:[%s59 + $0x10] sm:$0xf]
    %v2825 = vld [vmem:[%s59 + $0x14] sm:$0xf]
    %v2826 = vld [vmem:[%s59 + $0x18] sm:$0xf]
    %v2827 = vld [vmem:[%s59 + $0x1c] sm:$0xf]
    %v2828 = vld [vmem:[%s59 + $0x20] sm:$0xf]
    %v2829 = vld [vmem:[%s59 + $0x24] sm:$0xf]
    %v2830 = vld [vmem:[%s59 + $0x28] sm:$0xf]
    %v2831 = vld [vmem:[%s59 + $0x2c] sm:$0xf]
    %v2832 = vld [vmem:[%s59 + $0x30] sm:$0xf]
    %v2833 = vld [vmem:[%s59 + $0x34] sm:$0xf]
    %v2834 = vld [vmem:[%s59 + $0x38] sm:$0xf]
    %v2835 = vld [vmem:[%s59 + $0x3c] sm:$0xf]
    %v2836 = vld [vmem:[%s59 + $0x40] sm:$0xf]
    %v2837 = vld [vmem:[%s59 + $0x44] sm:$0xf]
    %v2838 = vld [vmem:[%s59 + $0x48] sm:$0xf]
    %v2839 = vld [vmem:[%s59 + $0x4c] sm:$0xf]
    %v2840 = vld [vmem:[%s59 + $0x50] sm:$0xf]
    %v2841 = vld [vmem:[%s59 + $0x54] sm:$0xf]
    %v2842 = vld [vmem:[%s59 + $0x58] sm:$0xf]
    %v2843 = vld [vmem:[%s59 + $0x5c] sm:$0xf]
    %v2844 = vld [vmem:[%s59 + $0x60] sm:$0xf]
    %v2845 = vld [vmem:[%s59 + $0x64] sm:$0xf]
    %v2846 = vld [vmem:[%s59 + $0x68] sm:$0xf]
    %v2847 = vld [vmem:[%s59 + $0x6c] sm:$0xf]
    %v2848 = vld [vmem:[%s59 + $0x70] sm:$0xf]
    %v2849 = vld [vmem:[%s59 + $0x74] sm:$0xf]
    %v2850 = vld [vmem:[%s59 + $0x78] sm:$0xf]
    %v2851 = vld [vmem:[%s59 + $0x7c] sm:$0xf]
    %v2852 = vld [vmem:[%s59 + $0x80] sm:$0xf]
    %v2853 = vld [vmem:[%s59 + $0x84] sm:$0xf]
    %v2854 = vld [vmem:[%s59 + $0x88] sm:$0xf]
    %v2855 = vld [vmem:[%s59 + $0x8c] sm:$0xf]
    %v2856 = vld [vmem:[%s59 + $0x90] sm:$0xf]
    %v2857 = vld [vmem:[%s59 + $0x94] sm:$0xf]
    %v2858 = vld [vmem:[%s59 + $0x98] sm:$0xf]
    %v2859 = vld [vmem:[%s59 + $0x9c] sm:$0xf]
    %v2860 = vld [vmem:[%s59 + $0xa0] sm:$0xf]
    %v2861 = vld [vmem:[%s59 + $0xa4] sm:$0xf]
    %v2862 = vld [vmem:[%s59 + $0xa8] sm:$0xf]
    %v2863 = vld [vmem:[%s59 + $0xac] sm:$0xf]
    %v2864 = vld [vmem:[%s59 + $0xb0] sm:$0xf]
    %v2865 = vld [vmem:[%s59 + $0xb4] sm:$0xf]
    %v2866 = vld [vmem:[%s59 + $0xb8] sm:$0xf]
    %v2867 = vld [vmem:[%s59 + $0xbc] sm:$0xf]
    %v2868 = vld [vmem:[%s59 + $0xc0] sm:$0xf]
    %v2869 = vld [vmem:[%s59 + $0xc4] sm:$0xf]
    %v2870 = vld [vmem:[%s59 + $0xc8] sm:$0xf]
    %v2871 = vld [vmem:[%s59 + $0xcc] sm:$0xf]
    %v2872 = vld [vmem:[%s59 + $0xd0] sm:$0xf]
    %v2873 = vld [vmem:[%s59 + $0xd4] sm:$0xf]
    %v2874 = vld [vmem:[%s59 + $0xd8] sm:$0xf]
    %v2875 = vld [vmem:[%s59 + $0xdc] sm:$0xf]
    %v2876 = vld [vmem:[%s59 + $0xe0] sm:$0xf]
    %v2877 = vld [vmem:[%s59 + $0xe4] sm:$0xf]
    %v2878 = vld [vmem:[%s59 + $0xe8] sm:$0xf]
    %v2879 = vld [vmem:[%s59 + $0xec] sm:$0xf]
    %v2880 = vld [vmem:[%s59 + $0xf0] sm:$0xf]
    %v2881 = vld [vmem:[%s59 + $0xf4] sm:$0xf]
    %v2882 = vld [vmem:[%s59 + $0xf8] sm:$0xf]
    %v2883 = vld [vmem:[%s59 + $0xfc] sm:$0xf]
    %v2884 = vld [vmem:[%s61] sm:$0x1]
    %v2885 = vpack.c.bf16 %v2804, %v2803
    %v2886 = vpack.c.bf16 %v2806, %v2805
    %v2891 = vunpack.c.l.b16 %v2807
    %v2892 = vunpack.c.h.b16 %v2807
    %v2893 = vunpack.c.l.b16 %v2808
    %v2894 = vunpack.c.h.b16 %v2808
    %v2895 = vunpack.c.l.b16 %v2809
    %v2896 = vunpack.c.h.b16 %v2809
    %v2897 = vunpack.c.l.b16 %v2810
    %v2898 = vunpack.c.h.b16 %v2810
    %v2899 = vpack.c.b16 %v2895, %v2891
    %v2900 = vpack.c.b16 %v2896, %v2892
    %v2901 = vpack.c.b16 %v2897, %v2893
    %v2902 = vpack.c.b16 %v2898, %v2894
    %v2908 = vsel %vm449, %v2885, 0
    %v2911 = vsel %vm449, %v2886, 0
    %2913 = vmatprep.subr.bf16.mxu0 %v2900
    %2914 = vmatpush1.bf16.msra.mxu0 %v2899
    %2915 = vmatprep.subr.bf16.mxu0 0
    %2916 = vmatpush1.bf16.msra.mxu0 0
    %2917 = vmatprep.subr.bf16.mxu0 0
    %2918 = vmatpush1.bf16.msra.mxu0 0
    %2919 = vmatprep.subr.bf16.mxu0 0
    %2920 = vmatpush1.bf16.msra.mxu0 0
    %2921 = vmatprep.subr.bf16.mxu0 0
    %2922 = vmatpush1.bf16.msra.mxu0 0
    %2923 = vmatprep.subr.bf16.mxu0 0
    %2924 = vmatpush1.bf16.msra.mxu0 0
    %2925 = vmatprep.subr.bf16.mxu0 0
    %2926 = vmatpush1.bf16.msra.mxu0 0
    %2927 = vmatprep.subr.bf16.mxu0 0
    %2928 = vmatpush1.bf16.msra.mxu0 0
    %2929 = vmatprep.subr.bf16.mxu0 0
    %2930 = vmatpush1.bf16.msra.mxu0 0
    %2931 = vmatprep.subr.bf16.mxu0 0
    %2932 = vmatpush1.bf16.msra.mxu0 0
    %2933 = vmatprep.subr.bf16.mxu0 0
    %2934 = vmatpush1.bf16.msra.mxu0 0
    %2935 = vmatprep.subr.bf16.mxu0 0
    %2936 = vmatpush1.bf16.msra.mxu0 0
    %2937 = vmatprep.subr.bf16.mxu0 0
    %2938 = vmatpush1.bf16.msra.mxu0 0
    %2939 = vmatprep.subr.bf16.mxu0 0
    %2940 = vmatpush1.bf16.msra.mxu0 0
    %2941 = vmatprep.subr.bf16.mxu0 0
    %2942 = vmatpush1.bf16.msra.mxu0 0
    %2943 = vmatprep.subr.bf16.mxu0 0
    %2944 = vmatpush1.bf16.msra.mxu0 0
    %2945 = vmatprep.mubr.bf16.mxu0 0
    %2946 = vmatmul.mubr.bf16.gmra.mrb[0].mxu0 %v2908
    %v2947 = vpop.f32.mrb[0].mxu0
    %v2948 = vadd.f32 0.0, %v2947
    %v2949 = vpop.f32.mrb[0].mxu0
    %v2950 = vadd.f32 0.0, %v2949
    %v2951 = vpop.f32.mrb[0].mxu0
    %v2952 = vadd.f32 0.0, %v2951
    %v2953 = vpop.f32.mrb[0].mxu0
    %v2954 = vadd.f32 0.0, %v2953
    %2955 = vmatprep.mubr.bf16.mxu0 0
    %2956 = vmatmul.mubr.bf16.gmra.mrb[0].mxu0 %v2911
    %v2957 = vpop.f32.mrb[0].mxu0
    %v2958 = vadd.f32 0.0, %v2957
    %v2959 = vpop.f32.mrb[0].mxu0
    %v2960 = vadd.f32 0.0, %v2959
    %v2961 = vpop.f32.mrb[0].mxu0
    %v2962 = vadd.f32 0.0, %v2961
    %v2963 = vpop.f32.mrb[0].mxu0
    %v2964 = vadd.f32 0.0, %v2963
    %2965 = vdwg.mxu0
    %2966 = vmatprep.subr.bf16.mxu0 %v2902
    %2967 = vmatpush1.bf16.msra.mxu0 %v2901
    %2968 = vmatprep.subr.bf16.mxu0 0
    %2969 = vmatpush1.bf16.msra.mxu0 0
    %2970 = vmatprep.subr.bf16.mxu0 0
    %2971 = vmatpush1.bf16.msra.mxu0 0
    %2972 = vmatprep.subr.bf16.mxu0 0
    %2973 = vmatpush1.bf16.msra.mxu0 0
    %2974 = vmatprep.subr.bf16.mxu0 0
    %2975 = vmatpush1.bf16.msra.mxu0 0
    %2976 = vmatprep.subr.bf16.mxu0 0
    %2977 = vmatpush1.bf16.msra.mxu0 0
    %2978 = vmatprep.subr.bf16.mxu0 0
    %2979 = vmatpush1.bf16.msra.mxu0 0
    %2980 = vmatprep.subr.bf16.mxu0 0
    %2981 = vmatpush1.bf16.msra.mxu0 0
    %2982 = vmatprep.subr.bf16.mxu0 0
    %2983 = vmatpush1.bf16.msra.mxu0 0
    %2984 = vmatprep.subr.bf16.mxu0 0
    %2985 = vmatpush1.bf16.msra.mxu0 0
    %2986 = vmatprep.subr.bf16.mxu0 0
    %2987 = vmatpush1.bf16.msra.mxu0 0
    %2988 = vmatprep.subr.bf16.mxu0 0
    %2989 = vmatpush1.bf16.msra.mxu0 0
    %2990 = vmatprep.subr.bf16.mxu0 0
    %2991 = vmatpush1.bf16.msra.mxu0 0
    %2992 = vmatprep.subr.bf16.mxu0 0
    %2993 = vmatpush1.bf16.msra.mxu0 0
    %2994 = vmatprep.subr.bf16.mxu0 0
    %2995 = vmatpush1.bf16.msra.mxu0 0
    %2996 = vmatprep.subr.bf16.mxu0 0
    %2997 = vmatpush1.bf16.msra.mxu0 0
    %2998 = vmatprep.mubr.bf16.mxu0 0
    %2999 = vmatmul.mubr.bf16.gmra.mrb[0].mxu0 %v2908
    %v3000 = vpop.f32.mrb[0].mxu0
    %v3001 = vadd.f32 0.0, %v3000
    %v3002 = vpop.f32.mrb[0].mxu0
    %v3003 = vadd.f32 0.0, %v3002
    %v3004 = vpop.f32.mrb[0].mxu0
    %v3005 = vadd.f32 0.0, %v3004
    %v3006 = vpop.f32.mrb[0].mxu0
    %v3007 = vadd.f32 0.0, %v3006
    %3008 = vmatprep.mubr.bf16.mxu0 0
    %3009 = vmatmul.mubr.bf16.gmra.mrb[0].mxu0 %v2911
    %v3010 = vpop.f32.mrb[0].mxu0
    %v3011 = vadd.f32 0.0, %v3010
    %v3012 = vpop.f32.mrb[0].mxu0
    %v3013 = vadd.f32 0.0, %v3012
    %v3014 = vpop.f32.mrb[0].mxu0
    %v3015 = vadd.f32 0.0, %v3014
    %v3016 = vpop.f32.mrb[0].mxu0
    %v3017 = vadd.f32 0.0, %v3016
    %3018 = vdwg.mxu0
    %v3019 = vunpack.c.l.bf16 %v2811
    %v3020 = vunpack.c.h.bf16 %v2811
    %v3021 = vunpack.c.l.bf16 %v2812
    %v3022 = vunpack.c.h.bf16 %v2812
    %v3023 = vunpack.c.l.bf16 %v2813
    %v3024 = vunpack.c.h.bf16 %v2813
    %v3025 = vunpack.c.l.bf16 %v2814
    %v3026 = vunpack.c.h.bf16 %v2814
    %v3027 = vunpack.c.l.bf16 %v2815
    %v3028 = vunpack.c.h.bf16 %v2815
    %v3029 = vunpack.c.l.bf16 %v2816
    %v3030 = vunpack.c.h.bf16 %v2816
    %v3031 = vunpack.c.l.bf16 %v2817
    %v3032 = vunpack.c.h.bf16 %v2817
    %v3033 = vunpack.c.l.bf16 %v2818
    %v3034 = vunpack.c.h.bf16 %v2818
    %v3035 = vmul.f32 %v2948, %v3019
    %v3036 = vmul.f32 %v2950, %v3020
    %v3037 = vmul.f32 %v3001, %v3021
    %v3038 = vmul.f32 %v3003, %v3022
    %v3039 = vmul.f32 %v2952, %v3023
    %v3040 = vmul.f32 %v2954, %v3024
    %v3041 = vmul.f32 %v3005, %v3025
    %v3042 = vmul.f32 %v3007, %v3026
    %v3043 = vmul.f32 %v2958, %v3027
    %v3044 = vmul.f32 %v2960, %v3028
    %v3045 = vmul.f32 %v3011, %v3029
    %v3046 = vmul.f32 %v3013, %v3030
    %v3047 = vmul.f32 %v2962, %v3031
    %v3048 = vmul.f32 %v2964, %v3032
    %v3049 = vmul.f32 %v3015, %v3033
    %v3050 = vmul.f32 %v3017, %v3034
    %v3051 = vpack.c.bf16 %v3039, %v3035
    %v3052 = vpack.c.bf16 %v3040, %v3036
    %v3053 = vpack.c.bf16 %v3041, %v3037
    %v3054 = vpack.c.bf16 %v3042, %v3038
    %v3055 = vpack.c.bf16 %v3047, %v3043
    %v3056 = vpack.c.bf16 %v3048, %v3044
    %v3057 = vpack.c.bf16 %v3049, %v3045
    %v3058 = vpack.c.bf16 %v3050, %v3046
    %v3060 = vsel %vm1255, %v2819, 0
    %3062 = vmatprep.subr.bf16.mxu0 %v3052
    %3063 = vmatpush1.bf16.msra.mxu0 %v3051
    %3064 = vmatprep.subr.bf16.mxu0 %v3056
    %3065 = vmatpush1.bf16.msra.mxu0 %v3055
    %3066 = vmatprep.subr.bf16.mxu0 0
    %3067 = vmatpush1.bf16.msra.mxu0 0
    %3068 = vmatprep.subr.bf16.mxu0 0
    %3069 = vmatpush1.bf16.msra.mxu0 0
    %3070 = vmatprep.subr.bf16.mxu0 0
    %3071 = vmatpush1.bf16.msra.mxu0 0
    %3072 = vmatprep.subr.bf16.mxu0 0
    %3073 = vmatpush1.bf16.msra.mxu0 0
    %3074 = vmatprep.subr.bf16.mxu0 0
    %3075 = vmatpush1.bf16.msra.mxu0 0
    %3076 = vmatprep.subr.bf16.mxu0 0
    %3077 = vmatpush1.bf16.msra.mxu0 0
    %3078 = vmatprep.subr.bf16.mxu0 0
    %3079 = vmatpush1.bf16.msra.mxu0 0
    %3080 = vmatprep.subr.bf16.mxu0 0
    %3081 = vmatpush1.bf16.msra.mxu0 0
    %3082 = vmatprep.subr.bf16.mxu0 0
    %3083 = vmatpush1.bf16.msra.mxu0 0
    %3084 = vmatprep.subr.bf16.mxu0 0
    %3085 = vmatpush1.bf16.msra.mxu0 0
    %3086 = vmatprep.subr.bf16.mxu0 0
    %3087 = vmatpush1.bf16.msra.mxu0 0
    %3088 = vmatprep.subr.bf16.mxu0 0
    %3089 = vmatpush1.bf16.msra.mxu0 0
    %3090 = vmatprep.subr.bf16.mxu0 0
    %3091 = vmatpush1.bf16.msra.mxu0 0
    %3092 = vmatprep.subr.bf16.mxu0 0
    %3093 = vmatpush1.bf16.msra.mxu0 0
    %3094 = vmatprep.mubr.bf16.mxu0 0
    %3095 = vmatmul.mubr.bf16.gmra.mrb[0].mxu0 %v3060
    %v3096 = vpop.f32.mrb[0].mxu0
    %v3097 = vadd.f32 0.0, %v3096
    %v3098 = vpop.f32.mrb[0].mxu0
    %v3099 = vadd.f32 0.0, %v3098
    %v3100 = vpop.f32.mrb[0].mxu0
    %v3101 = vpop.f32.mrb[0].mxu0
    %3102 = vdwg.mxu0
    %3103 = vmatprep.subr.bf16.mxu0 %v3054
    %3104 = vmatpush1.bf16.msra.mxu0 %v3053
    %3105 = vmatprep.subr.bf16.mxu0 %v3058
    %3106 = vmatpush1.bf16.msra.mxu0 %v3057
    %3107 = vmatprep.subr.bf16.mxu0 0
    %3108 = vmatpush1.bf16.msra.mxu0 0
    %3109 = vmatprep.subr.bf16.mxu0 0
    %3110 = vmatpush1.bf16.msra.mxu0 0
    %3111 = vmatprep.subr.bf16.mxu0 0
    %3112 = vmatpush1.bf16.msra.mxu0 0
    %3113 = vmatprep.subr.bf16.mxu0 0
    %3114 = vmatpush1.bf16.msra.mxu0 0
    %3115 = vmatprep.subr.bf16.mxu0 0
    %3116 = vmatpush1.bf16.msra.mxu0 0
    %3117 = vmatprep.subr.bf16.mxu0 0
    %3118 = vmatpush1.bf16.msra.mxu0 0
    %3119 = vmatprep.subr.bf16.mxu0 0
    %3120 = vmatpush1.bf16.msra.mxu0 0
    %3121 = vmatprep.subr.bf16.mxu0 0
    %3122 = vmatpush1.bf16.msra.mxu0 0
    %3123 = vmatprep.subr.bf16.mxu0 0
    %3124 = vmatpush1.bf16.msra.mxu0 0
    %3125 = vmatprep.subr.bf16.mxu0 0
    %3126 = vmatpush1.bf16.msra.mxu0 0
    %3127 = vmatprep.subr.bf16.mxu0 0
    %3128 = vmatpush1.bf16.msra.mxu0 0
    %3129 = vmatprep.subr.bf16.mxu0 0
    %3130 = vmatpush1.bf16.msra.mxu0 0
    %3131 = vmatprep.subr.bf16.mxu0 0
    %3132 = vmatpush1.bf16.msra.mxu0 0
    %3133 = vmatprep.subr.bf16.mxu0 0
    %3134 = vmatpush1.bf16.msra.mxu0 0
    %3135 = vmatprep.mubr.bf16.mxu0 0
    %3136 = vmatmul.mubr.bf16.gmra.mrb[0].mxu0 %v3060
    %v3137 = vpop.f32.mrb[0].mxu0
    %v3138 = vadd.f32 0.0, %v3137
    %v3139 = vpop.f32.mrb[0].mxu0
    %v3140 = vadd.f32 0.0, %v3139
    %v3141 = vpop.f32.mrb[0].mxu0
    %v3142 = vpop.f32.mrb[0].mxu0
    %3143 = vdwg.mxu0
    %v3144 = vpack.c.bf16 %v3097, %v3097
    %v3145 = vpack.c.bf16 %v3099, %v3099
    %v3146 = vpack.c.bf16 %v3138, %v3138
    %v3147 = vpack.c.bf16 %v3140, %v3140
    %v3149 = vlaneseq
    %v3150 = vshrl.u32 %v3149, 7
    %v3151 = vsub.s32 0, %v3150
    %v3152 = vrot.slane %v2884, %v3151
    %v3218 = vunpack.c.l.b16 %v2820
    %v3219 = vunpack.c.l.b16 %v2821
    %v3220 = vunpack.c.l.b16 %v2822
    %v3221 = vunpack.c.l.b16 %v2823
    %v3222 = vunpack.c.l.b16 %v2824
    %v3223 = vunpack.c.l.b16 %v2825
    %v3224 = vunpack.c.l.b16 %v2826
    %v3225 = vunpack.c.l.b16 %v2827
    %v3226 = vunpack.c.l.b16 %v2828
    %v3227 = vunpack.c.l.b16 %v2829
    %v3228 = vunpack.c.l.b16 %v2830
    %v3229 = vunpack.c.l.b16 %v2831
    %v3230 = vunpack.c.l.b16 %v2832
    %v3231 = vunpack.c.l.b16 %v2833
    %v3232 = vunpack.c.l.b16 %v2834
    %v3233 = vunpack.c.l.b16 %v2835
    %v3234 = vunpack.c.l.b16 %v2836
    %v3235 = vunpack.c.l.b16 %v2837
    %v3236 = vunpack.c.l.b16 %v2838
    %v3237 = vunpack.c.l.b16 %v2839
    %v3238 = vunpack.c.l.b16 %v2840
    %v3239 = vunpack.c.l.b16 %v2841
    %v3240 = vunpack.c.l.b16 %v2842
    %v3241 = vunpack.c.l.b16 %v2843
    %v3242 = vunpack.c.l.b16 %v2844
    %v3243 = vunpack.c.l.b16 %v2845
    %v3244 = vunpack.c.l.b16 %v2846
    %v3245 = vunpack.c.l.b16 %v2847
    %v3246 = vunpack.c.l.b16 %v2848
    %v3247 = vunpack.c.l.b16 %v2849
    %v3248 = vunpack.c.l.b16 %v2850
    %v3249 = vunpack.c.l.b16 %v2851
    %v3250 = vunpack.c.l.b16 %v2852
    %v3251 = vunpack.c.l.b16 %v2853
    %v3252 = vunpack.c.l.b16 %v2854
    %v3253 = vunpack.c.l.b16 %v2855
    %v3254 = vunpack.c.l.b16 %v2856
    %v3255 = vunpack.c.l.b16 %v2857
    %v3256 = vunpack.c.l.b16 %v2858
    %v3257 = vunpack.c.l.b16 %v2859
    %v3258 = vunpack.c.l.b16 %v2860
    %v3259 = vunpack.c.l.b16 %v2861
    %v3260 = vunpack.c.l.b16 %v2862
    %v3261 = vunpack.c.l.b16 %v2863
    %v3262 = vunpack.c.l.b16 %v2864
    %v3263 = vunpack.c.l.b16 %v2865
    %v3264 = vunpack.c.l.b16 %v2866
    %v3265 = vunpack.c.l.b16 %v2867
    %v3266 = vunpack.c.l.b16 %v2868
    %v3267 = vunpack.c.l.b16 %v2869
    %v3268 = vunpack.c.l.b16 %v2870
    %v3269 = vunpack.c.l.b16 %v2871
    %v3270 = vunpack.c.l.b16 %v2872
    %v3271 = vunpack.c.l.b16 %v2873
    %v3272 = vunpack.c.l.b16 %v2874
    %v3273 = vunpack.c.l.b16 %v2875
    %v3274 = vunpack.c.l.b16 %v2876
    %v3275 = vunpack.c.l.b16 %v2877
    %v3276 = vunpack.c.l.b16 %v2878
    %v3277 = vunpack.c.l.b16 %v2879
    %v3278 = vunpack.c.l.b16 %v2880
    %v3279 = vunpack.c.l.b16 %v2881
    %v3280 = vunpack.c.l.b16 %v2882
    %v3281 = vunpack.c.l.b16 %v2883
    %v3282 = vpack.c.b16 %v3219, %v3218
    %v3283 = vpack.c.b16 %v3221, %v3220
    %v3284 = vpack.c.b16 %v3223, %v3222
    %v3285 = vpack.c.b16 %v3225, %v3224
    %v3286 = vpack.c.b16 %v3227, %v3226
    %v3287 = vpack.c.b16 %v3229, %v3228
    %v3288 = vpack.c.b16 %v3231, %v3230
    %v3289 = vpack.c.b16 %v3233, %v3232
    %v3290 = vpack.c.b16 %v3235, %v3234
    %v3291 = vpack.c.b16 %v3237, %v3236
    %v3292 = vpack.c.b16 %v3239, %v3238
    %v3293 = vpack.c.b16 %v3241, %v3240
    %v3294 = vpack.c.b16 %v3243, %v3242
    %v3295 = vpack.c.b16 %v3245, %v3244
    %v3296 = vpack.c.b16 %v3247, %v3246
    %v3297 = vpack.c.b16 %v3249, %v3248
    %v3298 = vpack.c.b16 %v3251, %v3250
    %v3299 = vpack.c.b16 %v3253, %v3252
    %v3300 = vpack.c.b16 %v3255, %v3254
    %v3301 = vpack.c.b16 %v3257, %v3256
    %v3302 = vpack.c.b16 %v3259, %v3258
    %v3303 = vpack.c.b16 %v3261, %v3260
    %v3304 = vpack.c.b16 %v3263, %v3262
    %v3305 = vpack.c.b16 %v3265, %v3264
    %v3306 = vpack.c.b16 %v3267, %v3266
    %v3307 = vpack.c.b16 %v3269, %v3268
    %v3308 = vpack.c.b16 %v3271, %v3270
    %v3309 = vpack.c.b16 %v3273, %v3272
    %v3310 = vpack.c.b16 %v3275, %v3274
    %v3311 = vpack.c.b16 %v3277, %v3276
    %v3312 = vpack.c.b16 %v3279, %v3278
    %v3313 = vpack.c.b16 %v3281, %v3280
    %3346 = vmatprep.subr.bf16.mxu0 0
    %3347 = vmatpush1.bf16.msra.mxu0 %v3282
    %3348 = vmatprep.subr.bf16.mxu0 0
    %3349 = vmatpush1.bf16.msra.mxu0 %v3283
    %3350 = vmatprep.subr.bf16.mxu0 0
    %3351 = vmatpush1.bf16.msra.mxu0 %v3284
    %3352 = vmatprep.subr.bf16.mxu0 0
    %3353 = vmatpush1.bf16.msra.mxu0 %v3285
    %3354 = vmatprep.subr.bf16.mxu0 0
    %3355 = vmatpush1.bf16.msra.mxu0 %v3286
    %3356 = vmatprep.subr.bf16.mxu0 0
    %3357 = vmatpush1.bf16.msra.mxu0 %v3287
    %3358 = vmatprep.subr.bf16.mxu0 0
    %3359 = vmatpush1.bf16.msra.mxu0 %v3288
    %3360 = vmatprep.subr.bf16.mxu0 0
    %3361 = vmatpush1.bf16.msra.mxu0 %v3289
    %3362 = vmatprep.subr.bf16.mxu0 0
    %3363 = vmatpush1.bf16.msra.mxu0 %v3290
    %3364 = vmatprep.subr.bf16.mxu0 0
    %3365 = vmatpush1.bf16.msra.mxu0 %v3291
    %3366 = vmatprep.subr.bf16.mxu0 0
    %3367 = vmatpush1.bf16.msra.mxu0 %v3292
    %3368 = vmatprep.subr.bf16.mxu0 0
    %3369 = vmatpush1.bf16.msra.mxu0 %v3293
    %3370 = vmatprep.subr.bf16.mxu0 0
    %3371 = vmatpush1.bf16.msra.mxu0 %v3294
    %3372 = vmatprep.subr.bf16.mxu0 0
    %3373 = vmatpush1.bf16.msra.mxu0 %v3295
    %3374 = vmatprep.subr.bf16.mxu0 0
    %3375 = vmatpush1.bf16.msra.mxu0 %v3296
    %3376 = vmatprep.subr.bf16.mxu0 0
    %3377 = vmatpush1.bf16.msra.mxu0 %v3297
    %3378 = vmatprep.mubr.bf16.mxu0 %v3145
    %3379 = vmatmul.mubr.bf16.gmra.mrb[0].mxu0 %v3144
    %v3380 = vpop.f32.mrb[0].mxu0
    %v3381 = vadd.f32 %v3152, %v3380
    %v3382 = vpop.f32.mrb[0].mxu0
    %v3383 = vpop.f32.mrb[0].mxu0
    %v3384 = vpop.f32.mrb[0].mxu0
    %3385 = vdwg.mxu0
    %3386 = vmatprep.subr.bf16.mxu0 0
    %3387 = vmatpush1.bf16.msra.mxu0 %v3298
    %3388 = vmatprep.subr.bf16.mxu0 0
    %3389 = vmatpush1.bf16.msra.mxu0 %v3299
    %3390 = vmatprep.subr.bf16.mxu0 0
    %3391 = vmatpush1.bf16.msra.mxu0 %v3300
    %3392 = vmatprep.subr.bf16.mxu0 0
    %3393 = vmatpush1.bf16.msra.mxu0 %v3301
    %3394 = vmatprep.subr.bf16.mxu0 0
    %3395 = vmatpush1.bf16.msra.mxu0 %v3302
    %3396 = vmatprep.subr.bf16.mxu0 0
    %3397 = vmatpush1.bf16.msra.mxu0 %v3303
    %3398 = vmatprep.subr.bf16.mxu0 0
    %3399 = vmatpush1.bf16.msra.mxu0 %v3304
    %3400 = vmatprep.subr.bf16.mxu0 0
    %3401 = vmatpush1.bf16.msra.mxu0 %v3305
    %3402 = vmatprep.subr.bf16.mxu0 0
    %3403 = vmatpush1.bf16.msra.mxu0 %v3306
    %3404 = vmatprep.subr.bf16.mxu0 0
    %3405 = vmatpush1.bf16.msra.mxu0 %v3307
    %3406 = vmatprep.subr.bf16.mxu0 0
    %3407 = vmatpush1.bf16.msra.mxu0 %v3308
    %3408 = vmatprep.subr.bf16.mxu0 0
    %3409 = vmatpush1.bf16.msra.mxu0 %v3309
    %3410 = vmatprep.subr.bf16.mxu0 0
    %3411 = vmatpush1.bf16.msra.mxu0 %v3310
    %3412 = vmatprep.subr.bf16.mxu0 0
    %3413 = vmatpush1.bf16.msra.mxu0 %v3311
    %3414 = vmatprep.subr.bf16.mxu0 0
    %3415 = vmatpush1.bf16.msra.mxu0 %v3312
    %3416 = vmatprep.subr.bf16.mxu0 0
    %3417 = vmatpush1.bf16.msra.mxu0 %v3313
    %3418 = vmatprep.mubr.bf16.mxu0 %v3147
    %3419 = vmatmul.mubr.bf16.gmra.mrb[0].mxu0 %v3146
    %v3420 = vpop.f32.mrb[0].mxu0
    %v3421 = vadd.f32 %v3381, %v3420
    %v3422 = vpop.f32.mrb[0].mxu0
    %v3423 = vpop.f32.mrb[0].mxu0
    %v3424 = vpop.f32.mrb[0].mxu0
    %3425 = vdwg.mxu0
    %v3426 = vtanh.pop %v3421
    %vm3427 = vcmask 254976
    %3428 = vst.msk [vmem:[#allocation2] sm:$0x3] %vm3427, %v3426
    // Predicated region
    $region126: #{image_encoder_forward.1} parent=1 // pred_check
      _
    $region127: #{image_encoder_forward.1} parent=1 // pred_check_branch
      %3430 = sbr.rel (0) target = $region129
    $region128: #{image_encoder_forward.1} parent=1 // pred_region
      %s3432 = ssub.s32 32, 32
      %3433 = vsyncadd [#allocation3], %s3432
      %s3435 = sshll.u32 [#allocation2], 4
      %s3436 = int_to_ptr.vmem [resolvable:$true] %s3435
      %3438 = dma.vmem_to_hbm [thread:$0]  %s3436, 32, %s63, [#allocation3]
    $region129: #{image_encoder_forward.1} parent=1 // pred_fallthru
      _
    // Predicated region
    $region130: #{image_encoder_forward.1} parent=1 // pred_check
      _
    $region131: #{image_encoder_forward.1} parent=1 // pred_check_branch
      %3440 = sbr.rel (0) target = $region133
    $region132: #{image_encoder_forward.1} parent=1 // pred_region
      %3441 = dma.done [#allocation3], 32
    $region133: #{image_encoder_forward.1} parent=1 // pred_fallthru
      _
    %3442 = vsyncpa [#allocation3], 1

</llo_original>
